<compile_context>
chip_gen: v6e
topology: v6e:2x2x1
jax: 0.10.0
libtpu: 0.0.40
codegen_flags: <defaults>
</compile_context>

<pallas_src>
import jax
import jax.numpy as jnp
from jax.experimental import pallas as pl
from jax.experimental.pallas import tpu as pltpu

INPUT_SIZE = 300
HIDDEN = 60
H_PAD = 128                 # one full vreg lane-width per gate
G_PAD = 3 * H_PAD           # padded gate dimension [r | z | n]
B_SUB = 8                   # f32 sublane multiple


def _sigmoid(x):
    # sigmoid(x) == 0.5*tanh(0.5*x) + 0.5 : single EUP op (no exp + reciprocal).
    return 0.5 * jnp.tanh(0.5 * x) + 0.5


def _gru_kernel(gx_ref, wh_ref, bhn_ref, out_ref, hn_ref):
    """Fused bidirectional GRU recurrence (single invocation, no grid).

    gx_ref : (2, T, Bp, G_PAD)  precomputed x@W_ih + folded biases, per direction
    wh_ref : (2, H_PAD, G_PAD)  recurrent weights (zero-padded)
    bhn_ref: (2, Bp, H_PAD)     bias_hh of the n-gate (kept separate: r*(gh_n+bh_n))
    out_ref: (T, Bp, 2*H_PAD)   fwd hidden at lanes [0,128), bwd at [128,256)
    hn_ref : (2, Bp, H_PAD)     final hidden state per direction
    """
    _, T, Bp, _ = gx_ref.shape
    HP = wh_ref.shape[1]

    # Loop-invariant loads (hoisted out of the unrolled recurrence).
    wh_f = wh_ref[0]
    wh_b = wh_ref[1]
    bhn_f = bhn_ref[0]
    bhn_b = bhn_ref[1]

    def gate(gx, gh, h, bhn):
        # Gate slices are aligned to 128-lane vreg boundaries -> pure VPU/EUP work.
        r = _sigmoid(gx[:, 0:HP] + gh[:, 0:HP])
        z = _sigmoid(gx[:, HP:2 * HP] + gh[:, HP:2 * HP])
        n = jnp.tanh(gx[:, 2 * HP:3 * HP] + r * (gh[:, 2 * HP:3 * HP] + bhn))
        return (1.0 - z) * n + z * h

    # Pad lanes (cols HIDDEN..H_PAD) stay exactly zero only because h0 == 0 and
    # the padded columns of wh/gx/bhn are zero (r,z == 0.5 there, so the pad part
    # of h evolves as 0.5*h_pad == 0).  A nonzero h0 would require masking.
    h_f = jnp.zeros((Bp, HP), jnp.float32)
    h_b = jnp.zeros((Bp, HP), jnp.float32)

    # Fully static, unrolled time loop; forward and backward interleaved so one
    # direction's gate math hides the other's MXU result / EUP latency.
    for t in range(T):
        tb = T - 1 - t
        gx_f = gx_ref[0, t]                 # static indices -> plain VMEM loads
        gx_b = gx_ref[1, tb]
        # Back-to-back MXU pushes; f gate math overlaps the b matmul drain.
        gh_f = jnp.dot(h_f, wh_f, preferred_element_type=jnp.float32)
        gh_b = jnp.dot(h_b, wh_b, preferred_element_type=jnp.float32)
        h_f = gate(gx_f, gh_f, h_f, bhn_f)
        h_b = gate(gx_b, gh_b, h_b, bhn_b)
        # Lane-dense, vreg-aligned, unmasked stores.
        out_ref[t, :, 0:HP] = h_f
        out_ref[tb, :, HP:2 * HP] = h_b

    hn_ref[0] = h_f
    hn_ref[1] = h_b


def _pad_gate_cols(w_t):
    """(K, 3H) -> (K, G_PAD): gate g placed at columns [g*H_PAD, g*H_PAD+H)."""
    H = HIDDEN
    out = jnp.zeros((w_t.shape[0], G_PAD), w_t.dtype)
    for g in range(3):
        out = out.at[:, g * H_PAD:g * H_PAD + H].set(w_t[:, g * H:(g + 1) * H])
    return out


def _pad_gate_vec(v):
    """(3H,) -> (G_PAD,)"""
    H = HIDDEN
    out = jnp.zeros((G_PAD,), v.dtype)
    for g in range(3):
        out = out.at[g * H_PAD:g * H_PAD + H].set(v[g * H:(g + 1) * H])
    return out


def gru_layer_forward(x, params):
    """Semantics of torch.nn.GRU(300, 60, bidirectional=True), h0 = 0.

    x: (T, B, 300) float32
    returns (output, h_n): output (T, B, 120), h_n (2, B, 60)
    """
    T, B, D = x.shape
    H = HIDDEN
    Bp = ((B + B_SUB - 1) // B_SUB) * B_SUB     # sublane-pad the batch

    def prep(sfx):
        wi = params[f"wi_{sfx}"]          # (3H, D)
        wh = params[f"wh_{sfx}"]          # (3H, H)
        bi = params[f"bi_{sfx}"]          # (3H,)
        bh = params[f"bh_{sfx}"]          # (3H,)

        wi_p = _pad_gate_cols(wi.T)                                    # (D, G_PAD)
        wh_p = jnp.zeros((H_PAD, G_PAD), jnp.float32
                         ).at[:H, :].set(_pad_gate_cols(wh.T))         # (H_PAD, G_PAD)

        # Fold bias_ih (all gates) and bias_hh (r, z gates) into the projection.
        bh_rz = jnp.concatenate([bh[:2 * H], jnp.zeros((H,), bh.dtype)])
        b_fold = _pad_gate_vec(bi) + _pad_gate_vec(bh_rz)              # (G_PAD,)
        bhn = jnp.zeros((Bp, H_PAD), jnp.float32).at[:, :H].set(bh[2 * H:])
        return wi_p, wh_p, b_fold, bhn

    wi_f, wh_f, bf_f, bhn_f = prep("f")
    wi_b, wh_b, bf_b, bhn_b = prep("b")

    wi_all = jnp.stack([wi_f, wi_b], 0)       # (2, D, G_PAD)      (tiny stacks)
    wh_all = jnp.stack([wh_f, wh_b], 0)       # (2, H_PAD, G_PAD)
    bf_all = jnp.stack([bf_f, bf_b], 0)       # (2, G_PAD)
    bhn_all = jnp.stack([bhn_f, bhn_b], 0)    # (2, Bp, H_PAD)

    # Sublane-pad the batch; padding rows are stripped after the kernel.
    x_p = jnp.pad(x, ((0, 0), (0, Bp - B), (0, 0)))

    # Hoisted input projection for BOTH directions in one batched MXU matmul
    # (no serial dependency), biases folded in.
    gx_all = jnp.einsum('tbd,ndg->ntbg', x_p, wi_all) + bf_all[:, None, None, :]

    out, hn = pl.pallas_call(
        _gru_kernel,
        out_shape=(
            jax.ShapeDtypeStruct((T, Bp, 2 * H_PAD), jnp.float32),
            jax.ShapeDtypeStruct((2, Bp, H_PAD), jnp.float32),
        ),
        in_specs=[
            pl.BlockSpec(memory_space=pltpu.MemorySpace.VMEM),
            pl.BlockSpec(memory_space=pltpu.MemorySpace.VMEM),
            pl.BlockSpec(memory_space=pltpu.MemorySpace.VMEM),
        ],
        out_specs=(
            pl.BlockSpec(memory_space=pltpu.MemorySpace.VMEM),
            pl.BlockSpec(memory_space=pltpu.MemorySpace.VMEM),
        ),
    )(gx_all, wh_all, bhn_all)

    # Only cheap :60 slices remain; the (T,B,120) concat is a few KB.
    output = jnp.concatenate([out[:, :B, :H], out[:, :B, H_PAD:H_PAD + H]], axis=-1)
    h_n = hn[:, :B, :H]
    return output, h_n


# ----------------------------------------------------------------------------
# Pure-JAX reference (lax.scan) for correctness checking.
# ----------------------------------------------------------------------------
def _reference_gru_direction(x, wi, wh, bi, bh, h0):
    H = h0.shape[-1]

    def step(h, xt):
        gx = xt @ wi.T + bi
        gh = h @ wh.T + bh
        r = jax.nn.sigmoid(gx[:, :H] + gh[:, :H])
        z = jax.nn.sigmoid(gx[:, H:2 * H] + gh[:, H:2 * H])
        n = jnp.tanh(gx[:, 2 * H:] + r * gh[:, 2 * H:])
        h_new = (1.0 - z) * n + z * h
        return h_new, h_new

    hT, ys = jax.lax.scan(step, h0, x)
    return ys, hT


def _reference_forward(x, params):
    B = x.shape[1]
    h0 = jnp.zeros((B, HIDDEN), jnp.float32)
    out_f, hn_f = _reference_gru_direction(
        x, params["wi_f"], params["wh_f"], params["bi_f"], params["bh_f"], h0)
    out_b, hn_b = _reference_gru_direction(
        x[::-1], params["wi_b"], params["wh_b"], params["bi_b"], params["bh_b"], h0)
    out_b = out_b[::-1]
    return jnp.concatenate([out_f, out_b], axis=-1), jnp.stack([hn_f, hn_b], 0)


def init_params(key):
    """Deterministic synthetic weights with torch.nn.GRU parameter shapes."""
    H, D = HIDDEN, INPUT_SIZE
    ks = jax.random.split(key, 8)
    scale = 0.1
    return {
        "wi_f": jax.random.uniform(ks[0], (3 * H, D), jnp.float32, -scale, scale),
        "wh_f": jax.random.uniform(ks[1], (3 * H, H), jnp.float32, -scale, scale),
        "bi_f": jax.random.uniform(ks[2], (3 * H,), jnp.float32, -scale, scale),
        "bh_f": jax.random.uniform(ks[3], (3 * H,), jnp.float32, -scale, scale),
        "wi_b": jax.random.uniform(ks[4], (3 * H, D), jnp.float32, -scale, scale),
        "wh_b": jax.random.uniform(ks[5], (3 * H, H), jnp.float32, -scale, scale),
        "bi_b": jax.random.uniform(ks[6], (3 * H,), jnp.float32, -scale, scale),
        "bh_b": jax.random.uniform(ks[7], (3 * H,), jnp.float32, -scale, scale),
    }


if __name__ == "__main__":
    key = jax.random.PRNGKey(0)
    k_x, k_p = jax.random.split(key)

    T, B = 8, 4
    x = jax.random.normal(k_x, (T, B, INPUT_SIZE), jnp.float32)
    params = init_params(k_p)

    output, h_n = jax.jit(gru_layer_forward)(x, params)
    output = jax.block_until_ready(output)
    h_n = jax.block_until_ready(h_n)

    assert output.shape == (T, B, 2 * HIDDEN)
    assert h_n.shape == (2, B, HIDDEN)

    ref_out, ref_hn = _reference_forward(x, params)
    assert jnp.allclose(output, ref_out, atol=1e-4, rtol=1e-4), \
        float(jnp.max(jnp.abs(output - ref_out)))
    assert jnp.allclose(h_n, ref_hn, atol=1e-4, rtol=1e-4), \
        float(jnp.max(jnp.abs(h_n - ref_hn)))

    print("KERNEL_OK")
</pallas_src>

<mosaic_0001>
module attributes {stable_mosaic.version = 11 : i64} {
  func.func @_gru_kernel(%arg0: memref<2x8x8x384xf32, #tpu.memory_space<vmem>>, %arg1: memref<2x128x384xf32, #tpu.memory_space<vmem>>, %arg2: memref<2x8x128xf32, #tpu.memory_space<vmem>>, %arg3: memref<8x8x256xf32, #tpu.memory_space<vmem>>, %arg4: memref<2x8x128xf32, #tpu.memory_space<vmem>>) attributes {dimension_semantics = [], scalar_prefetch = 0 : i64, scratch_operands = 0 : i64, tpu.core_type = #tpu.core_type<tc>} {
    %c0 = arith.constant 0 : index
    %c0_0 = arith.constant 0 : index
    %c0_1 = arith.constant 0 : index
    %0 = vector.load %arg1[%c0, %c0_0, %c0_1] : memref<2x128x384xf32, #tpu.memory_space<vmem>>, vector<1x128x384xf32>
    %1 = vector.shape_cast %0 : vector<1x128x384xf32> to vector<128x384xf32>
    %c1 = arith.constant 1 : index
    %c0_2 = arith.constant 0 : index
    %c0_3 = arith.constant 0 : index
    %2 = vector.load %arg1[%c1, %c0_2, %c0_3] : memref<2x128x384xf32, #tpu.memory_space<vmem>>, vector<1x128x384xf32>
    %3 = vector.shape_cast %2 : vector<1x128x384xf32> to vector<128x384xf32>
    %c0_4 = arith.constant 0 : index
    %c0_5 = arith.constant 0 : index
    %c0_6 = arith.constant 0 : index
    %4 = vector.load %arg2[%c0_4, %c0_5, %c0_6] : memref<2x8x128xf32, #tpu.memory_space<vmem>>, vector<1x8x128xf32>
    %5 = vector.shape_cast %4 : vector<1x8x128xf32> to vector<8x128xf32>
    %c1_7 = arith.constant 1 : index
    %c0_8 = arith.constant 0 : index
    %c0_9 = arith.constant 0 : index
    %6 = vector.load %arg2[%c1_7, %c0_8, %c0_9] : memref<2x8x128xf32, #tpu.memory_space<vmem>>, vector<1x8x128xf32>
    %7 = vector.shape_cast %6 : vector<1x8x128xf32> to vector<8x128xf32>
    %cst = arith.constant 0.000000e+00 : f32
    %8 = vector.broadcast %cst : f32 to vector<8x128xf32>
    %cst_10 = arith.constant 0.000000e+00 : f32
    %9 = vector.broadcast %cst_10 : f32 to vector<8x128xf32>
    %c0_11 = arith.constant 0 : index
    %c0_12 = arith.constant 0 : index
    %c0_13 = arith.constant 0 : index
    %c0_14 = arith.constant 0 : index
    %10 = vector.load %arg0[%c0_11, %c0_12, %c0_13, %c0_14] : memref<2x8x8x384xf32, #tpu.memory_space<vmem>>, vector<1x1x8x384xf32>
    %11 = vector.shape_cast %10 : vector<1x1x8x384xf32> to vector<8x384xf32>
    %c1_15 = arith.constant 1 : index
    %c7 = arith.constant 7 : index
    %c0_16 = arith.constant 0 : index
    %c0_17 = arith.constant 0 : index
    %12 = vector.load %arg0[%c1_15, %c7, %c0_16, %c0_17] : memref<2x8x8x384xf32, #tpu.memory_space<vmem>>, vector<1x1x8x384xf32>
    %13 = vector.shape_cast %12 : vector<1x1x8x384xf32> to vector<8x384xf32>
    %cst_18 = arith.constant dense<0.000000e+00> : vector<8x384xf32>
    %14 = tpu.matmul %8, %1, %cst_18 {dimension_numbers = #tpu.dot_dimension_numbers<[1], [0], [0], [1], [0, 0, 1, 1], [], []>} : vector<8x128xf32>, vector<128x384xf32>, vector<8x384xf32> -> vector<8x384xf32>
    %cst_19 = arith.constant dense<0.000000e+00> : vector<8x384xf32>
    %15 = tpu.matmul %9, %3, %cst_19 {dimension_numbers = #tpu.dot_dimension_numbers<[1], [0], [0], [1], [0, 0, 1, 1], [], []>} : vector<8x128xf32>, vector<128x384xf32>, vector<8x384xf32> -> vector<8x384xf32>
    %16 = vector.extract_strided_slice %11 {offsets = [0, 0], sizes = [8, 128], strides = [1, 1]} : vector<8x384xf32> to vector<8x128xf32>
    %17 = vector.extract_strided_slice %14 {offsets = [0, 0], sizes = [8, 128], strides = [1, 1]} : vector<8x384xf32> to vector<8x128xf32>
    %18 = arith.addf %16, %17 : vector<8x128xf32>
    %cst_20 = arith.constant 5.000000e-01 : f32
    %19 = vector.broadcast %cst_20 : f32 to vector<8x128xf32>
    %20 = arith.mulf %19, %18 : vector<8x128xf32>
    %21 = math.tanh %20 : vector<8x128xf32>
    %cst_21 = arith.constant 5.000000e-01 : f32
    %22 = vector.broadcast %cst_21 : f32 to vector<8x128xf32>
    %23 = arith.mulf %22, %21 : vector<8x128xf32>
    %cst_22 = arith.constant 5.000000e-01 : f32
    %24 = vector.broadcast %cst_22 : f32 to vector<8x128xf32>
    %25 = arith.addf %23, %24 : vector<8x128xf32>
    %26 = vector.extract_strided_slice %11 {offsets = [0, 128], sizes = [8, 128], strides = [1, 1]} : vector<8x384xf32> to vector<8x128xf32>
    %27 = vector.extract_strided_slice %14 {offsets = [0, 128], sizes = [8, 128], strides = [1, 1]} : vector<8x384xf32> to vector<8x128xf32>
    %28 = arith.addf %26, %27 : vector<8x128xf32>
    %cst_23 = arith.constant 5.000000e-01 : f32
    %29 = vector.broadcast %cst_23 : f32 to vector<8x128xf32>
    %30 = arith.mulf %29, %28 : vector<8x128xf32>
    %31 = math.tanh %30 : vector<8x128xf32>
    %cst_24 = arith.constant 5.000000e-01 : f32
    %32 = vector.broadcast %cst_24 : f32 to vector<8x128xf32>
    %33 = arith.mulf %32, %31 : vector<8x128xf32>
    %cst_25 = arith.constant 5.000000e-01 : f32
    %34 = vector.broadcast %cst_25 : f32 to vector<8x128xf32>
    %35 = arith.addf %33, %34 : vector<8x128xf32>
    %36 = vector.extract_strided_slice %11 {offsets = [0, 256], sizes = [8, 128], strides = [1, 1]} : vector<8x384xf32> to vector<8x128xf32>
    %37 = vector.extract_strided_slice %14 {offsets = [0, 256], sizes = [8, 128], strides = [1, 1]} : vector<8x384xf32> to vector<8x128xf32>
    %38 = arith.addf %37, %5 : vector<8x128xf32>
    %39 = arith.mulf %25, %38 : vector<8x128xf32>
    %40 = arith.addf %36, %39 : vector<8x128xf32>
    %41 = math.tanh %40 : vector<8x128xf32>
    %cst_26 = arith.constant 1.000000e+00 : f32
    %42 = vector.broadcast %cst_26 : f32 to vector<8x128xf32>
    %43 = arith.subf %42, %35 : vector<8x128xf32>
    %44 = arith.mulf %43, %41 : vector<8x128xf32>
    %45 = arith.mulf %35, %8 : vector<8x128xf32>
    %46 = arith.addf %44, %45 : vector<8x128xf32>
    %47 = vector.extract_strided_slice %13 {offsets = [0, 0], sizes = [8, 128], strides = [1, 1]} : vector<8x384xf32> to vector<8x128xf32>
    %48 = vector.extract_strided_slice %15 {offsets = [0, 0], sizes = [8, 128], strides = [1, 1]} : vector<8x384xf32> to vector<8x128xf32>
    %49 = arith.addf %47, %48 : vector<8x128xf32>
    %cst_27 = arith.constant 5.000000e-01 : f32
    %50 = vector.broadcast %cst_27 : f32 to vector<8x128xf32>
    %51 = arith.mulf %50, %49 : vector<8x128xf32>
    %52 = math.tanh %51 : vector<8x128xf32>
    %cst_28 = arith.constant 5.000000e-01 : f32
    %53 = vector.broadcast %cst_28 : f32 to vector<8x128xf32>
    %54 = arith.mulf %53, %52 : vector<8x128xf32>
    %cst_29 = arith.constant 5.000000e-01 : f32
    %55 = vector.broadcast %cst_29 : f32 to vector<8x128xf32>
    %56 = arith.addf %54, %55 : vector<8x128xf32>
    %57 = vector.extract_strided_slice %13 {offsets = [0, 128], sizes = [8, 128], strides = [1, 1]} : vector<8x384xf32> to vector<8x128xf32>
    %58 = vector.extract_strided_slice %15 {offsets = [0, 128], sizes = [8, 128], strides = [1, 1]} : vector<8x384xf32> to vector<8x128xf32>
    %59 = arith.addf %57, %58 : vector<8x128xf32>
    %cst_30 = arith.constant 5.000000e-01 : f32
    %60 = vector.broadcast %cst_30 : f32 to vector<8x128xf32>
    %61 = arith.mulf %60, %59 : vector<8x128xf32>
    %62 = math.tanh %61 : vector<8x128xf32>
    %cst_31 = arith.constant 5.000000e-01 : f32
    %63 = vector.broadcast %cst_31 : f32 to vector<8x128xf32>
    %64 = arith.mulf %63, %62 : vector<8x128xf32>
    %cst_32 = arith.constant 5.000000e-01 : f32
    %65 = vector.broadcast %cst_32 : f32 to vector<8x128xf32>
    %66 = arith.addf %64, %65 : vector<8x128xf32>
    %67 = vector.extract_strided_slice %13 {offsets = [0, 256], sizes = [8, 128], strides = [1, 1]} : vector<8x384xf32> to vector<8x128xf32>
    %68 = vector.extract_strided_slice %15 {offsets = [0, 256], sizes = [8, 128], strides = [1, 1]} : vector<8x384xf32> to vector<8x128xf32>
    %69 = arith.addf %68, %7 : vector<8x128xf32>
    %70 = arith.mulf %56, %69 : vector<8x128xf32>
    %71 = arith.addf %67, %70 : vector<8x128xf32>
    %72 = math.tanh %71 : vector<8x128xf32>
    %cst_33 = arith.constant 1.000000e+00 : f32
    %73 = vector.broadcast %cst_33 : f32 to vector<8x128xf32>
    %74 = arith.subf %73, %66 : vector<8x128xf32>
    %75 = arith.mulf %74, %72 : vector<8x128xf32>
    %76 = arith.mulf %66, %9 : vector<8x128xf32>
    %77 = arith.addf %75, %76 : vector<8x128xf32>
    %c0_34 = arith.constant 0 : index
    %c0_35 = arith.constant 0 : index
    %c0_36 = arith.constant 0 : index
    %78 = vector.load %arg3[%c0_34, %c0_35, %c0_36] : memref<8x8x256xf32, #tpu.memory_space<vmem>>, vector<1x8x128xf32>
    %79 = vector.shape_cast %78 : vector<1x8x128xf32> to vector<8x128xf32>
    %80 = vector.shape_cast %46 : vector<8x128xf32> to vector<1x8x128xf32>
    tpu.vector_store %arg3[%c0_34, %c0_35, %c0_36], %80 {strides = array<i32>} : memref<8x8x256xf32, #tpu.memory_space<vmem>>, vector<1x8x128xf32>,
    %c7_37 = arith.constant 7 : index
    %c0_38 = arith.constant 0 : index
    %c128 = arith.constant 128 : index
    %81 = vector.load %arg3[%c7_37, %c0_38, %c128] : memref<8x8x256xf32, #tpu.memory_space<vmem>>, vector<1x8x128xf32>
    %82 = vector.shape_cast %81 : vector<1x8x128xf32> to vector<8x128xf32>
    %83 = vector.shape_cast %77 : vector<8x128xf32> to vector<1x8x128xf32>
    tpu.vector_store %arg3[%c7_37, %c0_38, %c128], %83 {strides = array<i32>} : memref<8x8x256xf32, #tpu.memory_space<vmem>>, vector<1x8x128xf32>,
    %c0_39 = arith.constant 0 : index
    %c1_40 = arith.constant 1 : index
    %c0_41 = arith.constant 0 : index
    %c0_42 = arith.constant 0 : index
    %84 = vector.load %arg0[%c0_39, %c1_40, %c0_41, %c0_42] : memref<2x8x8x384xf32, #tpu.memory_space<vmem>>, vector<1x1x8x384xf32>
    %85 = vector.shape_cast %84 : vector<1x1x8x384xf32> to vector<8x384xf32>
    %c1_43 = arith.constant 1 : index
    %c6 = arith.constant 6 : index
    %c0_44 = arith.constant 0 : index
    %c0_45 = arith.constant 0 : index
    %86 = vector.load %arg0[%c1_43, %c6, %c0_44, %c0_45] : memref<2x8x8x384xf32, #tpu.memory_space<vmem>>, vector<1x1x8x384xf32>
    %87 = vector.shape_cast %86 : vector<1x1x8x384xf32> to vector<8x384xf32>
    %cst_46 = arith.constant dense<0.000000e+00> : vector<8x384xf32>
    %88 = tpu.matmul %46, %1, %cst_46 {dimension_numbers = #tpu.dot_dimension_numbers<[1], [0], [0], [1], [0, 0, 1, 1], [], []>} : vector<8x128xf32>, vector<128x384xf32>, vector<8x384xf32> -> vector<8x384xf32>
    %cst_47 = arith.constant dense<0.000000e+00> : vector<8x384xf32>
    %89 = tpu.matmul %77, %3, %cst_47 {dimension_numbers = #tpu.dot_dimension_numbers<[1], [0], [0], [1], [0, 0, 1, 1], [], []>} : vector<8x128xf32>, vector<128x384xf32>, vector<8x384xf32> -> vector<8x384xf32>
    %90 = vector.extract_strided_slice %85 {offsets = [0, 0], sizes = [8, 128], strides = [1, 1]} : vector<8x384xf32> to vector<8x128xf32>
    %91 = vector.extract_strided_slice %88 {offsets = [0, 0], sizes = [8, 128], strides = [1, 1]} : vector<8x384xf32> to vector<8x128xf32>
    %92 = arith.addf %90, %91 : vector<8x128xf32>
    %cst_48 = arith.constant 5.000000e-01 : f32
    %93 = vector.broadcast %cst_48 : f32 to vector<8x128xf32>
    %94 = arith.mulf %93, %92 : vector<8x128xf32>
    %95 = math.tanh %94 : vector<8x128xf32>
    %cst_49 = arith.constant 5.000000e-01 : f32
    %96 = vector.broadcast %cst_49 : f32 to vector<8x128xf32>
    %97 = arith.mulf %96, %95 : vector<8x128xf32>
    %cst_50 = arith.constant 5.000000e-01 : f32
    %98 = vector.broadcast %cst_50 : f32 to vector<8x128xf32>
    %99 = arith.addf %97, %98 : vector<8x128xf32>
    %100 = vector.extract_strided_slice %85 {offsets = [0, 128], sizes = [8, 128], strides = [1, 1]} : vector<8x384xf32> to vector<8x128xf32>
    %101 = vector.extract_strided_slice %88 {offsets = [0, 128], sizes = [8, 128], strides = [1, 1]} : vector<8x384xf32> to vector<8x128xf32>
    %102 = arith.addf %100, %101 : vector<8x128xf32>
    %cst_51 = arith.constant 5.000000e-01 : f32
    %103 = vector.broadcast %cst_51 : f32 to vector<8x128xf32>
    %104 = arith.mulf %103, %102 : vector<8x128xf32>
    %105 = math.tanh %104 : vector<8x128xf32>
    %cst_52 = arith.constant 5.000000e-01 : f32
    %106 = vector.broadcast %cst_52 : f32 to vector<8x128xf32>
    %107 = arith.mulf %106, %105 : vector<8x128xf32>
    %cst_53 = arith.constant 5.000000e-01 : f32
    %108 = vector.broadcast %cst_53 : f32 to vector<8x128xf32>
    %109 = arith.addf %107, %108 : vector<8x128xf32>
    %110 = vector.extract_strided_slice %85 {offsets = [0, 256], sizes = [8, 128], strides = [1, 1]} : vector<8x384xf32> to vector<8x128xf32>
    %111 = vector.extract_strided_slice %88 {offsets = [0, 256], sizes = [8, 128], strides = [1, 1]} : vector<8x384xf32> to vector<8x128xf32>
    %112 = arith.addf %111, %5 : vector<8x128xf32>
    %113 = arith.mulf %99, %112 : vector<8x128xf32>
    %114 = arith.addf %110, %113 : vector<8x128xf32>
    %115 = math.tanh %114 : vector<8x128xf32>
    %cst_54 = arith.constant 1.000000e+00 : f32
    %116 = vector.broadcast %cst_54 : f32 to vector<8x128xf32>
    %117 = arith.subf %116, %109 : vector<8x128xf32>
    %118 = arith.mulf %117, %115 : vector<8x128xf32>
    %119 = arith.mulf %109, %46 : vector<8x128xf32>
    %120 = arith.addf %118, %119 : vector<8x128xf32>
    %121 = vector.extract_strided_slice %87 {offsets = [0, 0], sizes = [8, 128], strides = [1, 1]} : vector<8x384xf32> to vector<8x128xf32>
    %122 = vector.extract_strided_slice %89 {offsets = [0, 0], sizes = [8, 128], strides = [1, 1]} : vector<8x384xf32> to vector<8x128xf32>
    %123 = arith.addf %121, %122 : vector<8x128xf32>
    %cst_55 = arith.constant 5.000000e-01 : f32
    %124 = vector.broadcast %cst_55 : f32 to vector<8x128xf32>
    %125 = arith.mulf %124, %123 : vector<8x128xf32>
    %126 = math.tanh %125 : vector<8x128xf32>
    %cst_56 = arith.constant 5.000000e-01 : f32
    %127 = vector.broadcast %cst_56 : f32 to vector<8x128xf32>
    %128 = arith.mulf %127, %126 : vector<8x128xf32>
    %cst_57 = arith.constant 5.000000e-01 : f32
    %129 = vector.broadcast %cst_57 : f32 to vector<8x128xf32>
    %130 = arith.addf %128, %129 : vector<8x128xf32>
    %131 = vector.extract_strided_slice %87 {offsets = [0, 128], sizes = [8, 128], strides = [1, 1]} : vector<8x384xf32> to vector<8x128xf32>
    %132 = vector.extract_strided_slice %89 {offsets = [0, 128], sizes = [8, 128], strides = [1, 1]} : vector<8x384xf32> to vector<8x128xf32>
    %133 = arith.addf %131, %132 : vector<8x128xf32>
    %cst_58 = arith.constant 5.000000e-01 : f32
    %134 = vector.broadcast %cst_58 : f32 to vector<8x128xf32>
    %135 = arith.mulf %134, %133 : vector<8x128xf32>
    %136 = math.tanh %135 : vector<8x128xf32>
    %cst_59 = arith.constant 5.000000e-01 : f32
    %137 = vector.broadcast %cst_59 : f32 to vector<8x128xf32>
    %138 = arith.mulf %137, %136 : vector<8x128xf32>
    %cst_60 = arith.constant 5.000000e-01 : f32
    %139 = vector.broadcast %cst_60 : f32 to vector<8x128xf32>
    %140 = arith.addf %138, %139 : vector<8x128xf32>
    %141 = vector.extract_strided_slice %87 {offsets = [0, 256], sizes = [8, 128], strides = [1, 1]} : vector<8x384xf32> to vector<8x128xf32>
    %142 = vector.extract_strided_slice %89 {offsets = [0, 256], sizes = [8, 128], strides = [1, 1]} : vector<8x384xf32> to vector<8x128xf32>
    %143 = arith.addf %142, %7 : vector<8x128xf32>
    %144 = arith.mulf %130, %143 : vector<8x128xf32>
    %145 = arith.addf %141, %144 : vector<8x128xf32>
    %146 = math.tanh %145 : vector<8x128xf32>
    %cst_61 = arith.constant 1.000000e+00 : f32
    %147 = vector.broadcast %cst_61 : f32 to vector<8x128xf32>
    %148 = arith.subf %147, %140 : vector<8x128xf32>
    %149 = arith.mulf %148, %146 : vector<8x128xf32>
    %150 = arith.mulf %140, %77 : vector<8x128xf32>
    %151 = arith.addf %149, %150 : vector<8x128xf32>
    %c1_62 = arith.constant 1 : index
    %c0_63 = arith.constant 0 : index
    %c0_64 = arith.constant 0 : index
    %152 = vector.load %arg3[%c1_62, %c0_63, %c0_64] : memref<8x8x256xf32, #tpu.memory_space<vmem>>, vector<1x8x128xf32>
    %153 = vector.shape_cast %152 : vector<1x8x128xf32> to vector<8x128xf32>
    %154 = vector.shape_cast %120 : vector<8x128xf32> to vector<1x8x128xf32>
    tpu.vector_store %arg3[%c1_62, %c0_63, %c0_64], %154 {strides = array<i32>} : memref<8x8x256xf32, #tpu.memory_space<vmem>>, vector<1x8x128xf32>,
    %c6_65 = arith.constant 6 : index
    %c0_66 = arith.constant 0 : index
    %c128_67 = arith.constant 128 : index
    %155 = vector.load %arg3[%c6_65, %c0_66, %c128_67] : memref<8x8x256xf32, #tpu.memory_space<vmem>>, vector<1x8x128xf32>
    %156 = vector.shape_cast %155 : vector<1x8x128xf32> to vector<8x128xf32>
    %157 = vector.shape_cast %151 : vector<8x128xf32> to vector<1x8x128xf32>
    tpu.vector_store %arg3[%c6_65, %c0_66, %c128_67], %157 {strides = array<i32>} : memref<8x8x256xf32, #tpu.memory_space<vmem>>, vector<1x8x128xf32>,
    %c0_68 = arith.constant 0 : index
    %c2 = arith.constant 2 : index
    %c0_69 = arith.constant 0 : index
    %c0_70 = arith.constant 0 : index
    %158 = vector.load %arg0[%c0_68, %c2, %c0_69, %c0_70] : memref<2x8x8x384xf32, #tpu.memory_space<vmem>>, vector<1x1x8x384xf32>
    %159 = vector.shape_cast %158 : vector<1x1x8x384xf32> to vector<8x384xf32>
    %c1_71 = arith.constant 1 : index
    %c5 = arith.constant 5 : index
    %c0_72 = arith.constant 0 : index
    %c0_73 = arith.constant 0 : index
    %160 = vector.load %arg0[%c1_71, %c5, %c0_72, %c0_73] : memref<2x8x8x384xf32, #tpu.memory_space<vmem>>, vector<1x1x8x384xf32>
    %161 = vector.shape_cast %160 : vector<1x1x8x384xf32> to vector<8x384xf32>
    %cst_74 = arith.constant dense<0.000000e+00> : vector<8x384xf32>
    %162 = tpu.matmul %120, %1, %cst_74 {dimension_numbers = #tpu.dot_dimension_numbers<[1], [0], [0], [1], [0, 0, 1, 1], [], []>} : vector<8x128xf32>, vector<128x384xf32>, vector<8x384xf32> -> vector<8x384xf32>
    %cst_75 = arith.constant dense<0.000000e+00> : vector<8x384xf32>
    %163 = tpu.matmul %151, %3, %cst_75 {dimension_numbers = #tpu.dot_dimension_numbers<[1], [0], [0], [1], [0, 0, 1, 1], [], []>} : vector<8x128xf32>, vector<128x384xf32>, vector<8x384xf32> -> vector<8x384xf32>
    %164 = vector.extract_strided_slice %159 {offsets = [0, 0], sizes = [8, 128], strides = [1, 1]} : vector<8x384xf32> to vector<8x128xf32>
    %165 = vector.extract_strided_slice %162 {offsets = [0, 0], sizes = [8, 128], strides = [1, 1]} : vector<8x384xf32> to vector<8x128xf32>
    %166 = arith.addf %164, %165 : vector<8x128xf32>
    %cst_76 = arith.constant 5.000000e-01 : f32
    %167 = vector.broadcast %cst_76 : f32 to vector<8x128xf32>
    %168 = arith.mulf %167, %166 : vector<8x128xf32>
    %169 = math.tanh %168 : vector<8x128xf32>
    %cst_77 = arith.constant 5.000000e-01 : f32
    %170 = vector.broadcast %cst_77 : f32 to vector<8x128xf32>
    %171 = arith.mulf %170, %169 : vector<8x128xf32>
    %cst_78 = arith.constant 5.000000e-01 : f32
    %172 = vector.broadcast %cst_78 : f32 to vector<8x128xf32>
    %173 = arith.addf %171, %172 : vector<8x128xf32>
    %174 = vector.extract_strided_slice %159 {offsets = [0, 128], sizes = [8, 128], strides = [1, 1]} : vector<8x384xf32> to vector<8x128xf32>
    %175 = vector.extract_strided_slice %162 {offsets = [0, 128], sizes = [8, 128], strides = [1, 1]} : vector<8x384xf32> to vector<8x128xf32>
    %176 = arith.addf %174, %175 : vector<8x128xf32>
    %cst_79 = arith.constant 5.000000e-01 : f32
    %177 = vector.broadcast %cst_79 : f32 to vector<8x128xf32>
    %178 = arith.mulf %177, %176 : vector<8x128xf32>
    %179 = math.tanh %178 : vector<8x128xf32>
    %cst_80 = arith.constant 5.000000e-01 : f32
    %180 = vector.broadcast %cst_80 : f32 to vector<8x128xf32>
    %181 = arith.mulf %180, %179 : vector<8x128xf32>
    %cst_81 = arith.constant 5.000000e-01 : f32
    %182 = vector.broadcast %cst_81 : f32 to vector<8x128xf32>
    %183 = arith.addf %181, %182 : vector<8x128xf32>
    %184 = vector.extract_strided_slice %159 {offsets = [0, 256], sizes = [8, 128], strides = [1, 1]} : vector<8x384xf32> to vector<8x128xf32>
    %185 = vector.extract_strided_slice %162 {offsets = [0, 256], sizes = [8, 128], strides = [1, 1]} : vector<8x384xf32> to vector<8x128xf32>
    %186 = arith.addf %185, %5 : vector<8x128xf32>
    %187 = arith.mulf %173, %186 : vector<8x128xf32>
    %188 = arith.addf %184, %187 : vector<8x128xf32>
    %189 = math.tanh %188 : vector<8x128xf32>
    %cst_82 = arith.constant 1.000000e+00 : f32
    %190 = vector.broadcast %cst_82 : f32 to vector<8x128xf32>
    %191 = arith.subf %190, %183 : vector<8x128xf32>
    %192 = arith.mulf %191, %189 : vector<8x128xf32>
    %193 = arith.mulf %183, %120 : vector<8x128xf32>
    %194 = arith.addf %192, %193 : vector<8x128xf32>
    %195 = vector.extract_strided_slice %161 {offsets = [0, 0], sizes = [8, 128], strides = [1, 1]} : vector<8x384xf32> to vector<8x128xf32>
    %196 = vector.extract_strided_slice %163 {offsets = [0, 0], sizes = [8, 128], strides = [1, 1]} : vector<8x384xf32> to vector<8x128xf32>
    %197 = arith.addf %195, %196 : vector<8x128xf32>
    %cst_83 = arith.constant 5.000000e-01 : f32
    %198 = vector.broadcast %cst_83 : f32 to vector<8x128xf32>
    %199 = arith.mulf %198, %197 : vector<8x128xf32>
    %200 = math.tanh %199 : vector<8x128xf32>
    %cst_84 = arith.constant 5.000000e-01 : f32
    %201 = vector.broadcast %cst_84 : f32 to vector<8x128xf32>
    %202 = arith.mulf %201, %200 : vector<8x128xf32>
    %cst_85 = arith.constant 5.000000e-01 : f32
    %203 = vector.broadcast %cst_85 : f32 to vector<8x128xf32>
    %204 = arith.addf %202, %203 : vector<8x128xf32>
    %205 = vector.extract_strided_slice %161 {offsets = [0, 128], sizes = [8, 128], strides = [1, 1]} : vector<8x384xf32> to vector<8x128xf32>
    %206 = vector.extract_strided_slice %163 {offsets = [0, 128], sizes = [8, 128], strides = [1, 1]} : vector<8x384xf32> to vector<8x128xf32>
    %207 = arith.addf %205, %206 : vector<8x128xf32>
    %cst_86 = arith.constant 5.000000e-01 : f32
    %208 = vector.broadcast %cst_86 : f32 to vector<8x128xf32>
    %209 = arith.mulf %208, %207 : vector<8x128xf32>
    %210 = math.tanh %209 : vector<8x128xf32>
    %cst_87 = arith.constant 5.000000e-01 : f32
    %211 = vector.broadcast %cst_87 : f32 to vector<8x128xf32>
    %212 = arith.mulf %211, %210 : vector<8x128xf32>
    %cst_88 = arith.constant 5.000000e-01 : f32
    %213 = vector.broadcast %cst_88 : f32 to vector<8x128xf32>
    %214 = arith.addf %212, %213 : vector<8x128xf32>
    %215 = vector.extract_strided_slice %161 {offsets = [0, 256], sizes = [8, 128], strides = [1, 1]} : vector<8x384xf32> to vector<8x128xf32>
    %216 = vector.extract_strided_slice %163 {offsets = [0, 256], sizes = [8, 128], strides = [1, 1]} : vector<8x384xf32> to vector<8x128xf32>
    %217 = arith.addf %216, %7 : vector<8x128xf32>
    %218 = arith.mulf %204, %217 : vector<8x128xf32>
    %219 = arith.addf %215, %218 : vector<8x128xf32>
    %220 = math.tanh %219 : vector<8x128xf32>
    %cst_89 = arith.constant 1.000000e+00 : f32
    %221 = vector.broadcast %cst_89 : f32 to vector<8x128xf32>
    %222 = arith.subf %221, %214 : vector<8x128xf32>
    %223 = arith.mulf %222, %220 : vector<8x128xf32>
    %224 = arith.mulf %214, %151 : vector<8x128xf32>
    %225 = arith.addf %223, %224 : vector<8x128xf32>
    %c2_90 = arith.constant 2 : index
    %c0_91 = arith.constant 0 : index
    %c0_92 = arith.constant 0 : index
    %226 = vector.load %arg3[%c2_90, %c0_91, %c0_92] : memref<8x8x256xf32, #tpu.memory_space<vmem>>, vector<1x8x128xf32>
    %227 = vector.shape_cast %226 : vector<1x8x128xf32> to vector<8x128xf32>
    %228 = vector.shape_cast %194 : vector<8x128xf32> to vector<1x8x128xf32>
    tpu.vector_store %arg3[%c2_90, %c0_91, %c0_92], %228 {strides = array<i32>} : memref<8x8x256xf32, #tpu.memory_space<vmem>>, vector<1x8x128xf32>,
    %c5_93 = arith.constant 5 : index
    %c0_94 = arith.constant 0 : index
    %c128_95 = arith.constant 128 : index
    %229 = vector.load %arg3[%c5_93, %c0_94, %c128_95] : memref<8x8x256xf32, #tpu.memory_space<vmem>>, vector<1x8x128xf32>
    %230 = vector.shape_cast %229 : vector<1x8x128xf32> to vector<8x128xf32>
    %231 = vector.shape_cast %225 : vector<8x128xf32> to vector<1x8x128xf32>
    tpu.vector_store %arg3[%c5_93, %c0_94, %c128_95], %231 {strides = array<i32>} : memref<8x8x256xf32, #tpu.memory_space<vmem>>, vector<1x8x128xf32>,
    %c0_96 = arith.constant 0 : index
    %c3 = arith.constant 3 : index
    %c0_97 = arith.constant 0 : index
    %c0_98 = arith.constant 0 : index
    %232 = vector.load %arg0[%c0_96, %c3, %c0_97, %c0_98] : memref<2x8x8x384xf32, #tpu.memory_space<vmem>>, vector<1x1x8x384xf32>
    %233 = vector.shape_cast %232 : vector<1x1x8x384xf32> to vector<8x384xf32>
    %c1_99 = arith.constant 1 : index
    %c4 = arith.constant 4 : index
    %c0_100 = arith.constant 0 : index
    %c0_101 = arith.constant 0 : index
    %234 = vector.load %arg0[%c1_99, %c4, %c0_100, %c0_101] : memref<2x8x8x384xf32, #tpu.memory_space<vmem>>, vector<1x1x8x384xf32>
    %235 = vector.shape_cast %234 : vector<1x1x8x384xf32> to vector<8x384xf32>
    %cst_102 = arith.constant dense<0.000000e+00> : vector<8x384xf32>
    %236 = tpu.matmul %194, %1, %cst_102 {dimension_numbers = #tpu.dot_dimension_numbers<[1], [0], [0], [1], [0, 0, 1, 1], [], []>} : vector<8x128xf32>, vector<128x384xf32>, vector<8x384xf32> -> vector<8x384xf32>
    %cst_103 = arith.constant dense<0.000000e+00> : vector<8x384xf32>
    %237 = tpu.matmul %225, %3, %cst_103 {dimension_numbers = #tpu.dot_dimension_numbers<[1], [0], [0], [1], [0, 0, 1, 1], [], []>} : vector<8x128xf32>, vector<128x384xf32>, vector<8x384xf32> -> vector<8x384xf32>
    %238 = vector.extract_strided_slice %233 {offsets = [0, 0], sizes = [8, 128], strides = [1, 1]} : vector<8x384xf32> to vector<8x128xf32>
    %239 = vector.extract_strided_slice %236 {offsets = [0, 0], sizes = [8, 128], strides = [1, 1]} : vector<8x384xf32> to vector<8x128xf32>
    %240 = arith.addf %238, %239 : vector<8x128xf32>
    %cst_104 = arith.constant 5.000000e-01 : f32
    %241 = vector.broadcast %cst_104 : f32 to vector<8x128xf32>
    %242 = arith.mulf %241, %240 : vector<8x128xf32>
    %243 = math.tanh %242 : vector<8x128xf32>
    %cst_105 = arith.constant 5.000000e-01 : f32
    %244 = vector.broadcast %cst_105 : f32 to vector<8x128xf32>
    %245 = arith.mulf %244, %243 : vector<8x128xf32>
    %cst_106 = arith.constant 5.000000e-01 : f32
    %246 = vector.broadcast %cst_106 : f32 to vector<8x128xf32>
    %247 = arith.addf %245, %246 : vector<8x128xf32>
    %248 = vector.extract_strided_slice %233 {offsets = [0, 128], sizes = [8, 128], strides = [1, 1]} : vector<8x384xf32> to vector<8x128xf32>
    %249 = vector.extract_strided_slice %236 {offsets = [0, 128], sizes = [8, 128], strides = [1, 1]} : vector<8x384xf32> to vector<8x128xf32>
    %250 = arith.addf %248, %249 : vector<8x128xf32>
    %cst_107 = arith.constant 5.000000e-01 : f32
    %251 = vector.broadcast %cst_107 : f32 to vector<8x128xf32>
    %252 = arith.mulf %251, %250 : vector<8x128xf32>
    %253 = math.tanh %252 : vector<8x128xf32>
    %cst_108 = arith.constant 5.000000e-01 : f32
    %254 = vector.broadcast %cst_108 : f32 to vector<8x128xf32>
    %255 = arith.mulf %254, %253 : vector<8x128xf32>
    %cst_109 = arith.constant 5.000000e-01 : f32
    %256 = vector.broadcast %cst_109 : f32 to vector<8x128xf32>
    %257 = arith.addf %255, %256 : vector<8x128xf32>
    %258 = vector.extract_strided_slice %233 {offsets = [0, 256], sizes = [8, 128], strides = [1, 1]} : vector<8x384xf32> to vector<8x128xf32>
    %259 = vector.extract_strided_slice %236 {offsets = [0, 256], sizes = [8, 128], strides = [1, 1]} : vector<8x384xf32> to vector<8x128xf32>
    %260 = arith.addf %259, %5 : vector<8x128xf32>
    %261 = arith.mulf %247, %260 : vector<8x128xf32>
    %262 = arith.addf %258, %261 : vector<8x128xf32>
    %263 = math.tanh %262 : vector<8x128xf32>
    %cst_110 = arith.constant 1.000000e+00 : f32
    %264 = vector.broadcast %cst_110 : f32 to vector<8x128xf32>
    %265 = arith.subf %264, %257 : vector<8x128xf32>
    %266 = arith.mulf %265, %263 : vector<8x128xf32>
    %267 = arith.mulf %257, %194 : vector<8x128xf32>
    %268 = arith.addf %266, %267 : vector<8x128xf32>
    %269 = vector.extract_strided_slice %235 {offsets = [0, 0], sizes = [8, 128], strides = [1, 1]} : vector<8x384xf32> to vector<8x128xf32>
    %270 = vector.extract_strided_slice %237 {offsets = [0, 0], sizes = [8, 128], strides = [1, 1]} : vector<8x384xf32> to vector<8x128xf32>
    %271 = arith.addf %269, %270 : vector<8x128xf32>
    %cst_111 = arith.constant 5.000000e-01 : f32
    %272 = vector.broadcast %cst_111 : f32 to vector<8x128xf32>
    %273 = arith.mulf %272, %271 : vector<8x128xf32>
    %274 = math.tanh %273 : vector<8x128xf32>
    %cst_112 = arith.constant 5.000000e-01 : f32
    %275 = vector.broadcast %cst_112 : f32 to vector<8x128xf32>
    %276 = arith.mulf %275, %274 : vector<8x128xf32>
    %cst_113 = arith.constant 5.000000e-01 : f32
    %277 = vector.broadcast %cst_113 : f32 to vector<8x128xf32>
    %278 = arith.addf %276, %277 : vector<8x128xf32>
    %279 = vector.extract_strided_slice %235 {offsets = [0, 128], sizes = [8, 128], strides = [1, 1]} : vector<8x384xf32> to vector<8x128xf32>
    %280 = vector.extract_strided_slice %237 {offsets = [0, 128], sizes = [8, 128], strides = [1, 1]} : vector<8x384xf32> to vector<8x128xf32>
    %281 = arith.addf %279, %280 : vector<8x128xf32>
    %cst_114 = arith.constant 5.000000e-01 : f32
    %282 = vector.broadcast %cst_114 : f32 to vector<8x128xf32>
    %283 = arith.mulf %282, %281 : vector<8x128xf32>
    %284 = math.tanh %283 : vector<8x128xf32>
    %cst_115 = arith.constant 5.000000e-01 : f32
    %285 = vector.broadcast %cst_115 : f32 to vector<8x128xf32>
    %286 = arith.mulf %285, %284 : vector<8x128xf32>
    %cst_116 = arith.constant 5.000000e-01 : f32
    %287 = vector.broadcast %cst_116 : f32 to vector<8x128xf32>
    %288 = arith.addf %286, %287 : vector<8x128xf32>
    %289 = vector.extract_strided_slice %235 {offsets = [0, 256], sizes = [8, 128], strides = [1, 1]} : vector<8x384xf32> to vector<8x128xf32>
    %290 = vector.extract_strided_slice %237 {offsets = [0, 256], sizes = [8, 128], strides = [1, 1]} : vector<8x384xf32> to vector<8x128xf32>
    %291 = arith.addf %290, %7 : vector<8x128xf32>
    %292 = arith.mulf %278, %291 : vector<8x128xf32>
    %293 = arith.addf %289, %292 : vector<8x128xf32>
    %294 = math.tanh %293 : vector<8x128xf32>
    %cst_117 = arith.constant 1.000000e+00 : f32
    %295 = vector.broadcast %cst_117 : f32 to vector<8x128xf32>
    %296 = arith.subf %295, %288 : vector<8x128xf32>
    %297 = arith.mulf %296, %294 : vector<8x128xf32>
    %298 = arith.mulf %288, %225 : vector<8x128xf32>
    %299 = arith.addf %297, %298 : vector<8x128xf32>
    %c3_118 = arith.constant 3 : index
    %c0_119 = arith.constant 0 : index
    %c0_120 = arith.constant 0 : index
    %300 = vector.load %arg3[%c3_118, %c0_119, %c0_120] : memref<8x8x256xf32, #tpu.memory_space<vmem>>, vector<1x8x128xf32>
    %301 = vector.shape_cast %300 : vector<1x8x128xf32> to vector<8x128xf32>
    %302 = vector.shape_cast %268 : vector<8x128xf32> to vector<1x8x128xf32>
    tpu.vector_store %arg3[%c3_118, %c0_119, %c0_120], %302 {strides = array<i32>} : memref<8x8x256xf32, #tpu.memory_space<vmem>>, vector<1x8x128xf32>,
    %c4_121 = arith.constant 4 : index
    %c0_122 = arith.constant 0 : index
    %c128_123 = arith.constant 128 : index
    %303 = vector.load %arg3[%c4_121, %c0_122, %c128_123] : memref<8x8x256xf32, #tpu.memory_space<vmem>>, vector<1x8x128xf32>
    %304 = vector.shape_cast %303 : vector<1x8x128xf32> to vector<8x128xf32>
    %305 = vector.shape_cast %299 : vector<8x128xf32> to vector<1x8x128xf32>
    tpu.vector_store %arg3[%c4_121, %c0_122, %c128_123], %305 {strides = array<i32>} : memref<8x8x256xf32, #tpu.memory_space<vmem>>, vector<1x8x128xf32>,
    %c0_124 = arith.constant 0 : index
    %c4_125 = arith.constant 4 : index
    %c0_126 = arith.constant 0 : index
    %c0_127 = arith.constant 0 : index
    %306 = vector.load %arg0[%c0_124, %c4_125, %c0_126, %c0_127] : memref<2x8x8x384xf32, #tpu.memory_space<vmem>>, vector<1x1x8x384xf32>
    %307 = vector.shape_cast %306 : vector<1x1x8x384xf32> to vector<8x384xf32>
    %c1_128 = arith.constant 1 : index
    %c3_129 = arith.constant 3 : index
    %c0_130 = arith.constant 0 : index
    %c0_131 = arith.constant 0 : index
    %308 = vector.load %arg0[%c1_128, %c3_129, %c0_130, %c0_131] : memref<2x8x8x384xf32, #tpu.memory_space<vmem>>, vector<1x1x8x384xf32>
    %309 = vector.shape_cast %308 : vector<1x1x8x384xf32> to vector<8x384xf32>
    %cst_132 = arith.constant dense<0.000000e+00> : vector<8x384xf32>
    %310 = tpu.matmul %268, %1, %cst_132 {dimension_numbers = #tpu.dot_dimension_numbers<[1], [0], [0], [1], [0, 0, 1, 1], [], []>} : vector<8x128xf32>, vector<128x384xf32>, vector<8x384xf32> -> vector<8x384xf32>
    %cst_133 = arith.constant dense<0.000000e+00> : vector<8x384xf32>
    %311 = tpu.matmul %299, %3, %cst_133 {dimension_numbers = #tpu.dot_dimension_numbers<[1], [0], [0], [1], [0, 0, 1, 1], [], []>} : vector<8x128xf32>, vector<128x384xf32>, vector<8x384xf32> -> vector<8x384xf32>
    %312 = vector.extract_strided_slice %307 {offsets = [0, 0], sizes = [8, 128], strides = [1, 1]} : vector<8x384xf32> to vector<8x128xf32>
    %313 = vector.extract_strided_slice %310 {offsets = [0, 0], sizes = [8, 128], strides = [1, 1]} : vector<8x384xf32> to vector<8x128xf32>
    %314 = arith.addf %312, %313 : vector<8x128xf32>
    %cst_134 = arith.constant 5.000000e-01 : f32
    %315 = vector.broadcast %cst_134 : f32 to vector<8x128xf32>
    %316 = arith.mulf %315, %314 : vector<8x128xf32>
    %317 = math.tanh %316 : vector<8x128xf32>
    %cst_135 = arith.constant 5.000000e-01 : f32
    %318 = vector.broadcast %cst_135 : f32 to vector<8x128xf32>
    %319 = arith.mulf %318, %317 : vector<8x128xf32>
    %cst_136 = arith.constant 5.000000e-01 : f32
    %320 = vector.broadcast %cst_136 : f32 to vector<8x128xf32>
    %321 = arith.addf %319, %320 : vector<8x128xf32>
    %322 = vector.extract_strided_slice %307 {offsets = [0, 128], sizes = [8, 128], strides = [1, 1]} : vector<8x384xf32> to vector<8x128xf32>
    %323 = vector.extract_strided_slice %310 {offsets = [0, 128], sizes = [8, 128], strides = [1, 1]} : vector<8x384xf32> to vector<8x128xf32>
    %324 = arith.addf %322, %323 : vector<8x128xf32>
    %cst_137 = arith.constant 5.000000e-01 : f32
    %325 = vector.broadcast %cst_137 : f32 to vector<8x128xf32>
    %326 = arith.mulf %325, %324 : vector<8x128xf32>
    %327 = math.tanh %326 : vector<8x128xf32>
    %cst_138 = arith.constant 5.000000e-01 : f32
    %328 = vector.broadcast %cst_138 : f32 to vector<8x128xf32>
    %329 = arith.mulf %328, %327 : vector<8x128xf32>
    %cst_139 = arith.constant 5.000000e-01 : f32
    %330 = vector.broadcast %cst_139 : f32 to vector<8x128xf32>
    %331 = arith.addf %329, %330 : vector<8x128xf32>
    %332 = vector.extract_strided_slice %307 {offsets = [0, 256], sizes = [8, 128], strides = [1, 1]} : vector<8x384xf32> to vector<8x128xf32>
    %333 = vector.extract_strided_slice %310 {offsets = [0, 256], sizes = [8, 128], strides = [1, 1]} : vector<8x384xf32> to vector<8x128xf32>
    %334 = arith.addf %333, %5 : vector<8x128xf32>
    %335 = arith.mulf %321, %334 : vector<8x128xf32>
    %336 = arith.addf %332, %335 : vector<8x128xf32>
    %337 = math.tanh %336 : vector<8x128xf32>
    %cst_140 = arith.constant 1.000000e+00 : f32
    %338 = vector.broadcast %cst_140 : f32 to vector<8x128xf32>
    %339 = arith.subf %338, %331 : vector<8x128xf32>
    %340 = arith.mulf %339, %337 : vector<8x128xf32>
    %341 = arith.mulf %331, %268 : vector<8x128xf32>
    %342 = arith.addf %340, %341 : vector<8x128xf32>
    %343 = vector.extract_strided_slice %309 {offsets = [0, 0], sizes = [8, 128], strides = [1, 1]} : vector<8x384xf32> to vector<8x128xf32>
    %344 = vector.extract_strided_slice %311 {offsets = [0, 0], sizes = [8, 128], strides = [1, 1]} : vector<8x384xf32> to vector<8x128xf32>
    %345 = arith.addf %343, %344 : vector<8x128xf32>
    %cst_141 = arith.constant 5.000000e-01 : f32
    %346 = vector.broadcast %cst_141 : f32 to vector<8x128xf32>
    %347 = arith.mulf %346, %345 : vector<8x128xf32>
    %348 = math.tanh %347 : vector<8x128xf32>
    %cst_142 = arith.constant 5.000000e-01 : f32
    %349 = vector.broadcast %cst_142 : f32 to vector<8x128xf32>
    %350 = arith.mulf %349, %348 : vector<8x128xf32>
    %cst_143 = arith.constant 5.000000e-01 : f32
    %351 = vector.broadcast %cst_143 : f32 to vector<8x128xf32>
    %352 = arith.addf %350, %351 : vector<8x128xf32>
    %353 = vector.extract_strided_slice %309 {offsets = [0, 128], sizes = [8, 128], strides = [1, 1]} : vector<8x384xf32> to vector<8x128xf32>
    %354 = vector.extract_strided_slice %311 {offsets = [0, 128], sizes = [8, 128], strides = [1, 1]} : vector<8x384xf32> to vector<8x128xf32>
    %355 = arith.addf %353, %354 : vector<8x128xf32>
    %cst_144 = arith.constant 5.000000e-01 : f32
    %356 = vector.broadcast %cst_144 : f32 to vector<8x128xf32>
    %357 = arith.mulf %356, %355 : vector<8x128xf32>
    %358 = math.tanh %357 : vector<8x128xf32>
    %cst_145 = arith.constant 5.000000e-01 : f32
    %359 = vector.broadcast %cst_145 : f32 to vector<8x128xf32>
    %360 = arith.mulf %359, %358 : vector<8x128xf32>
    %cst_146 = arith.constant 5.000000e-01 : f32
    %361 = vector.broadcast %cst_146 : f32 to vector<8x128xf32>
    %362 = arith.addf %360, %361 : vector<8x128xf32>
    %363 = vector.extract_strided_slice %309 {offsets = [0, 256], sizes = [8, 128], strides = [1, 1]} : vector<8x384xf32> to vector<8x128xf32>
    %364 = vector.extract_strided_slice %311 {offsets = [0, 256], sizes = [8, 128], strides = [1, 1]} : vector<8x384xf32> to vector<8x128xf32>
    %365 = arith.addf %364, %7 : vector<8x128xf32>
    %366 = arith.mulf %352, %365 : vector<8x128xf32>
    %367 = arith.addf %363, %366 : vector<8x128xf32>
    %368 = math.tanh %367 : vector<8x128xf32>
    %cst_147 = arith.constant 1.000000e+00 : f32
    %369 = vector.broadcast %cst_147 : f32 to vector<8x128xf32>
    %370 = arith.subf %369, %362 : vector<8x128xf32>
    %371 = arith.mulf %370, %368 : vector<8x128xf32>
    %372 = arith.mulf %362, %299 : vector<8x128xf32>
    %373 = arith.addf %371, %372 : vector<8x128xf32>
    %c4_148 = arith.constant 4 : index
    %c0_149 = arith.constant 0 : index
    %c0_150 = arith.constant 0 : index
    %374 = vector.load %arg3[%c4_148, %c0_149, %c0_150] : memref<8x8x256xf32, #tpu.memory_space<vmem>>, vector<1x8x128xf32>
    %375 = vector.shape_cast %374 : vector<1x8x128xf32> to vector<8x128xf32>
    %376 = vector.shape_cast %342 : vector<8x128xf32> to vector<1x8x128xf32>
    tpu.vector_store %arg3[%c4_148, %c0_149, %c0_150], %376 {strides = array<i32>} : memref<8x8x256xf32, #tpu.memory_space<vmem>>, vector<1x8x128xf32>,
    %c3_151 = arith.constant 3 : index
    %c0_152 = arith.constant 0 : index
    %c128_153 = arith.constant 128 : index
    %377 = vector.load %arg3[%c3_151, %c0_152, %c128_153] : memref<8x8x256xf32, #tpu.memory_space<vmem>>, vector<1x8x128xf32>
    %378 = vector.shape_cast %377 : vector<1x8x128xf32> to vector<8x128xf32>
    %379 = vector.shape_cast %373 : vector<8x128xf32> to vector<1x8x128xf32>
    tpu.vector_store %arg3[%c3_151, %c0_152, %c128_153], %379 {strides = array<i32>} : memref<8x8x256xf32, #tpu.memory_space<vmem>>, vector<1x8x128xf32>,
    %c0_154 = arith.constant 0 : index
    %c5_155 = arith.constant 5 : index
    %c0_156 = arith.constant 0 : index
    %c0_157 = arith.constant 0 : index
    %380 = vector.load %arg0[%c0_154, %c5_155, %c0_156, %c0_157] : memref<2x8x8x384xf32, #tpu.memory_space<vmem>>, vector<1x1x8x384xf32>
    %381 = vector.shape_cast %380 : vector<1x1x8x384xf32> to vector<8x384xf32>
    %c1_158 = arith.constant 1 : index
    %c2_159 = arith.constant 2 : index
    %c0_160 = arith.constant 0 : index
    %c0_161 = arith.constant 0 : index
    %382 = vector.load %arg0[%c1_158, %c2_159, %c0_160, %c0_161] : memref<2x8x8x384xf32, #tpu.memory_space<vmem>>, vector<1x1x8x384xf32>
    %383 = vector.shape_cast %382 : vector<1x1x8x384xf32> to vector<8x384xf32>
    %cst_162 = arith.constant dense<0.000000e+00> : vector<8x384xf32>
    %384 = tpu.matmul %342, %1, %cst_162 {dimension_numbers = #tpu.dot_dimension_numbers<[1], [0], [0], [1], [0, 0, 1, 1], [], []>} : vector<8x128xf32>, vector<128x384xf32>, vector<8x384xf32> -> vector<8x384xf32>
    %cst_163 = arith.constant dense<0.000000e+00> : vector<8x384xf32>
    %385 = tpu.matmul %373, %3, %cst_163 {dimension_numbers = #tpu.dot_dimension_numbers<[1], [0], [0], [1], [0, 0, 1, 1], [], []>} : vector<8x128xf32>, vector<128x384xf32>, vector<8x384xf32> -> vector<8x384xf32>
    %386 = vector.extract_strided_slice %381 {offsets = [0, 0], sizes = [8, 128], strides = [1, 1]} : vector<8x384xf32> to vector<8x128xf32>
    %387 = vector.extract_strided_slice %384 {offsets = [0, 0], sizes = [8, 128], strides = [1, 1]} : vector<8x384xf32> to vector<8x128xf32>
    %388 = arith.addf %386, %387 : vector<8x128xf32>
    %cst_164 = arith.constant 5.000000e-01 : f32
    %389 = vector.broadcast %cst_164 : f32 to vector<8x128xf32>
    %390 = arith.mulf %389, %388 : vector<8x128xf32>
    %391 = math.tanh %390 : vector<8x128xf32>
    %cst_165 = arith.constant 5.000000e-01 : f32
    %392 = vector.broadcast %cst_165 : f32 to vector<8x128xf32>
    %393 = arith.mulf %392, %391 : vector<8x128xf32>
    %cst_166 = arith.constant 5.000000e-01 : f32
    %394 = vector.broadcast %cst_166 : f32 to vector<8x128xf32>
    %395 = arith.addf %393, %394 : vector<8x128xf32>
    %396 = vector.extract_strided_slice %381 {offsets = [0, 128], sizes = [8, 128], strides = [1, 1]} : vector<8x384xf32> to vector<8x128xf32>
    %397 = vector.extract_strided_slice %384 {offsets = [0, 128], sizes = [8, 128], strides = [1, 1]} : vector<8x384xf32> to vector<8x128xf32>
    %398 = arith.addf %396, %397 : vector<8x128xf32>
    %cst_167 = arith.constant 5.000000e-01 : f32
    %399 = vector.broadcast %cst_167 : f32 to vector<8x128xf32>
    %400 = arith.mulf %399, %398 : vector<8x128xf32>
    %401 = math.tanh %400 : vector<8x128xf32>
    %cst_168 = arith.constant 5.000000e-01 : f32
    %402 = vector.broadcast %cst_168 : f32 to vector<8x128xf32>
    %403 = arith.mulf %402, %401 : vector<8x128xf32>
    %cst_169 = arith.constant 5.000000e-01 : f32
    %404 = vector.broadcast %cst_169 : f32 to vector<8x128xf32>
    %405 = arith.addf %403, %404 : vector<8x128xf32>
    %406 = vector.extract_strided_slice %381 {offsets = [0, 256], sizes = [8, 128], strides = [1, 1]} : vector<8x384xf32> to vector<8x128xf32>
    %407 = vector.extract_strided_slice %384 {offsets = [0, 256], sizes = [8, 128], strides = [1, 1]} : vector<8x384xf32> to vector<8x128xf32>
    %408 = arith.addf %407, %5 : vector<8x128xf32>
    %409 = arith.mulf %395, %408 : vector<8x128xf32>
    %410 = arith.addf %406, %409 : vector<8x128xf32>
    %411 = math.tanh %410 : vector<8x128xf32>
    %cst_170 = arith.constant 1.000000e+00 : f32
    %412 = vector.broadcast %cst_170 : f32 to vector<8x128xf32>
    %413 = arith.subf %412, %405 : vector<8x128xf32>
    %414 = arith.mulf %413, %411 : vector<8x128xf32>
    %415 = arith.mulf %405, %342 : vector<8x128xf32>
    %416 = arith.addf %414, %415 : vector<8x128xf32>
    %417 = vector.extract_strided_slice %383 {offsets = [0, 0], sizes = [8, 128], strides = [1, 1]} : vector<8x384xf32> to vector<8x128xf32>
    %418 = vector.extract_strided_slice %385 {offsets = [0, 0], sizes = [8, 128], strides = [1, 1]} : vector<8x384xf32> to vector<8x128xf32>
    %419 = arith.addf %417, %418 : vector<8x128xf32>
    %cst_171 = arith.constant 5.000000e-01 : f32
    %420 = vector.broadcast %cst_171 : f32 to vector<8x128xf32>
    %421 = arith.mulf %420, %419 : vector<8x128xf32>
    %422 = math.tanh %421 : vector<8x128xf32>
    %cst_172 = arith.constant 5.000000e-01 : f32
    %423 = vector.broadcast %cst_172 : f32 to vector<8x128xf32>
    %424 = arith.mulf %423, %422 : vector<8x128xf32>
    %cst_173 = arith.constant 5.000000e-01 : f32
    %425 = vector.broadcast %cst_173 : f32 to vector<8x128xf32>
    %426 = arith.addf %424, %425 : vector<8x128xf32>
    %427 = vector.extract_strided_slice %383 {offsets = [0, 128], sizes = [8, 128], strides = [1, 1]} : vector<8x384xf32> to vector<8x128xf32>
    %428 = vector.extract_strided_slice %385 {offsets = [0, 128], sizes = [8, 128], strides = [1, 1]} : vector<8x384xf32> to vector<8x128xf32>
    %429 = arith.addf %427, %428 : vector<8x128xf32>
    %cst_174 = arith.constant 5.000000e-01 : f32
    %430 = vector.broadcast %cst_174 : f32 to vector<8x128xf32>
    %431 = arith.mulf %430, %429 : vector<8x128xf32>
    %432 = math.tanh %431 : vector<8x128xf32>
    %cst_175 = arith.constant 5.000000e-01 : f32
    %433 = vector.broadcast %cst_175 : f32 to vector<8x128xf32>
    %434 = arith.mulf %433, %432 : vector<8x128xf32>
    %cst_176 = arith.constant 5.000000e-01 : f32
    %435 = vector.broadcast %cst_176 : f32 to vector<8x128xf32>
    %436 = arith.addf %434, %435 : vector<8x128xf32>
    %437 = vector.extract_strided_slice %383 {offsets = [0, 256], sizes = [8, 128], strides = [1, 1]} : vector<8x384xf32> to vector<8x128xf32>
    %438 = vector.extract_strided_slice %385 {offsets = [0, 256], sizes = [8, 128], strides = [1, 1]} : vector<8x384xf32> to vector<8x128xf32>
    %439 = arith.addf %438, %7 : vector<8x128xf32>
    %440 = arith.mulf %426, %439 : vector<8x128xf32>
    %441 = arith.addf %437, %440 : vector<8x128xf32>
    %442 = math.tanh %441 : vector<8x128xf32>
    %cst_177 = arith.constant 1.000000e+00 : f32
    %443 = vector.broadcast %cst_177 : f32 to vector<8x128xf32>
    %444 = arith.subf %443, %436 : vector<8x128xf32>
    %445 = arith.mulf %444, %442 : vector<8x128xf32>
    %446 = arith.mulf %436, %373 : vector<8x128xf32>
    %447 = arith.addf %445, %446 : vector<8x128xf32>
    %c5_178 = arith.constant 5 : index
    %c0_179 = arith.constant 0 : index
    %c0_180 = arith.constant 0 : index
    %448 = vector.load %arg3[%c5_178, %c0_179, %c0_180] : memref<8x8x256xf32, #tpu.memory_space<vmem>>, vector<1x8x128xf32>
    %449 = vector.shape_cast %448 : vector<1x8x128xf32> to vector<8x128xf32>
    %450 = vector.shape_cast %416 : vector<8x128xf32> to vector<1x8x128xf32>
    tpu.vector_store %arg3[%c5_178, %c0_179, %c0_180], %450 {strides = array<i32>} : memref<8x8x256xf32, #tpu.memory_space<vmem>>, vector<1x8x128xf32>,
    %c2_181 = arith.constant 2 : index
    %c0_182 = arith.constant 0 : index
    %c128_183 = arith.constant 128 : index
    %451 = vector.load %arg3[%c2_181, %c0_182, %c128_183] : memref<8x8x256xf32, #tpu.memory_space<vmem>>, vector<1x8x128xf32>
    %452 = vector.shape_cast %451 : vector<1x8x128xf32> to vector<8x128xf32>
    %453 = vector.shape_cast %447 : vector<8x128xf32> to vector<1x8x128xf32>
    tpu.vector_store %arg3[%c2_181, %c0_182, %c128_183], %453 {strides = array<i32>} : memref<8x8x256xf32, #tpu.memory_space<vmem>>, vector<1x8x128xf32>,
    %c0_184 = arith.constant 0 : index
    %c6_185 = arith.constant 6 : index
    %c0_186 = arith.constant 0 : index
    %c0_187 = arith.constant 0 : index
    %454 = vector.load %arg0[%c0_184, %c6_185, %c0_186, %c0_187] : memref<2x8x8x384xf32, #tpu.memory_space<vmem>>, vector<1x1x8x384xf32>
    %455 = vector.shape_cast %454 : vector<1x1x8x384xf32> to vector<8x384xf32>
    %c1_188 = arith.constant 1 : index
    %c1_189 = arith.constant 1 : index
    %c0_190 = arith.constant 0 : index
    %c0_191 = arith.constant 0 : index
    %456 = vector.load %arg0[%c1_188, %c1_189, %c0_190, %c0_191] : memref<2x8x8x384xf32, #tpu.memory_space<vmem>>, vector<1x1x8x384xf32>
    %457 = vector.shape_cast %456 : vector<1x1x8x384xf32> to vector<8x384xf32>
    %cst_192 = arith.constant dense<0.000000e+00> : vector<8x384xf32>
    %458 = tpu.matmul %416, %1, %cst_192 {dimension_numbers = #tpu.dot_dimension_numbers<[1], [0], [0], [1], [0, 0, 1, 1], [], []>} : vector<8x128xf32>, vector<128x384xf32>, vector<8x384xf32> -> vector<8x384xf32>
    %cst_193 = arith.constant dense<0.000000e+00> : vector<8x384xf32>
    %459 = tpu.matmul %447, %3, %cst_193 {dimension_numbers = #tpu.dot_dimension_numbers<[1], [0], [0], [1], [0, 0, 1, 1], [], []>} : vector<8x128xf32>, vector<128x384xf32>, vector<8x384xf32> -> vector<8x384xf32>
    %460 = vector.extract_strided_slice %455 {offsets = [0, 0], sizes = [8, 128], strides = [1, 1]} : vector<8x384xf32> to vector<8x128xf32>
    %461 = vector.extract_strided_slice %458 {offsets = [0, 0], sizes = [8, 128], strides = [1, 1]} : vector<8x384xf32> to vector<8x128xf32>
    %462 = arith.addf %460, %461 : vector<8x128xf32>
    %cst_194 = arith.constant 5.000000e-01 : f32
    %463 = vector.broadcast %cst_194 : f32 to vector<8x128xf32>
    %464 = arith.mulf %463, %462 : vector<8x128xf32>
    %465 = math.tanh %464 : vector<8x128xf32>
    %cst_195 = arith.constant 5.000000e-01 : f32
    %466 = vector.broadcast %cst_195 : f32 to vector<8x128xf32>
    %467 = arith.mulf %466, %465 : vector<8x128xf32>
    %cst_196 = arith.constant 5.000000e-01 : f32
    %468 = vector.broadcast %cst_196 : f32 to vector<8x128xf32>
    %469 = arith.addf %467, %468 : vector<8x128xf32>
    %470 = vector.extract_strided_slice %455 {offsets = [0, 128], sizes = [8, 128], strides = [1, 1]} : vector<8x384xf32> to vector<8x128xf32>
    %471 = vector.extract_strided_slice %458 {offsets = [0, 128], sizes = [8, 128], strides = [1, 1]} : vector<8x384xf32> to vector<8x128xf32>
    %472 = arith.addf %470, %471 : vector<8x128xf32>
    %cst_197 = arith.constant 5.000000e-01 : f32
    %473 = vector.broadcast %cst_197 : f32 to vector<8x128xf32>
    %474 = arith.mulf %473, %472 : vector<8x128xf32>
    %475 = math.tanh %474 : vector<8x128xf32>
    %cst_198 = arith.constant 5.000000e-01 : f32
    %476 = vector.broadcast %cst_198 : f32 to vector<8x128xf32>
    %477 = arith.mulf %476, %475 : vector<8x128xf32>
    %cst_199 = arith.constant 5.000000e-01 : f32
    %478 = vector.broadcast %cst_199 : f32 to vector<8x128xf32>
    %479 = arith.addf %477, %478 : vector<8x128xf32>
    %480 = vector.extract_strided_slice %455 {offsets = [0, 256], sizes = [8, 128], strides = [1, 1]} : vector<8x384xf32> to vector<8x128xf32>
    %481 = vector.extract_strided_slice %458 {offsets = [0, 256], sizes = [8, 128], strides = [1, 1]} : vector<8x384xf32> to vector<8x128xf32>
    %482 = arith.addf %481, %5 : vector<8x128xf32>
    %483 = arith.mulf %469, %482 : vector<8x128xf32>
    %484 = arith.addf %480, %483 : vector<8x128xf32>
    %485 = math.tanh %484 : vector<8x128xf32>
    %cst_200 = arith.constant 1.000000e+00 : f32
    %486 = vector.broadcast %cst_200 : f32 to vector<8x128xf32>
    %487 = arith.subf %486, %479 : vector<8x128xf32>
    %488 = arith.mulf %487, %485 : vector<8x128xf32>
    %489 = arith.mulf %479, %416 : vector<8x128xf32>
    %490 = arith.addf %488, %489 : vector<8x128xf32>
    %491 = vector.extract_strided_slice %457 {offsets = [0, 0], sizes = [8, 128], strides = [1, 1]} : vector<8x384xf32> to vector<8x128xf32>
    %492 = vector.extract_strided_slice %459 {offsets = [0, 0], sizes = [8, 128], strides = [1, 1]} : vector<8x384xf32> to vector<8x128xf32>
    %493 = arith.addf %491, %492 : vector<8x128xf32>
    %cst_201 = arith.constant 5.000000e-01 : f32
    %494 = vector.broadcast %cst_201 : f32 to vector<8x128xf32>
    %495 = arith.mulf %494, %493 : vector<8x128xf32>
    %496 = math.tanh %495 : vector<8x128xf32>
    %cst_202 = arith.constant 5.000000e-01 : f32
    %497 = vector.broadcast %cst_202 : f32 to vector<8x128xf32>
    %498 = arith.mulf %497, %496 : vector<8x128xf32>
    %cst_203 = arith.constant 5.000000e-01 : f32
    %499 = vector.broadcast %cst_203 : f32 to vector<8x128xf32>
    %500 = arith.addf %498, %499 : vector<8x128xf32>
    %501 = vector.extract_strided_slice %457 {offsets = [0, 128], sizes = [8, 128], strides = [1, 1]} : vector<8x384xf32> to vector<8x128xf32>
    %502 = vector.extract_strided_slice %459 {offsets = [0, 128], sizes = [8, 128], strides = [1, 1]} : vector<8x384xf32> to vector<8x128xf32>
    %503 = arith.addf %501, %502 : vector<8x128xf32>
    %cst_204 = arith.constant 5.000000e-01 : f32
    %504 = vector.broadcast %cst_204 : f32 to vector<8x128xf32>
    %505 = arith.mulf %504, %503 : vector<8x128xf32>
    %506 = math.tanh %505 : vector<8x128xf32>
    %cst_205 = arith.constant 5.000000e-01 : f32
    %507 = vector.broadcast %cst_205 : f32 to vector<8x128xf32>
    %508 = arith.mulf %507, %506 : vector<8x128xf32>
    %cst_206 = arith.constant 5.000000e-01 : f32
    %509 = vector.broadcast %cst_206 : f32 to vector<8x128xf32>
    %510 = arith.addf %508, %509 : vector<8x128xf32>
    %511 = vector.extract_strided_slice %457 {offsets = [0, 256], sizes = [8, 128], strides = [1, 1]} : vector<8x384xf32> to vector<8x128xf32>
    %512 = vector.extract_strided_slice %459 {offsets = [0, 256], sizes = [8, 128], strides = [1, 1]} : vector<8x384xf32> to vector<8x128xf32>
    %513 = arith.addf %512, %7 : vector<8x128xf32>
    %514 = arith.mulf %500, %513 : vector<8x128xf32>
    %515 = arith.addf %511, %514 : vector<8x128xf32>
    %516 = math.tanh %515 : vector<8x128xf32>
    %cst_207 = arith.constant 1.000000e+00 : f32
    %517 = vector.broadcast %cst_207 : f32 to vector<8x128xf32>
    %518 = arith.subf %517, %510 : vector<8x128xf32>
    %519 = arith.mulf %518, %516 : vector<8x128xf32>
    %520 = arith.mulf %510, %447 : vector<8x128xf32>
    %521 = arith.addf %519, %520 : vector<8x128xf32>
    %c6_208 = arith.constant 6 : index
    %c0_209 = arith.constant 0 : index
    %c0_210 = arith.constant 0 : index
    %522 = vector.load %arg3[%c6_208, %c0_209, %c0_210] : memref<8x8x256xf32, #tpu.memory_space<vmem>>, vector<1x8x128xf32>
    %523 = vector.shape_cast %522 : vector<1x8x128xf32> to vector<8x128xf32>
    %524 = vector.shape_cast %490 : vector<8x128xf32> to vector<1x8x128xf32>
    tpu.vector_store %arg3[%c6_208, %c0_209, %c0_210], %524 {strides = array<i32>} : memref<8x8x256xf32, #tpu.memory_space<vmem>>, vector<1x8x128xf32>,
    %c1_211 = arith.constant 1 : index
    %c0_212 = arith.constant 0 : index
    %c128_213 = arith.constant 128 : index
    %525 = vector.load %arg3[%c1_211, %c0_212, %c128_213] : memref<8x8x256xf32, #tpu.memory_space<vmem>>, vector<1x8x128xf32>
    %526 = vector.shape_cast %525 : vector<1x8x128xf32> to vector<8x128xf32>
    %527 = vector.shape_cast %521 : vector<8x128xf32> to vector<1x8x128xf32>
    tpu.vector_store %arg3[%c1_211, %c0_212, %c128_213], %527 {strides = array<i32>} : memref<8x8x256xf32, #tpu.memory_space<vmem>>, vector<1x8x128xf32>,
    %c0_214 = arith.constant 0 : index
    %c7_215 = arith.constant 7 : index
    %c0_216 = arith.constant 0 : index
    %c0_217 = arith.constant 0 : index
    %528 = vector.load %arg0[%c0_214, %c7_215, %c0_216, %c0_217] : memref<2x8x8x384xf32, #tpu.memory_space<vmem>>, vector<1x1x8x384xf32>
    %529 = vector.shape_cast %528 : vector<1x1x8x384xf32> to vector<8x384xf32>
    %c1_218 = arith.constant 1 : index
    %c0_219 = arith.constant 0 : index
    %c0_220 = arith.constant 0 : index
    %c0_221 = arith.constant 0 : index
    %530 = vector.load %arg0[%c1_218, %c0_219, %c0_220, %c0_221] : memref<2x8x8x384xf32, #tpu.memory_space<vmem>>, vector<1x1x8x384xf32>
    %531 = vector.shape_cast %530 : vector<1x1x8x384xf32> to vector<8x384xf32>
    %cst_222 = arith.constant dense<0.000000e+00> : vector<8x384xf32>
    %532 = tpu.matmul %490, %1, %cst_222 {dimension_numbers = #tpu.dot_dimension_numbers<[1], [0], [0], [1], [0, 0, 1, 1], [], []>} : vector<8x128xf32>, vector<128x384xf32>, vector<8x384xf32> -> vector<8x384xf32>
    %cst_223 = arith.constant dense<0.000000e+00> : vector<8x384xf32>
    %533 = tpu.matmul %521, %3, %cst_223 {dimension_numbers = #tpu.dot_dimension_numbers<[1], [0], [0], [1], [0, 0, 1, 1], [], []>} : vector<8x128xf32>, vector<128x384xf32>, vector<8x384xf32> -> vector<8x384xf32>
    %534 = vector.extract_strided_slice %529 {offsets = [0, 0], sizes = [8, 128], strides = [1, 1]} : vector<8x384xf32> to vector<8x128xf32>
    %535 = vector.extract_strided_slice %532 {offsets = [0, 0], sizes = [8, 128], strides = [1, 1]} : vector<8x384xf32> to vector<8x128xf32>
    %536 = arith.addf %534, %535 : vector<8x128xf32>
    %cst_224 = arith.constant 5.000000e-01 : f32
    %537 = vector.broadcast %cst_224 : f32 to vector<8x128xf32>
    %538 = arith.mulf %537, %536 : vector<8x128xf32>
    %539 = math.tanh %538 : vector<8x128xf32>
    %cst_225 = arith.constant 5.000000e-01 : f32
    %540 = vector.broadcast %cst_225 : f32 to vector<8x128xf32>
    %541 = arith.mulf %540, %539 : vector<8x128xf32>
    %cst_226 = arith.constant 5.000000e-01 : f32
    %542 = vector.broadcast %cst_226 : f32 to vector<8x128xf32>
    %543 = arith.addf %541, %542 : vector<8x128xf32>
    %544 = vector.extract_strided_slice %529 {offsets = [0, 128], sizes = [8, 128], strides = [1, 1]} : vector<8x384xf32> to vector<8x128xf32>
    %545 = vector.extract_strided_slice %532 {offsets = [0, 128], sizes = [8, 128], strides = [1, 1]} : vector<8x384xf32> to vector<8x128xf32>
    %546 = arith.addf %544, %545 : vector<8x128xf32>
    %cst_227 = arith.constant 5.000000e-01 : f32
    %547 = vector.broadcast %cst_227 : f32 to vector<8x128xf32>
    %548 = arith.mulf %547, %546 : vector<8x128xf32>
    %549 = math.tanh %548 : vector<8x128xf32>
    %cst_228 = arith.constant 5.000000e-01 : f32
    %550 = vector.broadcast %cst_228 : f32 to vector<8x128xf32>
    %551 = arith.mulf %550, %549 : vector<8x128xf32>
    %cst_229 = arith.constant 5.000000e-01 : f32
    %552 = vector.broadcast %cst_229 : f32 to vector<8x128xf32>
    %553 = arith.addf %551, %552 : vector<8x128xf32>
    %554 = vector.extract_strided_slice %529 {offsets = [0, 256], sizes = [8, 128], strides = [1, 1]} : vector<8x384xf32> to vector<8x128xf32>
    %555 = vector.extract_strided_slice %532 {offsets = [0, 256], sizes = [8, 128], strides = [1, 1]} : vector<8x384xf32> to vector<8x128xf32>
    %556 = arith.addf %555, %5 : vector<8x128xf32>
    %557 = arith.mulf %543, %556 : vector<8x128xf32>
    %558 = arith.addf %554, %557 : vector<8x128xf32>
    %559 = math.tanh %558 : vector<8x128xf32>
    %cst_230 = arith.constant 1.000000e+00 : f32
    %560 = vector.broadcast %cst_230 : f32 to vector<8x128xf32>
    %561 = arith.subf %560, %553 : vector<8x128xf32>
    %562 = arith.mulf %561, %559 : vector<8x128xf32>
    %563 = arith.mulf %553, %490 : vector<8x128xf32>
    %564 = arith.addf %562, %563 : vector<8x128xf32>
    %565 = vector.extract_strided_slice %531 {offsets = [0, 0], sizes = [8, 128], strides = [1, 1]} : vector<8x384xf32> to vector<8x128xf32>
    %566 = vector.extract_strided_slice %533 {offsets = [0, 0], sizes = [8, 128], strides = [1, 1]} : vector<8x384xf32> to vector<8x128xf32>
    %567 = arith.addf %565, %566 : vector<8x128xf32>
    %cst_231 = arith.constant 5.000000e-01 : f32
    %568 = vector.broadcast %cst_231 : f32 to vector<8x128xf32>
    %569 = arith.mulf %568, %567 : vector<8x128xf32>
    %570 = math.tanh %569 : vector<8x128xf32>
    %cst_232 = arith.constant 5.000000e-01 : f32
    %571 = vector.broadcast %cst_232 : f32 to vector<8x128xf32>
    %572 = arith.mulf %571, %570 : vector<8x128xf32>
    %cst_233 = arith.constant 5.000000e-01 : f32
    %573 = vector.broadcast %cst_233 : f32 to vector<8x128xf32>
    %574 = arith.addf %572, %573 : vector<8x128xf32>
    %575 = vector.extract_strided_slice %531 {offsets = [0, 128], sizes = [8, 128], strides = [1, 1]} : vector<8x384xf32> to vector<8x128xf32>
    %576 = vector.extract_strided_slice %533 {offsets = [0, 128], sizes = [8, 128], strides = [1, 1]} : vector<8x384xf32> to vector<8x128xf32>
    %577 = arith.addf %575, %576 : vector<8x128xf32>
    %cst_234 = arith.constant 5.000000e-01 : f32
    %578 = vector.broadcast %cst_234 : f32 to vector<8x128xf32>
    %579 = arith.mulf %578, %577 : vector<8x128xf32>
    %580 = math.tanh %579 : vector<8x128xf32>
    %cst_235 = arith.constant 5.000000e-01 : f32
    %581 = vector.broadcast %cst_235 : f32 to vector<8x128xf32>
    %582 = arith.mulf %581, %580 : vector<8x128xf32>
    %cst_236 = arith.constant 5.000000e-01 : f32
    %583 = vector.broadcast %cst_236 : f32 to vector<8x128xf32>
    %584 = arith.addf %582, %583 : vector<8x128xf32>
    %585 = vector.extract_strided_slice %531 {offsets = [0, 256], sizes = [8, 128], strides = [1, 1]} : vector<8x384xf32> to vector<8x128xf32>
    %586 = vector.extract_strided_slice %533 {offsets = [0, 256], sizes = [8, 128], strides = [1, 1]} : vector<8x384xf32> to vector<8x128xf32>
    %587 = arith.addf %586, %7 : vector<8x128xf32>
    %588 = arith.mulf %574, %587 : vector<8x128xf32>
    %589 = arith.addf %585, %588 : vector<8x128xf32>
    %590 = math.tanh %589 : vector<8x128xf32>
    %cst_237 = arith.constant 1.000000e+00 : f32
    %591 = vector.broadcast %cst_237 : f32 to vector<8x128xf32>
    %592 = arith.subf %591, %584 : vector<8x128xf32>
    %593 = arith.mulf %592, %590 : vector<8x128xf32>
    %594 = arith.mulf %584, %521 : vector<8x128xf32>
    %595 = arith.addf %593, %594 : vector<8x128xf32>
    %c7_238 = arith.constant 7 : index
    %c0_239 = arith.constant 0 : index
    %c0_240 = arith.constant 0 : index
    %596 = vector.load %arg3[%c7_238, %c0_239, %c0_240] : memref<8x8x256xf32, #tpu.memory_space<vmem>>, vector<1x8x128xf32>
    %597 = vector.shape_cast %596 : vector<1x8x128xf32> to vector<8x128xf32>
    %598 = vector.shape_cast %564 : vector<8x128xf32> to vector<1x8x128xf32>
    tpu.vector_store %arg3[%c7_238, %c0_239, %c0_240], %598 {strides = array<i32>} : memref<8x8x256xf32, #tpu.memory_space<vmem>>, vector<1x8x128xf32>,
    %c0_241 = arith.constant 0 : index
    %c0_242 = arith.constant 0 : index
    %c128_243 = arith.constant 128 : index
    %599 = vector.load %arg3[%c0_241, %c0_242, %c128_243] : memref<8x8x256xf32, #tpu.memory_space<vmem>>, vector<1x8x128xf32>
    %600 = vector.shape_cast %599 : vector<1x8x128xf32> to vector<8x128xf32>
    %601 = vector.shape_cast %595 : vector<8x128xf32> to vector<1x8x128xf32>
    tpu.vector_store %arg3[%c0_241, %c0_242, %c128_243], %601 {strides = array<i32>} : memref<8x8x256xf32, #tpu.memory_space<vmem>>, vector<1x8x128xf32>,
    %c0_244 = arith.constant 0 : index
    %c0_245 = arith.constant 0 : index
    %c0_246 = arith.constant 0 : index
    %602 = vector.load %arg4[%c0_244, %c0_245, %c0_246] : memref<2x8x128xf32, #tpu.memory_space<vmem>>, vector<1x8x128xf32>
    %603 = vector.shape_cast %602 : vector<1x8x128xf32> to vector<8x128xf32>
    %604 = vector.shape_cast %564 : vector<8x128xf32> to vector<1x8x128xf32>
    tpu.vector_store %arg4[%c0_244, %c0_245, %c0_246], %604 {strides = array<i32>} : memref<2x8x128xf32, #tpu.memory_space<vmem>>, vector<1x8x128xf32>,
    %c1_247 = arith.constant 1 : index
    %c0_248 = arith.constant 0 : index
    %c0_249 = arith.constant 0 : index
    %605 = vector.load %arg4[%c1_247, %c0_248, %c0_249] : memref<2x8x128xf32, #tpu.memory_space<vmem>>, vector<1x8x128xf32>
    %606 = vector.shape_cast %605 : vector<1x8x128xf32> to vector<8x128xf32>
    %607 = vector.shape_cast %595 : vector<8x128xf32> to vector<1x8x128xf32>
    tpu.vector_store %arg4[%c1_247, %c0_248, %c0_249], %607 {strides = array<i32>} : memref<2x8x128xf32, #tpu.memory_space<vmem>>, vector<1x8x128xf32>,
    return
  }
}

</mosaic_0001>

<llo_original>
// kernel: gru_layer_forward.1
$region0: #{gru_layer_forward.1}
  #allocation0 [shape = 'u32[]', space=smem, size = 0x4, offset = 0x4, fixed_abs, tag = 'smem constant byte address 0x4 - core index']
  #allocation1 [shape = 'u32[144,128]{1,0:T(1,128)}', space=vmem, size = 0x12000, scoped, tag = 'internal scratch']
  %s0 = inlined_call_operand.vmem [shape: f32[2,8,8,384], index: 0, kind: input, shape index: {}]
  %s1 = inlined_call_operand.vmem [shape: f32[2,128,384], index: 1, kind: input, shape index: {}]
  %s2 = inlined_call_operand.vmem [shape: f32[2,8,128], index: 2, kind: input, shape index: {}]
  %s3 = inlined_call_operand.vmem [shape: f32[8,8,256], index: 3, kind: output, shape index: {0}]
  %s4 = inlined_call_operand.vmem [shape: f32[2,8,128], index: 4, kind: output, shape index: {1}]
  %5 = xla_tuple %s3, %s4
  %s6 = sld [smem:[#allocation0]]
  $region30: #{gru_layer_forward.1} parent=0
    _
  %s8 = ssub.s32 1, %s6
  %s9 = scalar_select 0, %s8, %s6
  // Predicated region
  $region2: #{gru_layer_forward.1} parent=0 // pred_check
    _
  $region3: #{gru_layer_forward.1} parent=0 // pred_check_branch
    %11 = sbr.rel (0) target = $region5
  $region4: #{gru_layer_forward.1} parent=0 // pred_region
    _
  $region5: #{gru_layer_forward.1} parent=0 // pred_fallthru
    _
  // Predicated region
  $region6: #{gru_layer_forward.1} parent=0 // pred_check
    _
  $region7: #{gru_layer_forward.1} parent=0 // pred_check_branch
    %13 = sbr.rel (0) target = $region9
  $region8: #{gru_layer_forward.1} parent=0 // pred_region
    _
  $region9: #{gru_layer_forward.1} parent=0 // pred_fallthru
    _
  // Predicated region
  $region10: #{gru_layer_forward.1} parent=0 // pred_check
    _
  $region11: #{gru_layer_forward.1} parent=0 // pred_check_branch
    %15 = sbr.rel (0) target = $region13
  $region12: #{gru_layer_forward.1} parent=0 // pred_region
    _
  $region13: #{gru_layer_forward.1} parent=0 // pred_fallthru
    _
  %v16 = vld [vmem:[%s1] sm:$0xff]
  %v17 = vld [vmem:[%s1 + $0x8] sm:$0xff]
  %v18 = vld [vmem:[%s1 + $0x10] sm:$0xff]
  %v19 = vld [vmem:[%s1 + $0x18] sm:$0xff]
  %v20 = vld [vmem:[%s1 + $0x20] sm:$0xff]
  %v21 = vld [vmem:[%s1 + $0x28] sm:$0xff]
  %v22 = vld [vmem:[%s1 + $0x30] sm:$0xff]
  %v23 = vld [vmem:[%s1 + $0x38] sm:$0xff]
  %v24 = vld [vmem:[%s1 + $0x40] sm:$0xff]
  %v25 = vld [vmem:[%s1 + $0x48] sm:$0xff]
  %v26 = vld [vmem:[%s1 + $0x50] sm:$0xff]
  %v27 = vld [vmem:[%s1 + $0x58] sm:$0xff]
  %v28 = vld [vmem:[%s1 + $0x60] sm:$0xff]
  %v29 = vld [vmem:[%s1 + $0x68] sm:$0xff]
  %v30 = vld [vmem:[%s1 + $0x70] sm:$0xff]
  %v31 = vld [vmem:[%s1 + $0x78] sm:$0xff]
  %v32 = vld [vmem:[%s1 + $0x80] sm:$0xff]
  %v33 = vld [vmem:[%s1 + $0x88] sm:$0xff]
  %v34 = vld [vmem:[%s1 + $0x90] sm:$0xff]
  %v35 = vld [vmem:[%s1 + $0x98] sm:$0xff]
  %v36 = vld [vmem:[%s1 + $0xa0] sm:$0xff]
  %v37 = vld [vmem:[%s1 + $0xa8] sm:$0xff]
  %v38 = vld [vmem:[%s1 + $0xb0] sm:$0xff]
  %v39 = vld [vmem:[%s1 + $0xb8] sm:$0xff]
  %v40 = vld [vmem:[%s1 + $0xc0] sm:$0xff]
  %v41 = vld [vmem:[%s1 + $0xc8] sm:$0xff]
  %v42 = vld [vmem:[%s1 + $0xd0] sm:$0xff]
  %v43 = vld [vmem:[%s1 + $0xd8] sm:$0xff]
  %v44 = vld [vmem:[%s1 + $0xe0] sm:$0xff]
  %v45 = vld [vmem:[%s1 + $0xe8] sm:$0xff]
  %v46 = vld [vmem:[%s1 + $0xf0] sm:$0xff]
  %v47 = vld [vmem:[%s1 + $0xf8] sm:$0xff]
  %v48 = vld [vmem:[%s1 + $0x100] sm:$0xff]
  %v49 = vld [vmem:[%s1 + $0x108] sm:$0xff]
  %v50 = vld [vmem:[%s1 + $0x110] sm:$0xff]
  %v51 = vld [vmem:[%s1 + $0x118] sm:$0xff]
  %v52 = vld [vmem:[%s1 + $0x120] sm:$0xff]
  %v53 = vld [vmem:[%s1 + $0x128] sm:$0xff]
  %v54 = vld [vmem:[%s1 + $0x130] sm:$0xff]
  %v55 = vld [vmem:[%s1 + $0x138] sm:$0xff]
  %v56 = vld [vmem:[%s1 + $0x140] sm:$0xff]
  %v57 = vld [vmem:[%s1 + $0x148] sm:$0xff]
  %v58 = vld [vmem:[%s1 + $0x150] sm:$0xff]
  %v59 = vld [vmem:[%s1 + $0x158] sm:$0xff]
  %v60 = vld [vmem:[%s1 + $0x160] sm:$0xff]
  %v61 = vld [vmem:[%s1 + $0x168] sm:$0xff]
  %v62 = vld [vmem:[%s1 + $0x170] sm:$0xff]
  %v63 = vld [vmem:[%s1 + $0x178] sm:$0xff]
  %s64 = scalar_lea.vmem %s1, 384
  %v65 = vld [vmem:[%s64] sm:$0xff]
  %v66 = vld [vmem:[%s64 + $0x8] sm:$0xff]
  %v67 = vld [vmem:[%s64 + $0x10] sm:$0xff]
  %v68 = vld [vmem:[%s64 + $0x18] sm:$0xff]
  %v69 = vld [vmem:[%s64 + $0x20] sm:$0xff]
  %v70 = vld [vmem:[%s64 + $0x28] sm:$0xff]
  %v71 = vld [vmem:[%s64 + $0x30] sm:$0xff]
  %v72 = vld [vmem:[%s64 + $0x38] sm:$0xff]
  %v73 = vld [vmem:[%s64 + $0x40] sm:$0xff]
  %v74 = vld [vmem:[%s64 + $0x48] sm:$0xff]
  %v75 = vld [vmem:[%s64 + $0x50] sm:$0xff]
  %v76 = vld [vmem:[%s64 + $0x58] sm:$0xff]
  %v77 = vld [vmem:[%s64 + $0x60] sm:$0xff]
  %v78 = vld [vmem:[%s64 + $0x68] sm:$0xff]
  %v79 = vld [vmem:[%s64 + $0x70] sm:$0xff]
  %v80 = vld [vmem:[%s64 + $0x78] sm:$0xff]
  %v81 = vld [vmem:[%s64 + $0x80] sm:$0xff]
  %v82 = vld [vmem:[%s64 + $0x88] sm:$0xff]
  %v83 = vld [vmem:[%s64 + $0x90] sm:$0xff]
  %v84 = vld [vmem:[%s64 + $0x98] sm:$0xff]
  %v85 = vld [vmem:[%s64 + $0xa0] sm:$0xff]
  %v86 = vld [vmem:[%s64 + $0xa8] sm:$0xff]
  %v87 = vld [vmem:[%s64 + $0xb0] sm:$0xff]
  %v88 = vld [vmem:[%s64 + $0xb8] sm:$0xff]
  %v89 = vld [vmem:[%s64 + $0xc0] sm:$0xff]
  %v90 = vld [vmem:[%s64 + $0xc8] sm:$0xff]
  %v91 = vld [vmem:[%s64 + $0xd0] sm:$0xff]
  %v92 = vld [vmem:[%s64 + $0xd8] sm:$0xff]
  %v93 = vld [vmem:[%s64 + $0xe0] sm:$0xff]
  %v94 = vld [vmem:[%s64 + $0xe8] sm:$0xff]
  %v95 = vld [vmem:[%s64 + $0xf0] sm:$0xff]
  %v96 = vld [vmem:[%s64 + $0xf8] sm:$0xff]
  %v97 = vld [vmem:[%s64 + $0x100] sm:$0xff]
  %v98 = vld [vmem:[%s64 + $0x108] sm:$0xff]
  %v99 = vld [vmem:[%s64 + $0x110] sm:$0xff]
  %v100 = vld [vmem:[%s64 + $0x118] sm:$0xff]
  %v101 = vld [vmem:[%s64 + $0x120] sm:$0xff]
  %v102 = vld [vmem:[%s64 + $0x128] sm:$0xff]
  %v103 = vld [vmem:[%s64 + $0x130] sm:$0xff]
  %v104 = vld [vmem:[%s64 + $0x138] sm:$0xff]
  %v105 = vld [vmem:[%s64 + $0x140] sm:$0xff]
  %v106 = vld [vmem:[%s64 + $0x148] sm:$0xff]
  %v107 = vld [vmem:[%s64 + $0x150] sm:$0xff]
  %v108 = vld [vmem:[%s64 + $0x158] sm:$0xff]
  %v109 = vld [vmem:[%s64 + $0x160] sm:$0xff]
  %v110 = vld [vmem:[%s64 + $0x168] sm:$0xff]
  %v111 = vld [vmem:[%s64 + $0x170] sm:$0xff]
  %v112 = vld [vmem:[%s64 + $0x178] sm:$0xff]
  %v113 = vld [vmem:[%s2] sm:$0xff]
  %s114 = scalar_lea.vmem %s2, 8
  %v115 = vld [vmem:[%s114] sm:$0xff]
  %v116 = vld [vmem:[%s0] sm:$0xff]
  %v117 = vld [vmem:[%s0 + $0x8] sm:$0xff]
  %v118 = vld [vmem:[%s0 + $0x10] sm:$0xff]
  %s119 = scalar_lea.vmem %s0, 360
  %v120 = vld [vmem:[%s119] sm:$0xff]
  %v121 = vld [vmem:[%s119 + $0x8] sm:$0xff]
  %v122 = vld [vmem:[%s119 + $0x10] sm:$0xff]
  %123 = vmatprep.subr.mxu0 %v62
  %124 = vmatpush1.msra.mxu0 %v61
  %125 = vmatprep.subr.mxu0 %v59
  %126 = vmatpush1.msra.mxu0 %v58
  %127 = vmatprep.subr.mxu0 %v56
  %128 = vmatpush1.msra.mxu0 %v55
  %129 = vmatprep.subr.mxu0 %v53
  %130 = vmatpush1.msra.mxu0 %v52
  %131 = vmatprep.subr.mxu0 %v50
  %132 = vmatpush1.msra.mxu0 %v49
  %133 = vmatprep.subr.mxu0 %v47
  %134 = vmatpush1.msra.mxu0 %v46
  %135 = vmatprep.subr.mxu0 %v44
  %136 = vmatpush1.msra.mxu0 %v43
  %137 = vmatprep.subr.mxu0 %v41
  %138 = vmatpush1.msra.mxu0 %v40
  %139 = vmatprep.subr.mxu0 %v38
  %140 = vmatpush1.msra.mxu0 %v37
  %141 = vmatprep.subr.mxu0 %v35
  %142 = vmatpush1.msra.mxu0 %v34
  %143 = vmatprep.subr.mxu0 %v32
  %144 = vmatpush1.msra.mxu0 %v31
  %145 = vmatprep.subr.mxu0 %v29
  %146 = vmatpush1.msra.mxu0 %v28
  %147 = vmatprep.subr.mxu0 %v26
  %148 = vmatpush1.msra.mxu0 %v25
  %149 = vmatprep.subr.mxu0 %v23
  %150 = vmatpush1.msra.mxu0 %v22
  %151 = vmatprep.subr.mxu0 %v20
  %152 = vmatpush1.msra.mxu0 %v19
  %153 = vmatprep.subr.mxu0 %v17
  %154 = vmatpush1.msra.mxu0 %v16
  %155 = vmatprep.subr.mxu0 0.0
  %156 = vmatpush2.msra.mxu0 0.0
  %157 = vmatprep.subr.mxu0 0.0
  %158 = vmatpush2.msra.mxu0 0.0
  %159 = vmatprep.subr.mxu0 0.0
  %160 = vmatpush2.msra.mxu0 0.0
  %161 = vmatprep.subr.mxu0 0.0
  %162 = vmatpush2.msra.mxu0 0.0
  %163 = vmatprep.subr.mxu0 0.0
  %164 = vmatpush2.msra.mxu0 0.0
  %165 = vmatprep.subr.mxu0 0.0
  %166 = vmatpush2.msra.mxu0 0.0
  %167 = vmatprep.subr.mxu0 0.0
  %168 = vmatpush2.msra.mxu0 0.0
  %169 = vmatprep.subr.mxu0 0.0
  %170 = vmatpush2.msra.mxu0 0.0
  %171 = vmatprep.subr.mxu0 0.0
  %172 = vmatpush2.msra.mxu0 0.0
  %173 = vmatprep.subr.mxu0 0.0
  %174 = vmatpush2.msra.mxu0 0.0
  %175 = vmatprep.subr.mxu0 0.0
  %176 = vmatpush2.msra.mxu0 0.0
  %177 = vmatprep.subr.mxu0 0.0
  %178 = vmatpush2.msra.mxu0 0.0
  %179 = vmatprep.subr.mxu0 0.0
  %180 = vmatpush2.msra.mxu0 0.0
  %181 = vmatprep.subr.mxu0 0.0
  %182 = vmatpush2.msra.mxu0 0.0
  %183 = vmatprep.subr.mxu0 0.0
  %184 = vmatpush2.msra.mxu0 0.0
  %185 = vmatprep.subr.mxu0 0.0
  %186 = vmatpush2.msra.mxu0 0.0
  %187 = vmatprep.mubr.f32.mxu0 0.0
  %188 = vmatmul.mubr.f32.gmra.mxu0 0.0
  %v189 = vpop.f32.mrf.mxu0
  %v190 = vadd.f32 0.0, %v189
  %v191 = vpop.f32.mrf.mxu0
  %v192 = vadd.f32 0.0, %v191
  %193 = vdwg.mxu0
  %194 = vmatprep.subr.mxu0 0.0
  %195 = vmatpush1.msra.mxu0 %v63
  %196 = vmatprep.subr.mxu0 0.0
  %197 = vmatpush1.msra.mxu0 %v60
  %198 = vmatprep.subr.mxu0 0.0
  %199 = vmatpush1.msra.mxu0 %v57
  %200 = vmatprep.subr.mxu0 0.0
  %201 = vmatpush1.msra.mxu0 %v54
  %202 = vmatprep.subr.mxu0 0.0
  %203 = vmatpush1.msra.mxu0 %v51
  %204 = vmatprep.subr.mxu0 0.0
  %205 = vmatpush1.msra.mxu0 %v48
  %206 = vmatprep.subr.mxu0 0.0
  %207 = vmatpush1.msra.mxu0 %v45
  %208 = vmatprep.subr.mxu0 0.0
  %209 = vmatpush1.msra.mxu0 %v42
  %210 = vmatprep.subr.mxu0 0.0
  %211 = vmatpush1.msra.mxu0 %v39
  %212 = vmatprep.subr.mxu0 0.0
  %213 = vmatpush1.msra.mxu0 %v36
  %214 = vmatprep.subr.mxu0 0.0
  %215 = vmatpush1.msra.mxu0 %v33
  %216 = vmatprep.subr.mxu0 0.0
  %217 = vmatpush1.msra.mxu0 %v30
  %218 = vmatprep.subr.mxu0 0.0
  %219 = vmatpush1.msra.mxu0 %v27
  %220 = vmatprep.subr.mxu0 0.0
  %221 = vmatpush1.msra.mxu0 %v24
  %222 = vmatprep.subr.mxu0 0.0
  %223 = vmatpush1.msra.mxu0 %v21
  %224 = vmatprep.subr.mxu0 0.0
  %225 = vmatpush1.msra.mxu0 %v18
  %226 = vmatprep.subr.mxu0 0.0
  %227 = vmatpush2.msra.mxu0 0.0
  %228 = vmatprep.subr.mxu0 0.0
  %229 = vmatpush2.msra.mxu0 0.0
  %230 = vmatprep.subr.mxu0 0.0
  %231 = vmatpush2.msra.mxu0 0.0
  %232 = vmatprep.subr.mxu0 0.0
  %233 = vmatpush2.msra.mxu0 0.0
  %234 = vmatprep.subr.mxu0 0.0
  %235 = vmatpush2.msra.mxu0 0.0
  %236 = vmatprep.subr.mxu0 0.0
  %237 = vmatpush2.msra.mxu0 0.0
  %238 = vmatprep.subr.mxu0 0.0
  %239 = vmatpush2.msra.mxu0 0.0
  %240 = vmatprep.subr.mxu0 0.0
  %241 = vmatpush2.msra.mxu0 0.0
  %242 = vmatprep.subr.mxu0 0.0
  %243 = vmatpush2.msra.mxu0 0.0
  %244 = vmatprep.subr.mxu0 0.0
  %245 = vmatpush2.msra.mxu0 0.0
  %246 = vmatprep.subr.mxu0 0.0
  %247 = vmatpush2.msra.mxu0 0.0
  %248 = vmatprep.subr.mxu0 0.0
  %249 = vmatpush2.msra.mxu0 0.0
  %250 = vmatprep.subr.mxu0 0.0
  %251 = vmatpush2.msra.mxu0 0.0
  %252 = vmatprep.subr.mxu0 0.0
  %253 = vmatpush2.msra.mxu0 0.0
  %254 = vmatprep.subr.mxu0 0.0
  %255 = vmatpush2.msra.mxu0 0.0
  %256 = vmatprep.subr.mxu0 0.0
  %257 = vmatpush2.msra.mxu0 0.0
  %258 = vmatprep.mubr.f32.mxu0 0.0
  %259 = vmatmul.mubr.f32.gmra.mxu0 0.0
  %v260 = vpop.f32.mrf.mxu0
  %v261 = vadd.f32 0.0, %v260
  %v262 = vpop.f32.mrf.mxu0
  %263 = vdwg.mxu0
  %264 = vmatprep.subr.mxu0 %v111
  %265 = vmatpush1.msra.mxu0 %v110
  %266 = vmatprep.subr.mxu0 %v108
  %267 = vmatpush1.msra.mxu0 %v107
  %268 = vmatprep.subr.mxu0 %v105
  %269 = vmatpush1.msra.mxu0 %v104
  %270 = vmatprep.subr.mxu0 %v102
  %271 = vmatpush1.msra.mxu0 %v101
  %272 = vmatprep.subr.mxu0 %v99
  %273 = vmatpush1.msra.mxu0 %v98
  %274 = vmatprep.subr.mxu0 %v96
  %275 = vmatpush1.msra.mxu0 %v95
  %276 = vmatprep.subr.mxu0 %v93
  %277 = vmatpush1.msra.mxu0 %v92
  %278 = vmatprep.subr.mxu0 %v90
  %279 = vmatpush1.msra.mxu0 %v89
  %280 = vmatprep.subr.mxu0 %v87
  %281 = vmatpush1.msra.mxu0 %v86
  %282 = vmatprep.subr.mxu0 %v84
  %283 = vmatpush1.msra.mxu0 %v83
  %284 = vmatprep.subr.mxu0 %v81
  %285 = vmatpush1.msra.mxu0 %v80
  %286 = vmatprep.subr.mxu0 %v78
  %287 = vmatpush1.msra.mxu0 %v77
  %288 = vmatprep.subr.mxu0 %v75
  %289 = vmatpush1.msra.mxu0 %v74
  %290 = vmatprep.subr.mxu0 %v72
  %291 = vmatpush1.msra.mxu0 %v71
  %292 = vmatprep.subr.mxu0 %v69
  %293 = vmatpush1.msra.mxu0 %v68
  %294 = vmatprep.subr.mxu0 %v66
  %295 = vmatpush1.msra.mxu0 %v65
  %296 = vmatprep.subr.mxu0 0.0
  %297 = vmatpush2.msra.mxu0 0.0
  %298 = vmatprep.subr.mxu0 0.0
  %299 = vmatpush2.msra.mxu0 0.0
  %300 = vmatprep.subr.mxu0 0.0
  %301 = vmatpush2.msra.mxu0 0.0
  %302 = vmatprep.subr.mxu0 0.0
  %303 = vmatpush2.msra.mxu0 0.0
  %304 = vmatprep.subr.mxu0 0.0
  %305 = vmatpush2.msra.mxu0 0.0
  %306 = vmatprep.subr.mxu0 0.0
  %307 = vmatpush2.msra.mxu0 0.0
  %308 = vmatprep.subr.mxu0 0.0
  %309 = vmatpush2.msra.mxu0 0.0
  %310 = vmatprep.subr.mxu0 0.0
  %311 = vmatpush2.msra.mxu0 0.0
  %312 = vmatprep.subr.mxu0 0.0
  %313 = vmatpush2.msra.mxu0 0.0
  %314 = vmatprep.subr.mxu0 0.0
  %315 = vmatpush2.msra.mxu0 0.0
  %316 = vmatprep.subr.mxu0 0.0
  %317 = vmatpush2.msra.mxu0 0.0
  %318 = vmatprep.subr.mxu0 0.0
  %319 = vmatpush2.msra.mxu0 0.0
  %320 = vmatprep.subr.mxu0 0.0
  %321 = vmatpush2.msra.mxu0 0.0
  %322 = vmatprep.subr.mxu0 0.0
  %323 = vmatpush2.msra.mxu0 0.0
  %324 = vmatprep.subr.mxu0 0.0
  %325 = vmatpush2.msra.mxu0 0.0
  %326 = vmatprep.subr.mxu0 0.0
  %327 = vmatpush2.msra.mxu0 0.0
  %328 = vmatprep.mubr.f32.mxu0 0.0
  %329 = vmatmul.mubr.f32.gmra.mxu0 0.0
  %v330 = vpop.f32.mrf.mxu0
  %v331 = vadd.f32 0.0, %v330
  %v332 = vpop.f32.mrf.mxu0
  %v333 = vadd.f32 0.0, %v332
  %334 = vdwg.mxu0
  %335 = vmatprep.subr.mxu0 0.0
  %336 = vmatpush1.msra.mxu0 %v112
  %337 = vmatprep.subr.mxu0 0.0
  %338 = vmatpush1.msra.mxu0 %v109
  %339 = vmatprep.subr.mxu0 0.0
  %340 = vmatpush1.msra.mxu0 %v106
  %341 = vmatprep.subr.mxu0 0.0
  %342 = vmatpush1.msra.mxu0 %v103
  %343 = vmatprep.subr.mxu0 0.0
  %344 = vmatpush1.msra.mxu0 %v100
  %345 = vmatprep.subr.mxu0 0.0
  %346 = vmatpush1.msra.mxu0 %v97
  %347 = vmatprep.subr.mxu0 0.0
  %348 = vmatpush1.msra.mxu0 %v94
  %349 = vmatprep.subr.mxu0 0.0
  %350 = vmatpush1.msra.mxu0 %v91
  %351 = vmatprep.subr.mxu0 0.0
  %352 = vmatpush1.msra.mxu0 %v88
  %353 = vmatprep.subr.mxu0 0.0
  %354 = vmatpush1.msra.mxu0 %v85
  %355 = vmatprep.subr.mxu0 0.0
  %356 = vmatpush1.msra.mxu0 %v82
  %357 = vmatprep.subr.mxu0 0.0
  %358 = vmatpush1.msra.mxu0 %v79
  %359 = vmatprep.subr.mxu0 0.0
  %360 = vmatpush1.msra.mxu0 %v76
  %361 = vmatprep.subr.mxu0 0.0
  %362 = vmatpush1.msra.mxu0 %v73
  %363 = vmatprep.subr.mxu0 0.0
  %364 = vmatpush1.msra.mxu0 %v70
  %365 = vmatprep.subr.mxu0 0.0
  %366 = vmatpush1.msra.mxu0 %v67
  %367 = vmatprep.subr.mxu0 0.0
  %368 = vmatpush2.msra.mxu0 0.0
  %369 = vmatprep.subr.mxu0 0.0
  %370 = vmatpush2.msra.mxu0 0.0
  %371 = vmatprep.subr.mxu0 0.0
  %372 = vmatpush2.msra.mxu0 0.0
  %373 = vmatprep.subr.mxu0 0.0
  %374 = vmatpush2.msra.mxu0 0.0
  %375 = vmatprep.subr.mxu0 0.0
  %376 = vmatpush2.msra.mxu0 0.0
  %377 = vmatprep.subr.mxu0 0.0
  %378 = vmatpush2.msra.mxu0 0.0
  %379 = vmatprep.subr.mxu0 0.0
  %380 = vmatpush2.msra.mxu0 0.0
  %381 = vmatprep.subr.mxu0 0.0
  %382 = vmatpush2.msra.mxu0 0.0
  %383 = vmatprep.subr.mxu0 0.0
  %384 = vmatpush2.msra.mxu0 0.0
  %385 = vmatprep.subr.mxu0 0.0
  %386 = vmatpush2.msra.mxu0 0.0
  %387 = vmatprep.subr.mxu0 0.0
  %388 = vmatpush2.msra.mxu0 0.0
  %389 = vmatprep.subr.mxu0 0.0
  %390 = vmatpush2.msra.mxu0 0.0
  %391 = vmatprep.subr.mxu0 0.0
  %392 = vmatpush2.msra.mxu0 0.0
  %393 = vmatprep.subr.mxu0 0.0
  %394 = vmatpush2.msra.mxu0 0.0
  %395 = vmatprep.subr.mxu0 0.0
  %396 = vmatpush2.msra.mxu0 0.0
  %397 = vmatprep.subr.mxu0 0.0
  %398 = vmatpush2.msra.mxu0 0.0
  %399 = vmatprep.mubr.f32.mxu0 0.0
  %400 = vmatmul.mubr.f32.gmra.mxu0 0.0
  %v401 = vpop.f32.mrf.mxu0
  %v402 = vadd.f32 0.0, %v401
  %v403 = vpop.f32.mrf.mxu0
  %404 = vdwg.mxu0
  %v405 = vadd.f32 %v116, %v190
  %v406 = vmul.f32 %v405, 0.5
  %v407 = vtanh.pop %v406
  %v408 = vmul.f32 %v407, 0.5
  %v409 = vadd.f32 %v408, 0.5
  %v410 = vadd.f32 %v117, %v192
  %v411 = vmul.f32 %v410, 0.5
  %v412 = vtanh.pop %v411
  %v413 = vmul.f32 %v412, 0.5
  %v414 = vadd.f32 %v413, 0.5
  %v415 = vadd.f32 %v261, %v113
  %v416 = vmul.f32 %v409, %v415
  %v417 = vadd.f32 %v118, %v416
  %v418 = vtanh.pop %v417
  %v419 = vsub.f32 1.0, %v414
  %v420 = vmul.f32 %v419, %v418
  %v421 = vmul.f32 %v414, 0.0
  %v422 = vadd.f32 %v420, %v421
  %v423 = vadd.f32 %v120, %v331
  %v424 = vmul.f32 %v423, 0.5
  %v425 = vtanh.pop %v424
  %v426 = vmul.f32 %v425, 0.5
  %v427 = vadd.f32 %v426, 0.5
  %v428 = vadd.f32 %v121, %v333
  %v429 = vmul.f32 %v428, 0.5
  %v430 = vtanh.pop %v429
  %v431 = vmul.f32 %v430, 0.5
  %v432 = vadd.f32 %v431, 0.5
  %v433 = vadd.f32 %v402, %v115
  %v434 = vmul.f32 %v427, %v433
  %v435 = vadd.f32 %v122, %v434
  %v436 = vtanh.pop %v435
  %v437 = vsub.f32 1.0, %v432
  %v438 = vmul.f32 %v437, %v436
  %v439 = vmul.f32 %v432, 0.0
  %v440 = vadd.f32 %v438, %v439
  %441 = vst [vmem:[%s3] sm:$0xff] %v422
  %s442 = scalar_lea.vmem %s3, 112
  %443 = vst [vmem:[%s442 + $0x8] sm:$0xff] %v440
  %s444 = scalar_lea.vmem %s0, 24
  %v445 = vld [vmem:[%s444] sm:$0xff]
  %v446 = vld [vmem:[%s444 + $0x8] sm:$0xff]
  %v447 = vld [vmem:[%s444 + $0x10] sm:$0xff]
  %s448 = scalar_lea.vmem %s0, 336
  %v449 = vld [vmem:[%s448] sm:$0xff]
  %v450 = vld [vmem:[%s448 + $0x8] sm:$0xff]
  %v451 = vld [vmem:[%s448 + $0x10] sm:$0xff]
  %452 = vmatprep.subr.mxu0 %v62
  %453 = vmatpush1.msra.mxu0 %v61
  %454 = vmatprep.subr.mxu0 %v59
  %455 = vmatpush1.msra.mxu0 %v58
  %456 = vmatprep.subr.mxu0 %v56
  %457 = vmatpush1.msra.mxu0 %v55
  %458 = vmatprep.subr.mxu0 %v53
  %459 = vmatpush1.msra.mxu0 %v52
  %460 = vmatprep.subr.mxu0 %v50
  %461 = vmatpush1.msra.mxu0 %v49
  %462 = vmatprep.subr.mxu0 %v47
  %463 = vmatpush1.msra.mxu0 %v46
  %464 = vmatprep.subr.mxu0 %v44
  %465 = vmatpush1.msra.mxu0 %v43
  %466 = vmatprep.subr.mxu0 %v41
  %467 = vmatpush1.msra.mxu0 %v40
  %468 = vmatprep.subr.mxu0 %v38
  %469 = vmatpush1.msra.mxu0 %v37
  %470 = vmatprep.subr.mxu0 %v35
  %471 = vmatpush1.msra.mxu0 %v34
  %472 = vmatprep.subr.mxu0 %v32
  %473 = vmatpush1.msra.mxu0 %v31
  %474 = vmatprep.subr.mxu0 %v29
  %475 = vmatpush1.msra.mxu0 %v28
  %476 = vmatprep.subr.mxu0 %v26
  %477 = vmatpush1.msra.mxu0 %v25
  %478 = vmatprep.subr.mxu0 %v23
  %479 = vmatpush1.msra.mxu0 %v22
  %480 = vmatprep.subr.mxu0 %v20
  %481 = vmatpush1.msra.mxu0 %v19
  %482 = vmatprep.subr.mxu0 %v17
  %483 = vmatpush1.msra.mxu0 %v16
  %484 = vmatprep.subr.mxu0 0.0
  %485 = vmatpush2.msra.mxu0 0.0
  %486 = vmatprep.subr.mxu0 0.0
  %487 = vmatpush2.msra.mxu0 0.0
  %488 = vmatprep.subr.mxu0 0.0
  %489 = vmatpush2.msra.mxu0 0.0
  %490 = vmatprep.subr.mxu0 0.0
  %491 = vmatpush2.msra.mxu0 0.0
  %492 = vmatprep.subr.mxu0 0.0
  %493 = vmatpush2.msra.mxu0 0.0
  %494 = vmatprep.subr.mxu0 0.0
  %495 = vmatpush2.msra.mxu0 0.0
  %496 = vmatprep.subr.mxu0 0.0
  %497 = vmatpush2.msra.mxu0 0.0
  %498 = vmatprep.subr.mxu0 0.0
  %499 = vmatpush2.msra.mxu0 0.0
  %500 = vmatprep.subr.mxu0 0.0
  %501 = vmatpush2.msra.mxu0 0.0
  %502 = vmatprep.subr.mxu0 0.0
  %503 = vmatpush2.msra.mxu0 0.0
  %504 = vmatprep.subr.mxu0 0.0
  %505 = vmatpush2.msra.mxu0 0.0
  %506 = vmatprep.subr.mxu0 0.0
  %507 = vmatpush2.msra.mxu0 0.0
  %508 = vmatprep.subr.mxu0 0.0
  %509 = vmatpush2.msra.mxu0 0.0
  %510 = vmatprep.subr.mxu0 0.0
  %511 = vmatpush2.msra.mxu0 0.0
  %512 = vmatprep.subr.mxu0 0.0
  %513 = vmatpush2.msra.mxu0 0.0
  %514 = vmatprep.subr.mxu0 0.0
  %515 = vmatpush2.msra.mxu0 0.0
  %516 = vmatprep.mubr.f32.mxu0 0.0
  %517 = vmatmul.mubr.f32.gmra.mxu0 %v422
  %v518 = vpop.f32.mrf.mxu0
  %v519 = vadd.f32 0.0, %v518
  %v520 = vpop.f32.mrf.mxu0
  %v521 = vadd.f32 0.0, %v520
  %522 = vdwg.mxu0
  %523 = vmatprep.subr.mxu0 0.0
  %524 = vmatpush1.msra.mxu0 %v63
  %525 = vmatprep.subr.mxu0 0.0
  %526 = vmatpush1.msra.mxu0 %v60
  %527 = vmatprep.subr.mxu0 0.0
  %528 = vmatpush1.msra.mxu0 %v57
  %529 = vmatprep.subr.mxu0 0.0
  %530 = vmatpush1.msra.mxu0 %v54
  %531 = vmatprep.subr.mxu0 0.0
  %532 = vmatpush1.msra.mxu0 %v51
  %533 = vmatprep.subr.mxu0 0.0
  %534 = vmatpush1.msra.mxu0 %v48
  %535 = vmatprep.subr.mxu0 0.0
  %536 = vmatpush1.msra.mxu0 %v45
  %537 = vmatprep.subr.mxu0 0.0
  %538 = vmatpush1.msra.mxu0 %v42
  %539 = vmatprep.subr.mxu0 0.0
  %540 = vmatpush1.msra.mxu0 %v39
  %541 = vmatprep.subr.mxu0 0.0
  %542 = vmatpush1.msra.mxu0 %v36
  %543 = vmatprep.subr.mxu0 0.0
  %544 = vmatpush1.msra.mxu0 %v33
  %545 = vmatprep.subr.mxu0 0.0
  %546 = vmatpush1.msra.mxu0 %v30
  %547 = vmatprep.subr.mxu0 0.0
  %548 = vmatpush1.msra.mxu0 %v27
  %549 = vmatprep.subr.mxu0 0.0
  %550 = vmatpush1.msra.mxu0 %v24
  %551 = vmatprep.subr.mxu0 0.0
  %552 = vmatpush1.msra.mxu0 %v21
  %553 = vmatprep.subr.mxu0 0.0
  %554 = vmatpush1.msra.mxu0 %v18
  %555 = vmatprep.subr.mxu0 0.0
  %556 = vmatpush2.msra.mxu0 0.0
  %557 = vmatprep.subr.mxu0 0.0
  %558 = vmatpush2.msra.mxu0 0.0
  %559 = vmatprep.subr.mxu0 0.0
  %560 = vmatpush2.msra.mxu0 0.0
  %561 = vmatprep.subr.mxu0 0.0
  %562 = vmatpush2.msra.mxu0 0.0
  %563 = vmatprep.subr.mxu0 0.0
  %564 = vmatpush2.msra.mxu0 0.0
  %565 = vmatprep.subr.mxu0 0.0
  %566 = vmatpush2.msra.mxu0 0.0
  %567 = vmatprep.subr.mxu0 0.0
  %568 = vmatpush2.msra.mxu0 0.0
  %569 = vmatprep.subr.mxu0 0.0
  %570 = vmatpush2.msra.mxu0 0.0
  %571 = vmatprep.subr.mxu0 0.0
  %572 = vmatpush2.msra.mxu0 0.0
  %573 = vmatprep.subr.mxu0 0.0
  %574 = vmatpush2.msra.mxu0 0.0
  %575 = vmatprep.subr.mxu0 0.0
  %576 = vmatpush2.msra.mxu0 0.0
  %577 = vmatprep.subr.mxu0 0.0
  %578 = vmatpush2.msra.mxu0 0.0
  %579 = vmatprep.subr.mxu0 0.0
  %580 = vmatpush2.msra.mxu0 0.0
  %581 = vmatprep.subr.mxu0 0.0
  %582 = vmatpush2.msra.mxu0 0.0
  %583 = vmatprep.subr.mxu0 0.0
  %584 = vmatpush2.msra.mxu0 0.0
  %585 = vmatprep.subr.mxu0 0.0
  %586 = vmatpush2.msra.mxu0 0.0
  %587 = vmatprep.mubr.f32.mxu0 0.0
  %588 = vmatmul.mubr.f32.gmra.mxu0 %v422
  %v589 = vpop.f32.mrf.mxu0
  %v590 = vadd.f32 0.0, %v589
  %v591 = vpop.f32.mrf.mxu0
  %592 = vdwg.mxu0
  %593 = vmatprep.subr.mxu0 %v111
  %594 = vmatpush1.msra.mxu0 %v110
  %595 = vmatprep.subr.mxu0 %v108
  %596 = vmatpush1.msra.mxu0 %v107
  %597 = vmatprep.subr.mxu0 %v105
  %598 = vmatpush1.msra.mxu0 %v104
  %599 = vmatprep.subr.mxu0 %v102
  %600 = vmatpush1.msra.mxu0 %v101
  %601 = vmatprep.subr.mxu0 %v99
  %602 = vmatpush1.msra.mxu0 %v98
  %603 = vmatprep.subr.mxu0 %v96
  %604 = vmatpush1.msra.mxu0 %v95
  %605 = vmatprep.subr.mxu0 %v93
  %606 = vmatpush1.msra.mxu0 %v92
  %607 = vmatprep.subr.mxu0 %v90
  %608 = vmatpush1.msra.mxu0 %v89
  %609 = vmatprep.subr.mxu0 %v87
  %610 = vmatpush1.msra.mxu0 %v86
  %611 = vmatprep.subr.mxu0 %v84
  %612 = vmatpush1.msra.mxu0 %v83
  %613 = vmatprep.subr.mxu0 %v81
  %614 = vmatpush1.msra.mxu0 %v80
  %615 = vmatprep.subr.mxu0 %v78
  %616 = vmatpush1.msra.mxu0 %v77
  %617 = vmatprep.subr.mxu0 %v75
  %618 = vmatpush1.msra.mxu0 %v74
  %619 = vmatprep.subr.mxu0 %v72
  %620 = vmatpush1.msra.mxu0 %v71
  %621 = vmatprep.subr.mxu0 %v69
  %622 = vmatpush1.msra.mxu0 %v68
  %623 = vmatprep.subr.mxu0 %v66
  %624 = vmatpush1.msra.mxu0 %v65
  %625 = vmatprep.subr.mxu0 0.0
  %626 = vmatpush2.msra.mxu0 0.0
  %627 = vmatprep.subr.mxu0 0.0
  %628 = vmatpush2.msra.mxu0 0.0
  %629 = vmatprep.subr.mxu0 0.0
  %630 = vmatpush2.msra.mxu0 0.0
  %631 = vmatprep.subr.mxu0 0.0
  %632 = vmatpush2.msra.mxu0 0.0
  %633 = vmatprep.subr.mxu0 0.0
  %634 = vmatpush2.msra.mxu0 0.0
  %635 = vmatprep.subr.mxu0 0.0
  %636 = vmatpush2.msra.mxu0 0.0
  %637 = vmatprep.subr.mxu0 0.0
  %638 = vmatpush2.msra.mxu0 0.0
  %639 = vmatprep.subr.mxu0 0.0
  %640 = vmatpush2.msra.mxu0 0.0
  %641 = vmatprep.subr.mxu0 0.0
  %642 = vmatpush2.msra.mxu0 0.0
  %643 = vmatprep.subr.mxu0 0.0
  %644 = vmatpush2.msra.mxu0 0.0
  %645 = vmatprep.subr.mxu0 0.0
  %646 = vmatpush2.msra.mxu0 0.0
  %647 = vmatprep.subr.mxu0 0.0
  %648 = vmatpush2.msra.mxu0 0.0
  %649 = vmatprep.subr.mxu0 0.0
  %650 = vmatpush2.msra.mxu0 0.0
  %651 = vmatprep.subr.mxu0 0.0
  %652 = vmatpush2.msra.mxu0 0.0
  %653 = vmatprep.subr.mxu0 0.0
  %654 = vmatpush2.msra.mxu0 0.0
  %655 = vmatprep.subr.mxu0 0.0
  %656 = vmatpush2.msra.mxu0 0.0
  %657 = vmatprep.mubr.f32.mxu0 0.0
  %658 = vmatmul.mubr.f32.gmra.mxu0 %v440
  %v659 = vpop.f32.mrf.mxu0
  %v660 = vadd.f32 0.0, %v659
  %v661 = vpop.f32.mrf.mxu0
  %v662 = vadd.f32 0.0, %v661
  %663 = vdwg.mxu0
  %664 = vmatprep.subr.mxu0 0.0
  %665 = vmatpush1.msra.mxu0 %v112
  %666 = vmatprep.subr.mxu0 0.0
  %667 = vmatpush1.msra.mxu0 %v109
  %668 = vmatprep.subr.mxu0 0.0
  %669 = vmatpush1.msra.mxu0 %v106
  %670 = vmatprep.subr.mxu0 0.0
  %671 = vmatpush1.msra.mxu0 %v103
  %672 = vmatprep.subr.mxu0 0.0
  %673 = vmatpush1.msra.mxu0 %v100
  %674 = vmatprep.subr.mxu0 0.0
  %675 = vmatpush1.msra.mxu0 %v97
  %676 = vmatprep.subr.mxu0 0.0
  %677 = vmatpush1.msra.mxu0 %v94
  %678 = vmatprep.subr.mxu0 0.0
  %679 = vmatpush1.msra.mxu0 %v91
  %680 = vmatprep.subr.mxu0 0.0
  %681 = vmatpush1.msra.mxu0 %v88
  %682 = vmatprep.subr.mxu0 0.0
  %683 = vmatpush1.msra.mxu0 %v85
  %684 = vmatprep.subr.mxu0 0.0
  %685 = vmatpush1.msra.mxu0 %v82
  %686 = vmatprep.subr.mxu0 0.0
  %687 = vmatpush1.msra.mxu0 %v79
  %688 = vmatprep.subr.mxu0 0.0
  %689 = vmatpush1.msra.mxu0 %v76
  %690 = vmatprep.subr.mxu0 0.0
  %691 = vmatpush1.msra.mxu0 %v73
  %692 = vmatprep.subr.mxu0 0.0
  %693 = vmatpush1.msra.mxu0 %v70
  %694 = vmatprep.subr.mxu0 0.0
  %695 = vmatpush1.msra.mxu0 %v67
  %696 = vmatprep.subr.mxu0 0.0
  %697 = vmatpush2.msra.mxu0 0.0
  %698 = vmatprep.subr.mxu0 0.0
  %699 = vmatpush2.msra.mxu0 0.0
  %700 = vmatprep.subr.mxu0 0.0
  %701 = vmatpush2.msra.mxu0 0.0
  %702 = vmatprep.subr.mxu0 0.0
  %703 = vmatpush2.msra.mxu0 0.0
  %704 = vmatprep.subr.mxu0 0.0
  %705 = vmatpush2.msra.mxu0 0.0
  %706 = vmatprep.subr.mxu0 0.0
  %707 = vmatpush2.msra.mxu0 0.0
  %708 = vmatprep.subr.mxu0 0.0
  %709 = vmatpush2.msra.mxu0 0.0
  %710 = vmatprep.subr.mxu0 0.0
  %711 = vmatpush2.msra.mxu0 0.0
  %712 = vmatprep.subr.mxu0 0.0
  %713 = vmatpush2.msra.mxu0 0.0
  %714 = vmatprep.subr.mxu0 0.0
  %715 = vmatpush2.msra.mxu0 0.0
  %716 = vmatprep.subr.mxu0 0.0
  %717 = vmatpush2.msra.mxu0 0.0
  %718 = vmatprep.subr.mxu0 0.0
  %719 = vmatpush2.msra.mxu0 0.0
  %720 = vmatprep.subr.mxu0 0.0
  %721 = vmatpush2.msra.mxu0 0.0
  %722 = vmatprep.subr.mxu0 0.0
  %723 = vmatpush2.msra.mxu0 0.0
  %724 = vmatprep.subr.mxu0 0.0
  %725 = vmatpush2.msra.mxu0 0.0
  %726 = vmatprep.subr.mxu0 0.0
  %727 = vmatpush2.msra.mxu0 0.0
  %728 = vmatprep.mubr.f32.mxu0 0.0
  %729 = vmatmul.mubr.f32.gmra.mxu0 %v440
  %v730 = vpop.f32.mrf.mxu0
  %v731 = vadd.f32 0.0, %v730
  %v732 = vpop.f32.mrf.mxu0
  %733 = vdwg.mxu0
  %v734 = vadd.f32 %v445, %v519
  %v735 = vmul.f32 %v734, 0.5
  %v736 = vtanh.pop %v735
  %v737 = vmul.f32 %v736, 0.5
  %v738 = vadd.f32 %v737, 0.5
  %v739 = vadd.f32 %v446, %v521
  %v740 = vmul.f32 %v739, 0.5
  %v741 = vtanh.pop %v740
  %v742 = vmul.f32 %v741, 0.5
  %v743 = vadd.f32 %v742, 0.5
  %v744 = vadd.f32 %v590, %v113
  %v745 = vmul.f32 %v738, %v744
  %v746 = vadd.f32 %v447, %v745
  %v747 = vtanh.pop %v746
  %v748 = vsub.f32 1.0, %v743
  %v749 = vmul.f32 %v748, %v747
  %v750 = vmul.f32 %v743, %v422
  %v751 = vadd.f32 %v749, %v750
  %v752 = vadd.f32 %v449, %v660
  %v753 = vmul.f32 %v752, 0.5
  %v754 = vtanh.pop %v753
  %v755 = vmul.f32 %v754, 0.5
  %v756 = vadd.f32 %v755, 0.5
  %v757 = vadd.f32 %v450, %v662
  %v758 = vmul.f32 %v757, 0.5
  %v759 = vtanh.pop %v758
  %v760 = vmul.f32 %v759, 0.5
  %v761 = vadd.f32 %v760, 0.5
  %v762 = vadd.f32 %v731, %v115
  %v763 = vmul.f32 %v756, %v762
  %v764 = vadd.f32 %v451, %v763
  %v765 = vtanh.pop %v764
  %v766 = vsub.f32 1.0, %v761
  %v767 = vmul.f32 %v766, %v765
  %v768 = vmul.f32 %v761, %v440
  %v769 = vadd.f32 %v767, %v768
  %s770 = scalar_lea.vmem %s3, 16
  %771 = vst [vmem:[%s770] sm:$0xff] %v751
  %s772 = scalar_lea.vmem %s3, 96
  %773 = vst [vmem:[%s772 + $0x8] sm:$0xff] %v769
  %s774 = scalar_lea.vmem %s0, 48
  %v775 = vld [vmem:[%s774] sm:$0xff]
  %v776 = vld [vmem:[%s774 + $0x8] sm:$0xff]
  %v777 = vld [vmem:[%s774 + $0x10] sm:$0xff]
  %s778 = scalar_lea.vmem %s0, 312
  %v779 = vld [vmem:[%s778] sm:$0xff]
  %v780 = vld [vmem:[%s778 + $0x8] sm:$0xff]
  %v781 = vld [vmem:[%s778 + $0x10] sm:$0xff]
  %782 = vmatprep.subr.mxu0 %v62
  %783 = vmatpush1.msra.mxu0 %v61
  %784 = vmatprep.subr.mxu0 %v59
  %785 = vmatpush1.msra.mxu0 %v58
  %786 = vmatprep.subr.mxu0 %v56
  %787 = vmatpush1.msra.mxu0 %v55
  %788 = vmatprep.subr.mxu0 %v53
  %789 = vmatpush1.msra.mxu0 %v52
  %790 = vmatprep.subr.mxu0 %v50
  %791 = vmatpush1.msra.mxu0 %v49
  %792 = vmatprep.subr.mxu0 %v47
  %793 = vmatpush1.msra.mxu0 %v46
  %794 = vmatprep.subr.mxu0 %v44
  %795 = vmatpush1.msra.mxu0 %v43
  %796 = vmatprep.subr.mxu0 %v41
  %797 = vmatpush1.msra.mxu0 %v40
  %798 = vmatprep.subr.mxu0 %v38
  %799 = vmatpush1.msra.mxu0 %v37
  %800 = vmatprep.subr.mxu0 %v35
  %801 = vmatpush1.msra.mxu0 %v34
  %802 = vmatprep.subr.mxu0 %v32
  %803 = vmatpush1.msra.mxu0 %v31
  %804 = vmatprep.subr.mxu0 %v29
  %805 = vmatpush1.msra.mxu0 %v28
  %806 = vmatprep.subr.mxu0 %v26
  %807 = vmatpush1.msra.mxu0 %v25
  %808 = vmatprep.subr.mxu0 %v23
  %809 = vmatpush1.msra.mxu0 %v22
  %810 = vmatprep.subr.mxu0 %v20
  %811 = vmatpush1.msra.mxu0 %v19
  %812 = vmatprep.subr.mxu0 %v17
  %813 = vmatpush1.msra.mxu0 %v16
  %814 = vmatprep.subr.mxu0 0.0
  %815 = vmatpush2.msra.mxu0 0.0
  %816 = vmatprep.subr.mxu0 0.0
  %817 = vmatpush2.msra.mxu0 0.0
  %818 = vmatprep.subr.mxu0 0.0
  %819 = vmatpush2.msra.mxu0 0.0
  %820 = vmatprep.subr.mxu0 0.0
  %821 = vmatpush2.msra.mxu0 0.0
  %822 = vmatprep.subr.mxu0 0.0
  %823 = vmatpush2.msra.mxu0 0.0
  %824 = vmatprep.subr.mxu0 0.0
  %825 = vmatpush2.msra.mxu0 0.0
  %826 = vmatprep.subr.mxu0 0.0
  %827 = vmatpush2.msra.mxu0 0.0
  %828 = vmatprep.subr.mxu0 0.0
  %829 = vmatpush2.msra.mxu0 0.0
  %830 = vmatprep.subr.mxu0 0.0
  %831 = vmatpush2.msra.mxu0 0.0
  %832 = vmatprep.subr.mxu0 0.0
  %833 = vmatpush2.msra.mxu0 0.0
  %834 = vmatprep.subr.mxu0 0.0
  %835 = vmatpush2.msra.mxu0 0.0
  %836 = vmatprep.subr.mxu0 0.0
  %837 = vmatpush2.msra.mxu0 0.0
  %838 = vmatprep.subr.mxu0 0.0
  %839 = vmatpush2.msra.mxu0 0.0
  %840 = vmatprep.subr.mxu0 0.0
  %841 = vmatpush2.msra.mxu0 0.0
  %842 = vmatprep.subr.mxu0 0.0
  %843 = vmatpush2.msra.mxu0 0.0
  %844 = vmatprep.subr.mxu0 0.0
  %845 = vmatpush2.msra.mxu0 0.0
  %846 = vmatprep.mubr.f32.mxu0 0.0
  %847 = vmatmul.mubr.f32.gmra.mxu0 %v751
  %v848 = vpop.f32.mrf.mxu0
  %v849 = vadd.f32 0.0, %v848
  %v850 = vpop.f32.mrf.mxu0
  %v851 = vadd.f32 0.0, %v850
  %852 = vdwg.mxu0
  %853 = vmatprep.subr.mxu0 0.0
  %854 = vmatpush1.msra.mxu0 %v63
  %855 = vmatprep.subr.mxu0 0.0
  %856 = vmatpush1.msra.mxu0 %v60
  %857 = vmatprep.subr.mxu0 0.0
  %858 = vmatpush1.msra.mxu0 %v57
  %859 = vmatprep.subr.mxu0 0.0
  %860 = vmatpush1.msra.mxu0 %v54
  %861 = vmatprep.subr.mxu0 0.0
  %862 = vmatpush1.msra.mxu0 %v51
  %863 = vmatprep.subr.mxu0 0.0
  %864 = vmatpush1.msra.mxu0 %v48
  %865 = vmatprep.subr.mxu0 0.0
  %866 = vmatpush1.msra.mxu0 %v45
  %867 = vmatprep.subr.mxu0 0.0
  %868 = vmatpush1.msra.mxu0 %v42
  %869 = vmatprep.subr.mxu0 0.0
  %870 = vmatpush1.msra.mxu0 %v39
  %871 = vmatprep.subr.mxu0 0.0
  %872 = vmatpush1.msra.mxu0 %v36
  %873 = vmatprep.subr.mxu0 0.0
  %874 = vmatpush1.msra.mxu0 %v33
  %875 = vmatprep.subr.mxu0 0.0
  %876 = vmatpush1.msra.mxu0 %v30
  %877 = vmatprep.subr.mxu0 0.0
  %878 = vmatpush1.msra.mxu0 %v27
  %879 = vmatprep.subr.mxu0 0.0
  %880 = vmatpush1.msra.mxu0 %v24
  %881 = vmatprep.subr.mxu0 0.0
  %882 = vmatpush1.msra.mxu0 %v21
  %883 = vmatprep.subr.mxu0 0.0
  %884 = vmatpush1.msra.mxu0 %v18
  %885 = vmatprep.subr.mxu0 0.0
  %886 = vmatpush2.msra.mxu0 0.0
  %887 = vmatprep.subr.mxu0 0.0
  %888 = vmatpush2.msra.mxu0 0.0
  %889 = vmatprep.subr.mxu0 0.0
  %890 = vmatpush2.msra.mxu0 0.0
  %891 = vmatprep.subr.mxu0 0.0
  %892 = vmatpush2.msra.mxu0 0.0
  %893 = vmatprep.subr.mxu0 0.0
  %894 = vmatpush2.msra.mxu0 0.0
  %895 = vmatprep.subr.mxu0 0.0
  %896 = vmatpush2.msra.mxu0 0.0
  %897 = vmatprep.subr.mxu0 0.0
  %898 = vmatpush2.msra.mxu0 0.0
  %899 = vmatprep.subr.mxu0 0.0
  %900 = vmatpush2.msra.mxu0 0.0
  %901 = vmatprep.subr.mxu0 0.0
  %902 = vmatpush2.msra.mxu0 0.0
  %903 = vmatprep.subr.mxu0 0.0
  %904 = vmatpush2.msra.mxu0 0.0
  %905 = vmatprep.subr.mxu0 0.0
  %906 = vmatpush2.msra.mxu0 0.0
  %907 = vmatprep.subr.mxu0 0.0
  %908 = vmatpush2.msra.mxu0 0.0
  %909 = vmatprep.subr.mxu0 0.0
  %910 = vmatpush2.msra.mxu0 0.0
  %911 = vmatprep.subr.mxu0 0.0
  %912 = vmatpush2.msra.mxu0 0.0
  %913 = vmatprep.subr.mxu0 0.0
  %914 = vmatpush2.msra.mxu0 0.0
  %915 = vmatprep.subr.mxu0 0.0
  %916 = vmatpush2.msra.mxu0 0.0
  %917 = vmatprep.mubr.f32.mxu0 0.0
  %918 = vmatmul.mubr.f32.gmra.mxu0 %v751
  %v919 = vpop.f32.mrf.mxu0
  %v920 = vadd.f32 0.0, %v919
  %v921 = vpop.f32.mrf.mxu0
  %922 = vdwg.mxu0
  %923 = vmatprep.subr.mxu0 %v111
  %924 = vmatpush1.msra.mxu0 %v110
  %925 = vmatprep.subr.mxu0 %v108
  %926 = vmatpush1.msra.mxu0 %v107
  %927 = vmatprep.subr.mxu0 %v105
  %928 = vmatpush1.msra.mxu0 %v104
  %929 = vmatprep.subr.mxu0 %v102
  %930 = vmatpush1.msra.mxu0 %v101
  %931 = vmatprep.subr.mxu0 %v99
  %932 = vmatpush1.msra.mxu0 %v98
  %933 = vmatprep.subr.mxu0 %v96
  %934 = vmatpush1.msra.mxu0 %v95
  %935 = vmatprep.subr.mxu0 %v93
  %936 = vmatpush1.msra.mxu0 %v92
  %937 = vmatprep.subr.mxu0 %v90
  %938 = vmatpush1.msra.mxu0 %v89
  %939 = vmatprep.subr.mxu0 %v87
  %940 = vmatpush1.msra.mxu0 %v86
  %941 = vmatprep.subr.mxu0 %v84
  %942 = vmatpush1.msra.mxu0 %v83
  %943 = vmatprep.subr.mxu0 %v81
  %944 = vmatpush1.msra.mxu0 %v80
  %945 = vmatprep.subr.mxu0 %v78
  %946 = vmatpush1.msra.mxu0 %v77
  %947 = vmatprep.subr.mxu0 %v75
  %948 = vmatpush1.msra.mxu0 %v74
  %949 = vmatprep.subr.mxu0 %v72
  %950 = vmatpush1.msra.mxu0 %v71
  %951 = vmatprep.subr.mxu0 %v69
  %952 = vmatpush1.msra.mxu0 %v68
  %953 = vmatprep.subr.mxu0 %v66
  %954 = vmatpush1.msra.mxu0 %v65
  %955 = vmatprep.subr.mxu0 0.0
  %956 = vmatpush2.msra.mxu0 0.0
  %957 = vmatprep.subr.mxu0 0.0
  %958 = vmatpush2.msra.mxu0 0.0
  %959 = vmatprep.subr.mxu0 0.0
  %960 = vmatpush2.msra.mxu0 0.0
  %961 = vmatprep.subr.mxu0 0.0
  %962 = vmatpush2.msra.mxu0 0.0
  %963 = vmatprep.subr.mxu0 0.0
  %964 = vmatpush2.msra.mxu0 0.0
  %965 = vmatprep.subr.mxu0 0.0
  %966 = vmatpush2.msra.mxu0 0.0
  %967 = vmatprep.subr.mxu0 0.0
  %968 = vmatpush2.msra.mxu0 0.0
  %969 = vmatprep.subr.mxu0 0.0
  %970 = vmatpush2.msra.mxu0 0.0
  %971 = vmatprep.subr.mxu0 0.0
  %972 = vmatpush2.msra.mxu0 0.0
  %973 = vmatprep.subr.mxu0 0.0
  %974 = vmatpush2.msra.mxu0 0.0
  %975 = vmatprep.subr.mxu0 0.0
  %976 = vmatpush2.msra.mxu0 0.0
  %977 = vmatprep.subr.mxu0 0.0
  %978 = vmatpush2.msra.mxu0 0.0
  %979 = vmatprep.subr.mxu0 0.0
  %980 = vmatpush2.msra.mxu0 0.0
  %981 = vmatprep.subr.mxu0 0.0
  %982 = vmatpush2.msra.mxu0 0.0
  %983 = vmatprep.subr.mxu0 0.0
  %984 = vmatpush2.msra.mxu0 0.0
  %985 = vmatprep.subr.mxu0 0.0
  %986 = vmatpush2.msra.mxu0 0.0
  %987 = vmatprep.mubr.f32.mxu0 0.0
  %988 = vmatmul.mubr.f32.gmra.mxu0 %v769
  %v989 = vpop.f32.mrf.mxu0
  %v990 = vadd.f32 0.0, %v989
  %v991 = vpop.f32.mrf.mxu0
  %v992 = vadd.f32 0.0, %v991
  %993 = vdwg.mxu0
  %994 = vmatprep.subr.mxu0 0.0
  %995 = vmatpush1.msra.mxu0 %v112
  %996 = vmatprep.subr.mxu0 0.0
  %997 = vmatpush1.msra.mxu0 %v109
  %998 = vmatprep.subr.mxu0 0.0
  %999 = vmatpush1.msra.mxu0 %v106
  %1000 = vmatprep.subr.mxu0 0.0
  %1001 = vmatpush1.msra.mxu0 %v103
  %1002 = vmatprep.subr.mxu0 0.0
  %1003 = vmatpush1.msra.mxu0 %v100
  %1004 = vmatprep.subr.mxu0 0.0
  %1005 = vmatpush1.msra.mxu0 %v97
  %1006 = vmatprep.subr.mxu0 0.0
  %1007 = vmatpush1.msra.mxu0 %v94
  %1008 = vmatprep.subr.mxu0 0.0
  %1009 = vmatpush1.msra.mxu0 %v91
  %1010 = vmatprep.subr.mxu0 0.0
  %1011 = vmatpush1.msra.mxu0 %v88
  %1012 = vmatprep.subr.mxu0 0.0
  %1013 = vmatpush1.msra.mxu0 %v85
  %1014 = vmatprep.subr.mxu0 0.0
  %1015 = vmatpush1.msra.mxu0 %v82
  %1016 = vmatprep.subr.mxu0 0.0
  %1017 = vmatpush1.msra.mxu0 %v79
  %1018 = vmatprep.subr.mxu0 0.0
  %1019 = vmatpush1.msra.mxu0 %v76
  %1020 = vmatprep.subr.mxu0 0.0
  %1021 = vmatpush1.msra.mxu0 %v73
  %1022 = vmatprep.subr.mxu0 0.0
  %1023 = vmatpush1.msra.mxu0 %v70
  %1024 = vmatprep.subr.mxu0 0.0
  %1025 = vmatpush1.msra.mxu0 %v67
  %1026 = vmatprep.subr.mxu0 0.0
  %1027 = vmatpush2.msra.mxu0 0.0
  %1028 = vmatprep.subr.mxu0 0.0
  %1029 = vmatpush2.msra.mxu0 0.0
  %1030 = vmatprep.subr.mxu0 0.0
  %1031 = vmatpush2.msra.mxu0 0.0
  %1032 = vmatprep.subr.mxu0 0.0
  %1033 = vmatpush2.msra.mxu0 0.0
  %1034 = vmatprep.subr.mxu0 0.0
  %1035 = vmatpush2.msra.mxu0 0.0
  %1036 = vmatprep.subr.mxu0 0.0
  %1037 = vmatpush2.msra.mxu0 0.0
  %1038 = vmatprep.subr.mxu0 0.0
  %1039 = vmatpush2.msra.mxu0 0.0
  %1040 = vmatprep.subr.mxu0 0.0
  %1041 = vmatpush2.msra.mxu0 0.0
  %1042 = vmatprep.subr.mxu0 0.0
  %1043 = vmatpush2.msra.mxu0 0.0
  %1044 = vmatprep.subr.mxu0 0.0
  %1045 = vmatpush2.msra.mxu0 0.0
  %1046 = vmatprep.subr.mxu0 0.0
  %1047 = vmatpush2.msra.mxu0 0.0
  %1048 = vmatprep.subr.mxu0 0.0
  %1049 = vmatpush2.msra.mxu0 0.0
  %1050 = vmatprep.subr.mxu0 0.0
  %1051 = vmatpush2.msra.mxu0 0.0
  %1052 = vmatprep.subr.mxu0 0.0
  %1053 = vmatpush2.msra.mxu0 0.0
  %1054 = vmatprep.subr.mxu0 0.0
  %1055 = vmatpush2.msra.mxu0 0.0
  %1056 = vmatprep.subr.mxu0 0.0
  %1057 = vmatpush2.msra.mxu0 0.0
  %1058 = vmatprep.mubr.f32.mxu0 0.0
  %1059 = vmatmul.mubr.f32.gmra.mxu0 %v769
  %v1060 = vpop.f32.mrf.mxu0
  %v1061 = vadd.f32 0.0, %v1060
  %v1062 = vpop.f32.mrf.mxu0
  %1063 = vdwg.mxu0
  %v1064 = vadd.f32 %v775, %v849
  %v1065 = vmul.f32 %v1064, 0.5
  %v1066 = vtanh.pop %v1065
  %v1067 = vmul.f32 %v1066, 0.5
  %v1068 = vadd.f32 %v1067, 0.5
  %v1069 = vadd.f32 %v776, %v851
  %v1070 = vmul.f32 %v1069, 0.5
  %v1071 = vtanh.pop %v1070
  %v1072 = vmul.f32 %v1071, 0.5
  %v1073 = vadd.f32 %v1072, 0.5
  %v1074 = vadd.f32 %v920, %v113
  %v1075 = vmul.f32 %v1068, %v1074
  %v1076 = vadd.f32 %v777, %v1075
  %v1077 = vtanh.pop %v1076
  %v1078 = vsub.f32 1.0, %v1073
  %v1079 = vmul.f32 %v1078, %v1077
  %v1080 = vmul.f32 %v1073, %v751
  %v1081 = vadd.f32 %v1079, %v1080
  %v1082 = vadd.f32 %v779, %v990
  %v1083 = vmul.f32 %v1082, 0.5
  %v1084 = vtanh.pop %v1083
  %v1085 = vmul.f32 %v1084, 0.5
  %v1086 = vadd.f32 %v1085, 0.5
  %v1087 = vadd.f32 %v780, %v992
  %v1088 = vmul.f32 %v1087, 0.5
  %v1089 = vtanh.pop %v1088
  %v1090 = vmul.f32 %v1089, 0.5
  %v1091 = vadd.f32 %v1090, 0.5
  %v1092 = vadd.f32 %v1061, %v115
  %v1093 = vmul.f32 %v1086, %v1092
  %v1094 = vadd.f32 %v781, %v1093
  %v1095 = vtanh.pop %v1094
  %v1096 = vsub.f32 1.0, %v1091
  %v1097 = vmul.f32 %v1096, %v1095
  %v1098 = vmul.f32 %v1091, %v769
  %v1099 = vadd.f32 %v1097, %v1098
  %s1100 = scalar_lea.vmem %s3, 32
  %1101 = vst [vmem:[%s1100] sm:$0xff] %v1081
  %s1102 = scalar_lea.vmem %s3, 80
  %1103 = vst [vmem:[%s1102 + $0x8] sm:$0xff] %v1099
  %s1104 = scalar_lea.vmem %s0, 72
  %v1105 = vld [vmem:[%s1104] sm:$0xff]
  %v1106 = vld [vmem:[%s1104 + $0x8] sm:$0xff]
  %v1107 = vld [vmem:[%s1104 + $0x10] sm:$0xff]
  %s1108 = scalar_lea.vmem %s0, 288
  %v1109 = vld [vmem:[%s1108] sm:$0xff]
  %v1110 = vld [vmem:[%s1108 + $0x8] sm:$0xff]
  %v1111 = vld [vmem:[%s1108 + $0x10] sm:$0xff]
  %1112 = vmatprep.subr.mxu0 %v62
  %1113 = vmatpush1.msra.mxu0 %v61
  %1114 = vmatprep.subr.mxu0 %v59
  %1115 = vmatpush1.msra.mxu0 %v58
  %1116 = vmatprep.subr.mxu0 %v56
  %1117 = vmatpush1.msra.mxu0 %v55
  %1118 = vmatprep.subr.mxu0 %v53
  %1119 = vmatpush1.msra.mxu0 %v52
  %1120 = vmatprep.subr.mxu0 %v50
  %1121 = vmatpush1.msra.mxu0 %v49
  %1122 = vmatprep.subr.mxu0 %v47
  %1123 = vmatpush1.msra.mxu0 %v46
  %1124 = vmatprep.subr.mxu0 %v44
  %1125 = vmatpush1.msra.mxu0 %v43
  %1126 = vmatprep.subr.mxu0 %v41
  %1127 = vmatpush1.msra.mxu0 %v40
  %1128 = vmatprep.subr.mxu0 %v38
  %1129 = vmatpush1.msra.mxu0 %v37
  %1130 = vmatprep.subr.mxu0 %v35
  %1131 = vmatpush1.msra.mxu0 %v34
  %1132 = vmatprep.subr.mxu0 %v32
  %1133 = vmatpush1.msra.mxu0 %v31
  %1134 = vmatprep.subr.mxu0 %v29
  %1135 = vmatpush1.msra.mxu0 %v28
  %1136 = vmatprep.subr.mxu0 %v26
  %1137 = vmatpush1.msra.mxu0 %v25
  %1138 = vmatprep.subr.mxu0 %v23
  %1139 = vmatpush1.msra.mxu0 %v22
  %1140 = vmatprep.subr.mxu0 %v20
  %1141 = vmatpush1.msra.mxu0 %v19
  %1142 = vmatprep.subr.mxu0 %v17
  %1143 = vmatpush1.msra.mxu0 %v16
  %1144 = vmatprep.subr.mxu0 0.0
  %1145 = vmatpush2.msra.mxu0 0.0
  %1146 = vmatprep.subr.mxu0 0.0
  %1147 = vmatpush2.msra.mxu0 0.0
  %1148 = vmatprep.subr.mxu0 0.0
  %1149 = vmatpush2.msra.mxu0 0.0
  %1150 = vmatprep.subr.mxu0 0.0
  %1151 = vmatpush2.msra.mxu0 0.0
  %1152 = vmatprep.subr.mxu0 0.0
  %1153 = vmatpush2.msra.mxu0 0.0
  %1154 = vmatprep.subr.mxu0 0.0
  %1155 = vmatpush2.msra.mxu0 0.0
  %1156 = vmatprep.subr.mxu0 0.0
  %1157 = vmatpush2.msra.mxu0 0.0
  %1158 = vmatprep.subr.mxu0 0.0
  %1159 = vmatpush2.msra.mxu0 0.0
  %1160 = vmatprep.subr.mxu0 0.0
  %1161 = vmatpush2.msra.mxu0 0.0
  %1162 = vmatprep.subr.mxu0 0.0
  %1163 = vmatpush2.msra.mxu0 0.0
  %1164 = vmatprep.subr.mxu0 0.0
  %1165 = vmatpush2.msra.mxu0 0.0
  %1166 = vmatprep.subr.mxu0 0.0
  %1167 = vmatpush2.msra.mxu0 0.0
  %1168 = vmatprep.subr.mxu0 0.0
  %1169 = vmatpush2.msra.mxu0 0.0
  %1170 = vmatprep.subr.mxu0 0.0
  %1171 = vmatpush2.msra.mxu0 0.0
  %1172 = vmatprep.subr.mxu0 0.0
  %1173 = vmatpush2.msra.mxu0 0.0
  %1174 = vmatprep.subr.mxu0 0.0
  %1175 = vmatpush2.msra.mxu0 0.0
  %1176 = vmatprep.mubr.f32.mxu0 0.0
  %1177 = vmatmul.mubr.f32.gmra.mxu0 %v1081
  %v1178 = vpop.f32.mrf.mxu0
  %v1179 = vadd.f32 0.0, %v1178
  %v1180 = vpop.f32.mrf.mxu0
  %v1181 = vadd.f32 0.0, %v1180
  %1182 = vdwg.mxu0
  %1183 = vmatprep.subr.mxu0 0.0
  %1184 = vmatpush1.msra.mxu0 %v63
  %1185 = vmatprep.subr.mxu0 0.0
  %1186 = vmatpush1.msra.mxu0 %v60
  %1187 = vmatprep.subr.mxu0 0.0
  %1188 = vmatpush1.msra.mxu0 %v57
  %1189 = vmatprep.subr.mxu0 0.0
  %1190 = vmatpush1.msra.mxu0 %v54
  %1191 = vmatprep.subr.mxu0 0.0
  %1192 = vmatpush1.msra.mxu0 %v51
  %1193 = vmatprep.subr.mxu0 0.0
  %1194 = vmatpush1.msra.mxu0 %v48
  %1195 = vmatprep.subr.mxu0 0.0
  %1196 = vmatpush1.msra.mxu0 %v45
  %1197 = vmatprep.subr.mxu0 0.0
  %1198 = vmatpush1.msra.mxu0 %v42
  %1199 = vmatprep.subr.mxu0 0.0
  %1200 = vmatpush1.msra.mxu0 %v39
  %1201 = vmatprep.subr.mxu0 0.0
  %1202 = vmatpush1.msra.mxu0 %v36
  %1203 = vmatprep.subr.mxu0 0.0
  %1204 = vmatpush1.msra.mxu0 %v33
  %1205 = vmatprep.subr.mxu0 0.0
  %1206 = vmatpush1.msra.mxu0 %v30
  %1207 = vmatprep.subr.mxu0 0.0
  %1208 = vmatpush1.msra.mxu0 %v27
  %1209 = vmatprep.subr.mxu0 0.0
  %1210 = vmatpush1.msra.mxu0 %v24
  %1211 = vmatprep.subr.mxu0 0.0
  %1212 = vmatpush1.msra.mxu0 %v21
  %1213 = vmatprep.subr.mxu0 0.0
  %1214 = vmatpush1.msra.mxu0 %v18
  %1215 = vmatprep.subr.mxu0 0.0
  %1216 = vmatpush2.msra.mxu0 0.0
  %1217 = vmatprep.subr.mxu0 0.0
  %1218 = vmatpush2.msra.mxu0 0.0
  %1219 = vmatprep.subr.mxu0 0.0
  %1220 = vmatpush2.msra.mxu0 0.0
  %1221 = vmatprep.subr.mxu0 0.0
  %1222 = vmatpush2.msra.mxu0 0.0
  %1223 = vmatprep.subr.mxu0 0.0
  %1224 = vmatpush2.msra.mxu0 0.0
  %1225 = vmatprep.subr.mxu0 0.0
  %1226 = vmatpush2.msra.mxu0 0.0
  %1227 = vmatprep.subr.mxu0 0.0
  %1228 = vmatpush2.msra.mxu0 0.0
  %1229 = vmatprep.subr.mxu0 0.0
  %1230 = vmatpush2.msra.mxu0 0.0
  %1231 = vmatprep.subr.mxu0 0.0
  %1232 = vmatpush2.msra.mxu0 0.0
  %1233 = vmatprep.subr.mxu0 0.0
  %1234 = vmatpush2.msra.mxu0 0.0
  %1235 = vmatprep.subr.mxu0 0.0
  %1236 = vmatpush2.msra.mxu0 0.0
  %1237 = vmatprep.subr.mxu0 0.0
  %1238 = vmatpush2.msra.mxu0 0.0
  %1239 = vmatprep.subr.mxu0 0.0
  %1240 = vmatpush2.msra.mxu0 0.0
  %1241 = vmatprep.subr.mxu0 0.0
  %1242 = vmatpush2.msra.mxu0 0.0
  %1243 = vmatprep.subr.mxu0 0.0
  %1244 = vmatpush2.msra.mxu0 0.0
  %1245 = vmatprep.subr.mxu0 0.0
  %1246 = vmatpush2.msra.mxu0 0.0
  %1247 = vmatprep.mubr.f32.mxu0 0.0
  %1248 = vmatmul.mubr.f32.gmra.mxu0 %v1081
  %v1249 = vpop.f32.mrf.mxu0
  %v1250 = vadd.f32 0.0, %v1249
  %v1251 = vpop.f32.mrf.mxu0
  %1252 = vdwg.mxu0
  %1253 = vmatprep.subr.mxu0 %v111
  %1254 = vmatpush1.msra.mxu0 %v110
  %1255 = vmatprep.subr.mxu0 %v108
  %1256 = vmatpush1.msra.mxu0 %v107
  %1257 = vmatprep.subr.mxu0 %v105
  %1258 = vmatpush1.msra.mxu0 %v104
  %1259 = vmatprep.subr.mxu0 %v102
  %1260 = vmatpush1.msra.mxu0 %v101
  %1261 = vmatprep.subr.mxu0 %v99
  %1262 = vmatpush1.msra.mxu0 %v98
  %1263 = vmatprep.subr.mxu0 %v96
  %1264 = vmatpush1.msra.mxu0 %v95
  %1265 = vmatprep.subr.mxu0 %v93
  %1266 = vmatpush1.msra.mxu0 %v92
  %1267 = vmatprep.subr.mxu0 %v90
  %1268 = vmatpush1.msra.mxu0 %v89
  %1269 = vmatprep.subr.mxu0 %v87
  %1270 = vmatpush1.msra.mxu0 %v86
  %1271 = vmatprep.subr.mxu0 %v84
  %1272 = vmatpush1.msra.mxu0 %v83
  %1273 = vmatprep.subr.mxu0 %v81
  %1274 = vmatpush1.msra.mxu0 %v80
  %1275 = vmatprep.subr.mxu0 %v78
  %1276 = vmatpush1.msra.mxu0 %v77
  %1277 = vmatprep.subr.mxu0 %v75
  %1278 = vmatpush1.msra.mxu0 %v74
  %1279 = vmatprep.subr.mxu0 %v72
  %1280 = vmatpush1.msra.mxu0 %v71
  %1281 = vmatprep.subr.mxu0 %v69
  %1282 = vmatpush1.msra.mxu0 %v68
  %1283 = vmatprep.subr.mxu0 %v66
  %1284 = vmatpush1.msra.mxu0 %v65
  %1285 = vmatprep.subr.mxu0 0.0
  %1286 = vmatpush2.msra.mxu0 0.0
  %1287 = vmatprep.subr.mxu0 0.0
  %1288 = vmatpush2.msra.mxu0 0.0
  %1289 = vmatprep.subr.mxu0 0.0
  %1290 = vmatpush2.msra.mxu0 0.0
  %1291 = vmatprep.subr.mxu0 0.0
  %1292 = vmatpush2.msra.mxu0 0.0
  %1293 = vmatprep.subr.mxu0 0.0
  %1294 = vmatpush2.msra.mxu0 0.0
  %1295 = vmatprep.subr.mxu0 0.0
  %1296 = vmatpush2.msra.mxu0 0.0
  %1297 = vmatprep.subr.mxu0 0.0
  %1298 = vmatpush2.msra.mxu0 0.0
  %1299 = vmatprep.subr.mxu0 0.0
  %1300 = vmatpush2.msra.mxu0 0.0
  %1301 = vmatprep.subr.mxu0 0.0
  %1302 = vmatpush2.msra.mxu0 0.0
  %1303 = vmatprep.subr.mxu0 0.0
  %1304 = vmatpush2.msra.mxu0 0.0
  %1305 = vmatprep.subr.mxu0 0.0
  %1306 = vmatpush2.msra.mxu0 0.0
  %1307 = vmatprep.subr.mxu0 0.0
  %1308 = vmatpush2.msra.mxu0 0.0
  %1309 = vmatprep.subr.mxu0 0.0
  %1310 = vmatpush2.msra.mxu0 0.0
  %1311 = vmatprep.subr.mxu0 0.0
  %1312 = vmatpush2.msra.mxu0 0.0
  %1313 = vmatprep.subr.mxu0 0.0
  %1314 = vmatpush2.msra.mxu0 0.0
  %1315 = vmatprep.subr.mxu0 0.0
  %1316 = vmatpush2.msra.mxu0 0.0
  %1317 = vmatprep.mubr.f32.mxu0 0.0
  %1318 = vmatmul.mubr.f32.gmra.mxu0 %v1099
  %v1319 = vpop.f32.mrf.mxu0
  %v1320 = vadd.f32 0.0, %v1319
  %v1321 = vpop.f32.mrf.mxu0
  %v1322 = vadd.f32 0.0, %v1321
  %1323 = vdwg.mxu0
  %1324 = vmatprep.subr.mxu0 0.0
  %1325 = vmatpush1.msra.mxu0 %v112
  %1326 = vmatprep.subr.mxu0 0.0
  %1327 = vmatpush1.msra.mxu0 %v109
  %1328 = vmatprep.subr.mxu0 0.0
  %1329 = vmatpush1.msra.mxu0 %v106
  %1330 = vmatprep.subr.mxu0 0.0
  %1331 = vmatpush1.msra.mxu0 %v103
  %1332 = vmatprep.subr.mxu0 0.0
  %1333 = vmatpush1.msra.mxu0 %v100
  %1334 = vmatprep.subr.mxu0 0.0
  %1335 = vmatpush1.msra.mxu0 %v97
  %1336 = vmatprep.subr.mxu0 0.0
  %1337 = vmatpush1.msra.mxu0 %v94
  %1338 = vmatprep.subr.mxu0 0.0
  %1339 = vmatpush1.msra.mxu0 %v91
  %1340 = vmatprep.subr.mxu0 0.0
  %1341 = vmatpush1.msra.mxu0 %v88
  %1342 = vmatprep.subr.mxu0 0.0
  %1343 = vmatpush1.msra.mxu0 %v85
  %1344 = vmatprep.subr.mxu0 0.0
  %1345 = vmatpush1.msra.mxu0 %v82
  %1346 = vmatprep.subr.mxu0 0.0
  %1347 = vmatpush1.msra.mxu0 %v79
  %1348 = vmatprep.subr.mxu0 0.0
  %1349 = vmatpush1.msra.mxu0 %v76
  %1350 = vmatprep.subr.mxu0 0.0
  %1351 = vmatpush1.msra.mxu0 %v73
  %1352 = vmatprep.subr.mxu0 0.0
  %1353 = vmatpush1.msra.mxu0 %v70
  %1354 = vmatprep.subr.mxu0 0.0
  %1355 = vmatpush1.msra.mxu0 %v67
  %1356 = vmatprep.subr.mxu0 0.0
  %1357 = vmatpush2.msra.mxu0 0.0
  %1358 = vmatprep.subr.mxu0 0.0
  %1359 = vmatpush2.msra.mxu0 0.0
  %1360 = vmatprep.subr.mxu0 0.0
  %1361 = vmatpush2.msra.mxu0 0.0
  %1362 = vmatprep.subr.mxu0 0.0
  %1363 = vmatpush2.msra.mxu0 0.0
  %1364 = vmatprep.subr.mxu0 0.0
  %1365 = vmatpush2.msra.mxu0 0.0
  %1366 = vmatprep.subr.mxu0 0.0
  %1367 = vmatpush2.msra.mxu0 0.0
  %1368 = vmatprep.subr.mxu0 0.0
  %1369 = vmatpush2.msra.mxu0 0.0
  %1370 = vmatprep.subr.mxu0 0.0
  %1371 = vmatpush2.msra.mxu0 0.0
  %1372 = vmatprep.subr.mxu0 0.0
  %1373 = vmatpush2.msra.mxu0 0.0
  %1374 = vmatprep.subr.mxu0 0.0
  %1375 = vmatpush2.msra.mxu0 0.0
  %1376 = vmatprep.subr.mxu0 0.0
  %1377 = vmatpush2.msra.mxu0 0.0
  %1378 = vmatprep.subr.mxu0 0.0
  %1379 = vmatpush2.msra.mxu0 0.0
  %1380 = vmatprep.subr.mxu0 0.0
  %1381 = vmatpush2.msra.mxu0 0.0
  %1382 = vmatprep.subr.mxu0 0.0
  %1383 = vmatpush2.msra.mxu0 0.0
  %1384 = vmatprep.subr.mxu0 0.0
  %1385 = vmatpush2.msra.mxu0 0.0
  %1386 = vmatprep.subr.mxu0 0.0
  %1387 = vmatpush2.msra.mxu0 0.0
  %1388 = vmatprep.mubr.f32.mxu0 0.0
  %1389 = vmatmul.mubr.f32.gmra.mxu0 %v1099
  %v1390 = vpop.f32.mrf.mxu0
  %v1391 = vadd.f32 0.0, %v1390
  %v1392 = vpop.f32.mrf.mxu0
  %1393 = vdwg.mxu0
  %v1394 = vadd.f32 %v1105, %v1179
  %v1395 = vmul.f32 %v1394, 0.5
  %v1396 = vtanh.pop %v1395
  %v1397 = vmul.f32 %v1396, 0.5
  %v1398 = vadd.f32 %v1397, 0.5
  %v1399 = vadd.f32 %v1106, %v1181
  %v1400 = vmul.f32 %v1399, 0.5
  %v1401 = vtanh.pop %v1400
  %v1402 = vmul.f32 %v1401, 0.5
  %v1403 = vadd.f32 %v1402, 0.5
  %v1404 = vadd.f32 %v1250, %v113
  %v1405 = vmul.f32 %v1398, %v1404
  %v1406 = vadd.f32 %v1107, %v1405
  %v1407 = vtanh.pop %v1406
  %v1408 = vsub.f32 1.0, %v1403
  %v1409 = vmul.f32 %v1408, %v1407
  %v1410 = vmul.f32 %v1403, %v1081
  %v1411 = vadd.f32 %v1409, %v1410
  %v1412 = vadd.f32 %v1109, %v1320
  %v1413 = vmul.f32 %v1412, 0.5
  %v1414 = vtanh.pop %v1413
  %v1415 = vmul.f32 %v1414, 0.5
  %v1416 = vadd.f32 %v1415, 0.5
  %v1417 = vadd.f32 %v1110, %v1322
  %v1418 = vmul.f32 %v1417, 0.5
  %v1419 = vtanh.pop %v1418
  %v1420 = vmul.f32 %v1419, 0.5
  %v1421 = vadd.f32 %v1420, 0.5
  %v1422 = vadd.f32 %v1391, %v115
  %v1423 = vmul.f32 %v1416, %v1422
  %v1424 = vadd.f32 %v1111, %v1423
  %v1425 = vtanh.pop %v1424
  %v1426 = vsub.f32 1.0, %v1421
  %v1427 = vmul.f32 %v1426, %v1425
  %v1428 = vmul.f32 %v1421, %v1099
  %v1429 = vadd.f32 %v1427, %v1428
  %s1430 = scalar_lea.vmem %s3, 48
  %1431 = vst [vmem:[%s1430] sm:$0xff] %v1411
  %s1432 = scalar_lea.vmem %s3, 64
  %1433 = vst [vmem:[%s1432 + $0x8] sm:$0xff] %v1429
  %s1434 = scalar_lea.vmem %s0, 96
  %v1435 = vld [vmem:[%s1434] sm:$0xff]
  %v1436 = vld [vmem:[%s1434 + $0x8] sm:$0xff]
  %v1437 = vld [vmem:[%s1434 + $0x10] sm:$0xff]
  %s1438 = scalar_lea.vmem %s0, 264
  %v1439 = vld [vmem:[%s1438] sm:$0xff]
  %v1440 = vld [vmem:[%s1438 + $0x8] sm:$0xff]
  %v1441 = vld [vmem:[%s1438 + $0x10] sm:$0xff]
  %1442 = vmatprep.subr.mxu0 %v62
  %1443 = vmatpush1.msra.mxu0 %v61
  %1444 = vmatprep.subr.mxu0 %v59
  %1445 = vmatpush1.msra.mxu0 %v58
  %1446 = vmatprep.subr.mxu0 %v56
  %1447 = vmatpush1.msra.mxu0 %v55
  %1448 = vmatprep.subr.mxu0 %v53
  %1449 = vmatpush1.msra.mxu0 %v52
  %1450 = vmatprep.subr.mxu0 %v50
  %1451 = vmatpush1.msra.mxu0 %v49
  %1452 = vmatprep.subr.mxu0 %v47
  %1453 = vmatpush1.msra.mxu0 %v46
  %1454 = vmatprep.subr.mxu0 %v44
  %1455 = vmatpush1.msra.mxu0 %v43
  %1456 = vmatprep.subr.mxu0 %v41
  %1457 = vmatpush1.msra.mxu0 %v40
  %1458 = vmatprep.subr.mxu0 %v38
  %1459 = vmatpush1.msra.mxu0 %v37
  %1460 = vmatprep.subr.mxu0 %v35
  %1461 = vmatpush1.msra.mxu0 %v34
  %1462 = vmatprep.subr.mxu0 %v32
  %1463 = vmatpush1.msra.mxu0 %v31
  %1464 = vmatprep.subr.mxu0 %v29
  %1465 = vmatpush1.msra.mxu0 %v28
  %1466 = vmatprep.subr.mxu0 %v26
  %1467 = vmatpush1.msra.mxu0 %v25
  %1468 = vmatprep.subr.mxu0 %v23
  %1469 = vmatpush1.msra.mxu0 %v22
  %1470 = vmatprep.subr.mxu0 %v20
  %1471 = vmatpush1.msra.mxu0 %v19
  %1472 = vmatprep.subr.mxu0 %v17
  %1473 = vmatpush1.msra.mxu0 %v16
  %1474 = vmatprep.subr.mxu0 0.0
  %1475 = vmatpush2.msra.mxu0 0.0
  %1476 = vmatprep.subr.mxu0 0.0
  %1477 = vmatpush2.msra.mxu0 0.0
  %1478 = vmatprep.subr.mxu0 0.0
  %1479 = vmatpush2.msra.mxu0 0.0
  %1480 = vmatprep.subr.mxu0 0.0
  %1481 = vmatpush2.msra.mxu0 0.0
  %1482 = vmatprep.subr.mxu0 0.0
  %1483 = vmatpush2.msra.mxu0 0.0
  %1484 = vmatprep.subr.mxu0 0.0
  %1485 = vmatpush2.msra.mxu0 0.0
  %1486 = vmatprep.subr.mxu0 0.0
  %1487 = vmatpush2.msra.mxu0 0.0
  %1488 = vmatprep.subr.mxu0 0.0
  %1489 = vmatpush2.msra.mxu0 0.0
  %1490 = vmatprep.subr.mxu0 0.0
  %1491 = vmatpush2.msra.mxu0 0.0
  %1492 = vmatprep.subr.mxu0 0.0
  %1493 = vmatpush2.msra.mxu0 0.0
  %1494 = vmatprep.subr.mxu0 0.0
  %1495 = vmatpush2.msra.mxu0 0.0
  %1496 = vmatprep.subr.mxu0 0.0
  %1497 = vmatpush2.msra.mxu0 0.0
  %1498 = vmatprep.subr.mxu0 0.0
  %1499 = vmatpush2.msra.mxu0 0.0
  %1500 = vmatprep.subr.mxu0 0.0
  %1501 = vmatpush2.msra.mxu0 0.0
  %1502 = vmatprep.subr.mxu0 0.0
  %1503 = vmatpush2.msra.mxu0 0.0
  %1504 = vmatprep.subr.mxu0 0.0
  %1505 = vmatpush2.msra.mxu0 0.0
  %1506 = vmatprep.mubr.f32.mxu0 0.0
  %1507 = vmatmul.mubr.f32.gmra.mxu0 %v1411
  %v1508 = vpop.f32.mrf.mxu0
  %v1509 = vadd.f32 0.0, %v1508
  %v1510 = vpop.f32.mrf.mxu0
  %v1511 = vadd.f32 0.0, %v1510
  %1512 = vdwg.mxu0
  %1513 = vmatprep.subr.mxu0 0.0
  %1514 = vmatpush1.msra.mxu0 %v63
  %1515 = vmatprep.subr.mxu0 0.0
  %1516 = vmatpush1.msra.mxu0 %v60
  %1517 = vmatprep.subr.mxu0 0.0
  %1518 = vmatpush1.msra.mxu0 %v57
  %1519 = vmatprep.subr.mxu0 0.0
  %1520 = vmatpush1.msra.mxu0 %v54
  %1521 = vmatprep.subr.mxu0 0.0
  %1522 = vmatpush1.msra.mxu0 %v51
  %1523 = vmatprep.subr.mxu0 0.0
  %1524 = vmatpush1.msra.mxu0 %v48
  %1525 = vmatprep.subr.mxu0 0.0
  %1526 = vmatpush1.msra.mxu0 %v45
  %1527 = vmatprep.subr.mxu0 0.0
  %1528 = vmatpush1.msra.mxu0 %v42
  %1529 = vmatprep.subr.mxu0 0.0
  %1530 = vmatpush1.msra.mxu0 %v39
  %1531 = vmatprep.subr.mxu0 0.0
  %1532 = vmatpush1.msra.mxu0 %v36
  %1533 = vmatprep.subr.mxu0 0.0
  %1534 = vmatpush1.msra.mxu0 %v33
  %1535 = vmatprep.subr.mxu0 0.0
  %1536 = vmatpush1.msra.mxu0 %v30
  %1537 = vmatprep.subr.mxu0 0.0
  %1538 = vmatpush1.msra.mxu0 %v27
  %1539 = vmatprep.subr.mxu0 0.0
  %1540 = vmatpush1.msra.mxu0 %v24
  %1541 = vmatprep.subr.mxu0 0.0
  %1542 = vmatpush1.msra.mxu0 %v21
  %1543 = vmatprep.subr.mxu0 0.0
  %1544 = vmatpush1.msra.mxu0 %v18
  %1545 = vmatprep.subr.mxu0 0.0
  %1546 = vmatpush2.msra.mxu0 0.0
  %1547 = vmatprep.subr.mxu0 0.0
  %1548 = vmatpush2.msra.mxu0 0.0
  %1549 = vmatprep.subr.mxu0 0.0
  %1550 = vmatpush2.msra.mxu0 0.0
  %1551 = vmatprep.subr.mxu0 0.0
  %1552 = vmatpush2.msra.mxu0 0.0
  %1553 = vmatprep.subr.mxu0 0.0
  %1554 = vmatpush2.msra.mxu0 0.0
  %1555 = vmatprep.subr.mxu0 0.0
  %1556 = vmatpush2.msra.mxu0 0.0
  %1557 = vmatprep.subr.mxu0 0.0
  %1558 = vmatpush2.msra.mxu0 0.0
  %1559 = vmatprep.subr.mxu0 0.0
  %1560 = vmatpush2.msra.mxu0 0.0
  %1561 = vmatprep.subr.mxu0 0.0
  %1562 = vmatpush2.msra.mxu0 0.0
  %1563 = vmatprep.subr.mxu0 0.0
  %1564 = vmatpush2.msra.mxu0 0.0
  %1565 = vmatprep.subr.mxu0 0.0
  %1566 = vmatpush2.msra.mxu0 0.0
  %1567 = vmatprep.subr.mxu0 0.0
  %1568 = vmatpush2.msra.mxu0 0.0
  %1569 = vmatprep.subr.mxu0 0.0
  %1570 = vmatpush2.msra.mxu0 0.0
  %1571 = vmatprep.subr.mxu0 0.0
  %1572 = vmatpush2.msra.mxu0 0.0
  %1573 = vmatprep.subr.mxu0 0.0
  %1574 = vmatpush2.msra.mxu0 0.0
  %1575 = vmatprep.subr.mxu0 0.0
  %1576 = vmatpush2.msra.mxu0 0.0
  %1577 = vmatprep.mubr.f32.mxu0 0.0
  %1578 = vmatmul.mubr.f32.gmra.mxu0 %v1411
  %v1579 = vpop.f32.mrf.mxu0
  %v1580 = vadd.f32 0.0, %v1579
  %v1581 = vpop.f32.mrf.mxu0
  %1582 = vdwg.mxu0
  %1583 = vmatprep.subr.mxu0 %v111
  %1584 = vmatpush1.msra.mxu0 %v110
  %1585 = vmatprep.subr.mxu0 %v108
  %1586 = vmatpush1.msra.mxu0 %v107
  %1587 = vmatprep.subr.mxu0 %v105
  %1588 = vmatpush1.msra.mxu0 %v104
  %1589 = vmatprep.subr.mxu0 %v102
  %1590 = vmatpush1.msra.mxu0 %v101
  %1591 = vmatprep.subr.mxu0 %v99
  %1592 = vmatpush1.msra.mxu0 %v98
  %1593 = vmatprep.subr.mxu0 %v96
  %1594 = vmatpush1.msra.mxu0 %v95
  %1595 = vmatprep.subr.mxu0 %v93
  %1596 = vmatpush1.msra.mxu0 %v92
  %1597 = vmatprep.subr.mxu0 %v90
  %1598 = vmatpush1.msra.mxu0 %v89
  %1599 = vmatprep.subr.mxu0 %v87
  %1600 = vmatpush1.msra.mxu0 %v86
  %1601 = vmatprep.subr.mxu0 %v84
  %1602 = vmatpush1.msra.mxu0 %v83
  %1603 = vmatprep.subr.mxu0 %v81
  %1604 = vmatpush1.msra.mxu0 %v80
  %1605 = vmatprep.subr.mxu0 %v78
  %1606 = vmatpush1.msra.mxu0 %v77
  %1607 = vmatprep.subr.mxu0 %v75
  %1608 = vmatpush1.msra.mxu0 %v74
  %1609 = vmatprep.subr.mxu0 %v72
  %1610 = vmatpush1.msra.mxu0 %v71
  %1611 = vmatprep.subr.mxu0 %v69
  %1612 = vmatpush1.msra.mxu0 %v68
  %1613 = vmatprep.subr.mxu0 %v66
  %1614 = vmatpush1.msra.mxu0 %v65
  %1615 = vmatprep.subr.mxu0 0.0
  %1616 = vmatpush2.msra.mxu0 0.0
  %1617 = vmatprep.subr.mxu0 0.0
  %1618 = vmatpush2.msra.mxu0 0.0
  %1619 = vmatprep.subr.mxu0 0.0
  %1620 = vmatpush2.msra.mxu0 0.0
  %1621 = vmatprep.subr.mxu0 0.0
  %1622 = vmatpush2.msra.mxu0 0.0
  %1623 = vmatprep.subr.mxu0 0.0
  %1624 = vmatpush2.msra.mxu0 0.0
  %1625 = vmatprep.subr.mxu0 0.0
  %1626 = vmatpush2.msra.mxu0 0.0
  %1627 = vmatprep.subr.mxu0 0.0
  %1628 = vmatpush2.msra.mxu0 0.0
  %1629 = vmatprep.subr.mxu0 0.0
  %1630 = vmatpush2.msra.mxu0 0.0
  %1631 = vmatprep.subr.mxu0 0.0
  %1632 = vmatpush2.msra.mxu0 0.0
  %1633 = vmatprep.subr.mxu0 0.0
  %1634 = vmatpush2.msra.mxu0 0.0
  %1635 = vmatprep.subr.mxu0 0.0
  %1636 = vmatpush2.msra.mxu0 0.0
  %1637 = vmatprep.subr.mxu0 0.0
  %1638 = vmatpush2.msra.mxu0 0.0
  %1639 = vmatprep.subr.mxu0 0.0
  %1640 = vmatpush2.msra.mxu0 0.0
  %1641 = vmatprep.subr.mxu0 0.0
  %1642 = vmatpush2.msra.mxu0 0.0
  %1643 = vmatprep.subr.mxu0 0.0
  %1644 = vmatpush2.msra.mxu0 0.0
  %1645 = vmatprep.subr.mxu0 0.0
  %1646 = vmatpush2.msra.mxu0 0.0
  %1647 = vmatprep.mubr.f32.mxu0 0.0
  %1648 = vmatmul.mubr.f32.gmra.mxu0 %v1429
  %v1649 = vpop.f32.mrf.mxu0
  %v1650 = vadd.f32 0.0, %v1649
  %v1651 = vpop.f32.mrf.mxu0
  %v1652 = vadd.f32 0.0, %v1651
  %1653 = vdwg.mxu0
  %1654 = vmatprep.subr.mxu0 0.0
  %1655 = vmatpush1.msra.mxu0 %v112
  %1656 = vmatprep.subr.mxu0 0.0
  %1657 = vmatpush1.msra.mxu0 %v109
  %1658 = vmatprep.subr.mxu0 0.0
  %1659 = vmatpush1.msra.mxu0 %v106
  %1660 = vmatprep.subr.mxu0 0.0
  %1661 = vmatpush1.msra.mxu0 %v103
  %1662 = vmatprep.subr.mxu0 0.0
  %1663 = vmatpush1.msra.mxu0 %v100
  %1664 = vmatprep.subr.mxu0 0.0
  %1665 = vmatpush1.msra.mxu0 %v97
  %1666 = vmatprep.subr.mxu0 0.0
  %1667 = vmatpush1.msra.mxu0 %v94
  %1668 = vmatprep.subr.mxu0 0.0
  %1669 = vmatpush1.msra.mxu0 %v91
  %1670 = vmatprep.subr.mxu0 0.0
  %1671 = vmatpush1.msra.mxu0 %v88
  %1672 = vmatprep.subr.mxu0 0.0
  %1673 = vmatpush1.msra.mxu0 %v85
  %1674 = vmatprep.subr.mxu0 0.0
  %1675 = vmatpush1.msra.mxu0 %v82
  %1676 = vmatprep.subr.mxu0 0.0
  %1677 = vmatpush1.msra.mxu0 %v79
  %1678 = vmatprep.subr.mxu0 0.0
  %1679 = vmatpush1.msra.mxu0 %v76
  %1680 = vmatprep.subr.mxu0 0.0
  %1681 = vmatpush1.msra.mxu0 %v73
  %1682 = vmatprep.subr.mxu0 0.0
  %1683 = vmatpush1.msra.mxu0 %v70
  %1684 = vmatprep.subr.mxu0 0.0
  %1685 = vmatpush1.msra.mxu0 %v67
  %1686 = vmatprep.subr.mxu0 0.0
  %1687 = vmatpush2.msra.mxu0 0.0
  %1688 = vmatprep.subr.mxu0 0.0
  %1689 = vmatpush2.msra.mxu0 0.0
  %1690 = vmatprep.subr.mxu0 0.0
  %1691 = vmatpush2.msra.mxu0 0.0
  %1692 = vmatprep.subr.mxu0 0.0
  %1693 = vmatpush2.msra.mxu0 0.0
  %1694 = vmatprep.subr.mxu0 0.0
  %1695 = vmatpush2.msra.mxu0 0.0
  %1696 = vmatprep.subr.mxu0 0.0
  %1697 = vmatpush2.msra.mxu0 0.0
  %1698 = vmatprep.subr.mxu0 0.0
  %1699 = vmatpush2.msra.mxu0 0.0
  %1700 = vmatprep.subr.mxu0 0.0
  %1701 = vmatpush2.msra.mxu0 0.0
  %1702 = vmatprep.subr.mxu0 0.0
  %1703 = vmatpush2.msra.mxu0 0.0
  %1704 = vmatprep.subr.mxu0 0.0
  %1705 = vmatpush2.msra.mxu0 0.0
  %1706 = vmatprep.subr.mxu0 0.0
  %1707 = vmatpush2.msra.mxu0 0.0
  %1708 = vmatprep.subr.mxu0 0.0
  %1709 = vmatpush2.msra.mxu0 0.0
  %1710 = vmatprep.subr.mxu0 0.0
  %1711 = vmatpush2.msra.mxu0 0.0
  %1712 = vmatprep.subr.mxu0 0.0
  %1713 = vmatpush2.msra.mxu0 0.0
  %1714 = vmatprep.subr.mxu0 0.0
  %1715 = vmatpush2.msra.mxu0 0.0
  %1716 = vmatprep.subr.mxu0 0.0
  %1717 = vmatpush2.msra.mxu0 0.0
  %1718 = vmatprep.mubr.f32.mxu0 0.0
  %1719 = vmatmul.mubr.f32.gmra.mxu0 %v1429
  %v1720 = vpop.f32.mrf.mxu0
  %v1721 = vadd.f32 0.0, %v1720
  %v1722 = vpop.f32.mrf.mxu0
  %1723 = vdwg.mxu0
  %v1724 = vadd.f32 %v1435, %v1509
  %v1725 = vmul.f32 %v1724, 0.5
  %v1726 = vtanh.pop %v1725
  %v1727 = vmul.f32 %v1726, 0.5
  %v1728 = vadd.f32 %v1727, 0.5
  %v1729 = vadd.f32 %v1436, %v1511
  %v1730 = vmul.f32 %v1729, 0.5
  %v1731 = vtanh.pop %v1730
  %v1732 = vmul.f32 %v1731, 0.5
  %v1733 = vadd.f32 %v1732, 0.5
  %v1734 = vadd.f32 %v1580, %v113
  %v1735 = vmul.f32 %v1728, %v1734
  %v1736 = vadd.f32 %v1437, %v1735
  %v1737 = vtanh.pop %v1736
  %v1738 = vsub.f32 1.0, %v1733
  %v1739 = vmul.f32 %v1738, %v1737
  %v1740 = vmul.f32 %v1733, %v1411
  %v1741 = vadd.f32 %v1739, %v1740
  %v1742 = vadd.f32 %v1439, %v1650
  %v1743 = vmul.f32 %v1742, 0.5
  %v1744 = vtanh.pop %v1743
  %v1745 = vmul.f32 %v1744, 0.5
  %v1746 = vadd.f32 %v1745, 0.5
  %v1747 = vadd.f32 %v1440, %v1652
  %v1748 = vmul.f32 %v1747, 0.5
  %v1749 = vtanh.pop %v1748
  %v1750 = vmul.f32 %v1749, 0.5
  %v1751 = vadd.f32 %v1750, 0.5
  %v1752 = vadd.f32 %v1721, %v115
  %v1753 = vmul.f32 %v1746, %v1752
  %v1754 = vadd.f32 %v1441, %v1753
  %v1755 = vtanh.pop %v1754
  %v1756 = vsub.f32 1.0, %v1751
  %v1757 = vmul.f32 %v1756, %v1755
  %v1758 = vmul.f32 %v1751, %v1429
  %v1759 = vadd.f32 %v1757, %v1758
  %1760 = vst [vmem:[%s1432] sm:$0xff] %v1741
  %1761 = vst [vmem:[%s1430 + $0x8] sm:$0xff] %v1759
  %s1762 = scalar_lea.vmem %s0, 120
  %v1763 = vld [vmem:[%s1762] sm:$0xff]
  %v1764 = vld [vmem:[%s1762 + $0x8] sm:$0xff]
  %v1765 = vld [vmem:[%s1762 + $0x10] sm:$0xff]
  %s1766 = scalar_lea.vmem %s0, 240
  %v1767 = vld [vmem:[%s1766] sm:$0xff]
  %v1768 = vld [vmem:[%s1766 + $0x8] sm:$0xff]
  %v1769 = vld [vmem:[%s1766 + $0x10] sm:$0xff]
  %1770 = vmatprep.subr.mxu0 %v62
  %1771 = vmatpush1.msra.mxu0 %v61
  %1772 = vmatprep.subr.mxu0 %v59
  %1773 = vmatpush1.msra.mxu0 %v58
  %1774 = vmatprep.subr.mxu0 %v56
  %1775 = vmatpush1.msra.mxu0 %v55
  %1776 = vmatprep.subr.mxu0 %v53
  %1777 = vmatpush1.msra.mxu0 %v52
  %1778 = vmatprep.subr.mxu0 %v50
  %1779 = vmatpush1.msra.mxu0 %v49
  %1780 = vmatprep.subr.mxu0 %v47
  %1781 = vmatpush1.msra.mxu0 %v46
  %1782 = vmatprep.subr.mxu0 %v44
  %1783 = vmatpush1.msra.mxu0 %v43
  %1784 = vmatprep.subr.mxu0 %v41
  %1785 = vmatpush1.msra.mxu0 %v40
  %1786 = vmatprep.subr.mxu0 %v38
  %1787 = vmatpush1.msra.mxu0 %v37
  %1788 = vmatprep.subr.mxu0 %v35
  %1789 = vmatpush1.msra.mxu0 %v34
  %1790 = vmatprep.subr.mxu0 %v32
  %1791 = vmatpush1.msra.mxu0 %v31
  %1792 = vmatprep.subr.mxu0 %v29
  %1793 = vmatpush1.msra.mxu0 %v28
  %1794 = vmatprep.subr.mxu0 %v26
  %1795 = vmatpush1.msra.mxu0 %v25
  %1796 = vmatprep.subr.mxu0 %v23
  %1797 = vmatpush1.msra.mxu0 %v22
  %1798 = vmatprep.subr.mxu0 %v20
  %1799 = vmatpush1.msra.mxu0 %v19
  %1800 = vmatprep.subr.mxu0 %v17
  %1801 = vmatpush1.msra.mxu0 %v16
  %1802 = vmatprep.subr.mxu0 0.0
  %1803 = vmatpush2.msra.mxu0 0.0
  %1804 = vmatprep.subr.mxu0 0.0
  %1805 = vmatpush2.msra.mxu0 0.0
  %1806 = vmatprep.subr.mxu0 0.0
  %1807 = vmatpush2.msra.mxu0 0.0
  %1808 = vmatprep.subr.mxu0 0.0
  %1809 = vmatpush2.msra.mxu0 0.0
  %1810 = vmatprep.subr.mxu0 0.0
  %1811 = vmatpush2.msra.mxu0 0.0
  %1812 = vmatprep.subr.mxu0 0.0
  %1813 = vmatpush2.msra.mxu0 0.0
  %1814 = vmatprep.subr.mxu0 0.0
  %1815 = vmatpush2.msra.mxu0 0.0
  %1816 = vmatprep.subr.mxu0 0.0
  %1817 = vmatpush2.msra.mxu0 0.0
  %1818 = vmatprep.subr.mxu0 0.0
  %1819 = vmatpush2.msra.mxu0 0.0
  %1820 = vmatprep.subr.mxu0 0.0
  %1821 = vmatpush2.msra.mxu0 0.0
  %1822 = vmatprep.subr.mxu0 0.0
  %1823 = vmatpush2.msra.mxu0 0.0
  %1824 = vmatprep.subr.mxu0 0.0
  %1825 = vmatpush2.msra.mxu0 0.0
  %1826 = vmatprep.subr.mxu0 0.0
  %1827 = vmatpush2.msra.mxu0 0.0
  %1828 = vmatprep.subr.mxu0 0.0
  %1829 = vmatpush2.msra.mxu0 0.0
  %1830 = vmatprep.subr.mxu0 0.0
  %1831 = vmatpush2.msra.mxu0 0.0
  %1832 = vmatprep.subr.mxu0 0.0
  %1833 = vmatpush2.msra.mxu0 0.0
  %1834 = vmatprep.mubr.f32.mxu0 0.0
  %1835 = vmatmul.mubr.f32.gmra.mxu0 %v1741
  %v1836 = vpop.f32.mrf.mxu0
  %v1837 = vadd.f32 0.0, %v1836
  %v1838 = vpop.f32.mrf.mxu0
  %v1839 = vadd.f32 0.0, %v1838
  %1840 = vdwg.mxu0
  %1841 = vmatprep.subr.mxu0 0.0
  %1842 = vmatpush1.msra.mxu0 %v63
  %1843 = vmatprep.subr.mxu0 0.0
  %1844 = vmatpush1.msra.mxu0 %v60
  %1845 = vmatprep.subr.mxu0 0.0
  %1846 = vmatpush1.msra.mxu0 %v57
  %1847 = vmatprep.subr.mxu0 0.0
  %1848 = vmatpush1.msra.mxu0 %v54
  %1849 = vmatprep.subr.mxu0 0.0
  %1850 = vmatpush1.msra.mxu0 %v51
  %1851 = vmatprep.subr.mxu0 0.0
  %1852 = vmatpush1.msra.mxu0 %v48
  %1853 = vmatprep.subr.mxu0 0.0
  %1854 = vmatpush1.msra.mxu0 %v45
  %1855 = vmatprep.subr.mxu0 0.0
  %1856 = vmatpush1.msra.mxu0 %v42
  %1857 = vmatprep.subr.mxu0 0.0
  %1858 = vmatpush1.msra.mxu0 %v39
  %1859 = vmatprep.subr.mxu0 0.0
  %1860 = vmatpush1.msra.mxu0 %v36
  %1861 = vmatprep.subr.mxu0 0.0
  %1862 = vmatpush1.msra.mxu0 %v33
  %1863 = vmatprep.subr.mxu0 0.0
  %1864 = vmatpush1.msra.mxu0 %v30
  %1865 = vmatprep.subr.mxu0 0.0
  %1866 = vmatpush1.msra.mxu0 %v27
  %1867 = vmatprep.subr.mxu0 0.0
  %1868 = vmatpush1.msra.mxu0 %v24
  %1869 = vmatprep.subr.mxu0 0.0
  %1870 = vmatpush1.msra.mxu0 %v21
  %1871 = vmatprep.subr.mxu0 0.0
  %1872 = vmatpush1.msra.mxu0 %v18
  %1873 = vmatprep.subr.mxu0 0.0
  %1874 = vmatpush2.msra.mxu0 0.0
  %1875 = vmatprep.subr.mxu0 0.0
  %1876 = vmatpush2.msra.mxu0 0.0
  %1877 = vmatprep.subr.mxu0 0.0
  %1878 = vmatpush2.msra.mxu0 0.0
  %1879 = vmatprep.subr.mxu0 0.0
  %1880 = vmatpush2.msra.mxu0 0.0
  %1881 = vmatprep.subr.mxu0 0.0
  %1882 = vmatpush2.msra.mxu0 0.0
  %1883 = vmatprep.subr.mxu0 0.0
  %1884 = vmatpush2.msra.mxu0 0.0
  %1885 = vmatprep.subr.mxu0 0.0
  %1886 = vmatpush2.msra.mxu0 0.0
  %1887 = vmatprep.subr.mxu0 0.0
  %1888 = vmatpush2.msra.mxu0 0.0
  %1889 = vmatprep.subr.mxu0 0.0
  %1890 = vmatpush2.msra.mxu0 0.0
  %1891 = vmatprep.subr.mxu0 0.0
  %1892 = vmatpush2.msra.mxu0 0.0
  %1893 = vmatprep.subr.mxu0 0.0
  %1894 = vmatpush2.msra.mxu0 0.0
  %1895 = vmatprep.subr.mxu0 0.0
  %1896 = vmatpush2.msra.mxu0 0.0
  %1897 = vmatprep.subr.mxu0 0.0
  %1898 = vmatpush2.msra.mxu0 0.0
  %1899 = vmatprep.subr.mxu0 0.0
  %1900 = vmatpush2.msra.mxu0 0.0
  %1901 = vmatprep.subr.mxu0 0.0
  %1902 = vmatpush2.msra.mxu0 0.0
  %1903 = vmatprep.subr.mxu0 0.0
  %1904 = vmatpush2.msra.mxu0 0.0
  %1905 = vmatprep.mubr.f32.mxu0 0.0
  %1906 = vmatmul.mubr.f32.gmra.mxu0 %v1741
  %v1907 = vpop.f32.mrf.mxu0
  %v1908 = vadd.f32 0.0, %v1907
  %v1909 = vpop.f32.mrf.mxu0
  %1910 = vdwg.mxu0
  %1911 = vmatprep.subr.mxu0 %v111
  %1912 = vmatpush1.msra.mxu0 %v110
  %1913 = vmatprep.subr.mxu0 %v108
  %1914 = vmatpush1.msra.mxu0 %v107
  %1915 = vmatprep.subr.mxu0 %v105
  %1916 = vmatpush1.msra.mxu0 %v104
  %1917 = vmatprep.subr.mxu0 %v102
  %1918 = vmatpush1.msra.mxu0 %v101
  %1919 = vmatprep.subr.mxu0 %v99
  %1920 = vmatpush1.msra.mxu0 %v98
  %1921 = vmatprep.subr.mxu0 %v96
  %1922 = vmatpush1.msra.mxu0 %v95
  %1923 = vmatprep.subr.mxu0 %v93
  %1924 = vmatpush1.msra.mxu0 %v92
  %1925 = vmatprep.subr.mxu0 %v90
  %1926 = vmatpush1.msra.mxu0 %v89
  %1927 = vmatprep.subr.mxu0 %v87
  %1928 = vmatpush1.msra.mxu0 %v86
  %1929 = vmatprep.subr.mxu0 %v84
  %1930 = vmatpush1.msra.mxu0 %v83
  %1931 = vmatprep.subr.mxu0 %v81
  %1932 = vmatpush1.msra.mxu0 %v80
  %1933 = vmatprep.subr.mxu0 %v78
  %1934 = vmatpush1.msra.mxu0 %v77
  %1935 = vmatprep.subr.mxu0 %v75
  %1936 = vmatpush1.msra.mxu0 %v74
  %1937 = vmatprep.subr.mxu0 %v72
  %1938 = vmatpush1.msra.mxu0 %v71
  %1939 = vmatprep.subr.mxu0 %v69
  %1940 = vmatpush1.msra.mxu0 %v68
  %1941 = vmatprep.subr.mxu0 %v66
  %1942 = vmatpush1.msra.mxu0 %v65
  %1943 = vmatprep.subr.mxu0 0.0
  %1944 = vmatpush2.msra.mxu0 0.0
  %1945 = vmatprep.subr.mxu0 0.0
  %1946 = vmatpush2.msra.mxu0 0.0
  %1947 = vmatprep.subr.mxu0 0.0
  %1948 = vmatpush2.msra.mxu0 0.0
  %1949 = vmatprep.subr.mxu0 0.0
  %1950 = vmatpush2.msra.mxu0 0.0
  %1951 = vmatprep.subr.mxu0 0.0
  %1952 = vmatpush2.msra.mxu0 0.0
  %1953 = vmatprep.subr.mxu0 0.0
  %1954 = vmatpush2.msra.mxu0 0.0
  %1955 = vmatprep.subr.mxu0 0.0
  %1956 = vmatpush2.msra.mxu0 0.0
  %1957 = vmatprep.subr.mxu0 0.0
  %1958 = vmatpush2.msra.mxu0 0.0
  %1959 = vmatprep.subr.mxu0 0.0
  %1960 = vmatpush2.msra.mxu0 0.0
  %1961 = vmatprep.subr.mxu0 0.0
  %1962 = vmatpush2.msra.mxu0 0.0
  %1963 = vmatprep.subr.mxu0 0.0
  %1964 = vmatpush2.msra.mxu0 0.0
  %1965 = vmatprep.subr.mxu0 0.0
  %1966 = vmatpush2.msra.mxu0 0.0
  %1967 = vmatprep.subr.mxu0 0.0
  %1968 = vmatpush2.msra.mxu0 0.0
  %1969 = vmatprep.subr.mxu0 0.0
  %1970 = vmatpush2.msra.mxu0 0.0
  %1971 = vmatprep.subr.mxu0 0.0
  %1972 = vmatpush2.msra.mxu0 0.0
  %1973 = vmatprep.subr.mxu0 0.0
  %1974 = vmatpush2.msra.mxu0 0.0
  %1975 = vmatprep.mubr.f32.mxu0 0.0
  %1976 = vmatmul.mubr.f32.gmra.mxu0 %v1759
  %v1977 = vpop.f32.mrf.mxu0
  %v1978 = vadd.f32 0.0, %v1977
  %v1979 = vpop.f32.mrf.mxu0
  %v1980 = vadd.f32 0.0, %v1979
  %1981 = vdwg.mxu0
  %1982 = vmatprep.subr.mxu0 0.0
  %1983 = vmatpush1.msra.mxu0 %v112
  %1984 = vmatprep.subr.mxu0 0.0
  %1985 = vmatpush1.msra.mxu0 %v109
  %1986 = vmatprep.subr.mxu0 0.0
  %1987 = vmatpush1.msra.mxu0 %v106
  %1988 = vmatprep.subr.mxu0 0.0
  %1989 = vmatpush1.msra.mxu0 %v103
  %1990 = vmatprep.subr.mxu0 0.0
  %1991 = vmatpush1.msra.mxu0 %v100
  %1992 = vmatprep.subr.mxu0 0.0
  %1993 = vmatpush1.msra.mxu0 %v97
  %1994 = vmatprep.subr.mxu0 0.0
  %1995 = vmatpush1.msra.mxu0 %v94
  %1996 = vmatprep.subr.mxu0 0.0
  %1997 = vmatpush1.msra.mxu0 %v91
  %1998 = vmatprep.subr.mxu0 0.0
  %1999 = vmatpush1.msra.mxu0 %v88
  %2000 = vmatprep.subr.mxu0 0.0
  %2001 = vmatpush1.msra.mxu0 %v85
  %2002 = vmatprep.subr.mxu0 0.0
  %2003 = vmatpush1.msra.mxu0 %v82
  %2004 = vmatprep.subr.mxu0 0.0
  %2005 = vmatpush1.msra.mxu0 %v79
  %2006 = vmatprep.subr.mxu0 0.0
  %2007 = vmatpush1.msra.mxu0 %v76
  %2008 = vmatprep.subr.mxu0 0.0
  %2009 = vmatpush1.msra.mxu0 %v73
  %2010 = vmatprep.subr.mxu0 0.0
  %2011 = vmatpush1.msra.mxu0 %v70
  %2012 = vmatprep.subr.mxu0 0.0
  %2013 = vmatpush1.msra.mxu0 %v67
  %2014 = vmatprep.subr.mxu0 0.0
  %2015 = vmatpush2.msra.mxu0 0.0
  %2016 = vmatprep.subr.mxu0 0.0
  %2017 = vmatpush2.msra.mxu0 0.0
  %2018 = vmatprep.subr.mxu0 0.0
  %2019 = vmatpush2.msra.mxu0 0.0
  %2020 = vmatprep.subr.mxu0 0.0
  %2021 = vmatpush2.msra.mxu0 0.0
  %2022 = vmatprep.subr.mxu0 0.0
  %2023 = vmatpush2.msra.mxu0 0.0
  %2024 = vmatprep.subr.mxu0 0.0
  %2025 = vmatpush2.msra.mxu0 0.0
  %2026 = vmatprep.subr.mxu0 0.0
  %2027 = vmatpush2.msra.mxu0 0.0
  %2028 = vmatprep.subr.mxu0 0.0
  %2029 = vmatpush2.msra.mxu0 0.0
  %2030 = vmatprep.subr.mxu0 0.0
  %2031 = vmatpush2.msra.mxu0 0.0
  %2032 = vmatprep.subr.mxu0 0.0
  %2033 = vmatpush2.msra.mxu0 0.0
  %2034 = vmatprep.subr.mxu0 0.0
  %2035 = vmatpush2.msra.mxu0 0.0
  %2036 = vmatprep.subr.mxu0 0.0
  %2037 = vmatpush2.msra.mxu0 0.0
  %2038 = vmatprep.subr.mxu0 0.0
  %2039 = vmatpush2.msra.mxu0 0.0
  %2040 = vmatprep.subr.mxu0 0.0
  %2041 = vmatpush2.msra.mxu0 0.0
  %2042 = vmatprep.subr.mxu0 0.0
  %2043 = vmatpush2.msra.mxu0 0.0
  %2044 = vmatprep.subr.mxu0 0.0
  %2045 = vmatpush2.msra.mxu0 0.0
  %2046 = vmatprep.mubr.f32.mxu0 0.0
  %2047 = vmatmul.mubr.f32.gmra.mxu0 %v1759
  %v2048 = vpop.f32.mrf.mxu0
  %v2049 = vadd.f32 0.0, %v2048
  %v2050 = vpop.f32.mrf.mxu0
  %2051 = vdwg.mxu0
  %v2052 = vadd.f32 %v1763, %v1837
  %v2053 = vmul.f32 %v2052, 0.5
  %v2054 = vtanh.pop %v2053
  %v2055 = vmul.f32 %v2054, 0.5
  %v2056 = vadd.f32 %v2055, 0.5
  %v2057 = vadd.f32 %v1764, %v1839
  %v2058 = vmul.f32 %v2057, 0.5
  %v2059 = vtanh.pop %v2058
  %v2060 = vmul.f32 %v2059, 0.5
  %v2061 = vadd.f32 %v2060, 0.5
  %v2062 = vadd.f32 %v1908, %v113
  %v2063 = vmul.f32 %v2056, %v2062
  %v2064 = vadd.f32 %v1765, %v2063
  %v2065 = vtanh.pop %v2064
  %v2066 = vsub.f32 1.0, %v2061
  %v2067 = vmul.f32 %v2066, %v2065
  %v2068 = vmul.f32 %v2061, %v1741
  %v2069 = vadd.f32 %v2067, %v2068
  %v2070 = vadd.f32 %v1767, %v1978
  %v2071 = vmul.f32 %v2070, 0.5
  %v2072 = vtanh.pop %v2071
  %v2073 = vmul.f32 %v2072, 0.5
  %v2074 = vadd.f32 %v2073, 0.5
  %v2075 = vadd.f32 %v1768, %v1980
  %v2076 = vmul.f32 %v2075, 0.5
  %v2077 = vtanh.pop %v2076
  %v2078 = vmul.f32 %v2077, 0.5
  %v2079 = vadd.f32 %v2078, 0.5
  %v2080 = vadd.f32 %v2049, %v115
  %v2081 = vmul.f32 %v2074, %v2080
  %v2082 = vadd.f32 %v1769, %v2081
  %v2083 = vtanh.pop %v2082
  %v2084 = vsub.f32 1.0, %v2079
  %v2085 = vmul.f32 %v2084, %v2083
  %v2086 = vmul.f32 %v2079, %v1759
  %v2087 = vadd.f32 %v2085, %v2086
  %2088 = vst [vmem:[%s1102] sm:$0xff] %v2069
  %2089 = vst [vmem:[%s1100 + $0x8] sm:$0xff] %v2087
  %s2090 = scalar_lea.vmem %s0, 144
  %v2091 = vld [vmem:[%s2090] sm:$0xff]
  %v2092 = vld [vmem:[%s2090 + $0x8] sm:$0xff]
  %v2093 = vld [vmem:[%s2090 + $0x10] sm:$0xff]
  %s2094 = scalar_lea.vmem %s0, 216
  %v2095 = vld [vmem:[%s2094] sm:$0xff]
  %v2096 = vld [vmem:[%s2094 + $0x8] sm:$0xff]
  %v2097 = vld [vmem:[%s2094 + $0x10] sm:$0xff]
  %2098 = vmatprep.subr.mxu0 %v62
  %2099 = vmatpush1.msra.mxu0 %v61
  %2100 = vmatprep.subr.mxu0 %v59
  %2101 = vmatpush1.msra.mxu0 %v58
  %2102 = vmatprep.subr.mxu0 %v56
  %2103 = vmatpush1.msra.mxu0 %v55
  %2104 = vmatprep.subr.mxu0 %v53
  %2105 = vmatpush1.msra.mxu0 %v52
  %2106 = vmatprep.subr.mxu0 %v50
  %2107 = vmatpush1.msra.mxu0 %v49
  %2108 = vmatprep.subr.mxu0 %v47
  %2109 = vmatpush1.msra.mxu0 %v46
  %2110 = vmatprep.subr.mxu0 %v44
  %2111 = vmatpush1.msra.mxu0 %v43
  %2112 = vmatprep.subr.mxu0 %v41
  %2113 = vmatpush1.msra.mxu0 %v40
  %2114 = vmatprep.subr.mxu0 %v38
  %2115 = vmatpush1.msra.mxu0 %v37
  %2116 = vmatprep.subr.mxu0 %v35
  %2117 = vmatpush1.msra.mxu0 %v34
  %2118 = vmatprep.subr.mxu0 %v32
  %2119 = vmatpush1.msra.mxu0 %v31
  %2120 = vmatprep.subr.mxu0 %v29
  %2121 = vmatpush1.msra.mxu0 %v28
  %2122 = vmatprep.subr.mxu0 %v26
  %2123 = vmatpush1.msra.mxu0 %v25
  %2124 = vmatprep.subr.mxu0 %v23
  %2125 = vmatpush1.msra.mxu0 %v22
  %2126 = vmatprep.subr.mxu0 %v20
  %2127 = vmatpush1.msra.mxu0 %v19
  %2128 = vmatprep.subr.mxu0 %v17
  %2129 = vmatpush1.msra.mxu0 %v16
  %2130 = vmatprep.subr.mxu0 0.0
  %2131 = vmatpush2.msra.mxu0 0.0
  %2132 = vmatprep.subr.mxu0 0.0
  %2133 = vmatpush2.msra.mxu0 0.0
  %2134 = vmatprep.subr.mxu0 0.0
  %2135 = vmatpush2.msra.mxu0 0.0
  %2136 = vmatprep.subr.mxu0 0.0
  %2137 = vmatpush2.msra.mxu0 0.0
  %2138 = vmatprep.subr.mxu0 0.0
  %2139 = vmatpush2.msra.mxu0 0.0
  %2140 = vmatprep.subr.mxu0 0.0
  %2141 = vmatpush2.msra.mxu0 0.0
  %2142 = vmatprep.subr.mxu0 0.0
  %2143 = vmatpush2.msra.mxu0 0.0
  %2144 = vmatprep.subr.mxu0 0.0
  %2145 = vmatpush2.msra.mxu0 0.0
  %2146 = vmatprep.subr.mxu0 0.0
  %2147 = vmatpush2.msra.mxu0 0.0
  %2148 = vmatprep.subr.mxu0 0.0
  %2149 = vmatpush2.msra.mxu0 0.0
  %2150 = vmatprep.subr.mxu0 0.0
  %2151 = vmatpush2.msra.mxu0 0.0
  %2152 = vmatprep.subr.mxu0 0.0
  %2153 = vmatpush2.msra.mxu0 0.0
  %2154 = vmatprep.subr.mxu0 0.0
  %2155 = vmatpush2.msra.mxu0 0.0
  %2156 = vmatprep.subr.mxu0 0.0
  %2157 = vmatpush2.msra.mxu0 0.0
  %2158 = vmatprep.subr.mxu0 0.0
  %2159 = vmatpush2.msra.mxu0 0.0
  %2160 = vmatprep.subr.mxu0 0.0
  %2161 = vmatpush2.msra.mxu0 0.0
  %2162 = vmatprep.mubr.f32.mxu0 0.0
  %2163 = vmatmul.mubr.f32.gmra.mxu0 %v2069
  %v2164 = vpop.f32.mrf.mxu0
  %v2165 = vadd.f32 0.0, %v2164
  %v2166 = vpop.f32.mrf.mxu0
  %v2167 = vadd.f32 0.0, %v2166
  %2168 = vdwg.mxu0
  %2169 = vmatprep.subr.mxu0 0.0
  %2170 = vmatpush1.msra.mxu0 %v63
  %2171 = vmatprep.subr.mxu0 0.0
  %2172 = vmatpush1.msra.mxu0 %v60
  %2173 = vmatprep.subr.mxu0 0.0
  %2174 = vmatpush1.msra.mxu0 %v57
  %2175 = vmatprep.subr.mxu0 0.0
  %2176 = vmatpush1.msra.mxu0 %v54
  %2177 = vmatprep.subr.mxu0 0.0
  %2178 = vmatpush1.msra.mxu0 %v51
  %2179 = vmatprep.subr.mxu0 0.0
  %2180 = vmatpush1.msra.mxu0 %v48
  %2181 = vmatprep.subr.mxu0 0.0
  %2182 = vmatpush1.msra.mxu0 %v45
  %2183 = vmatprep.subr.mxu0 0.0
  %2184 = vmatpush1.msra.mxu0 %v42
  %2185 = vmatprep.subr.mxu0 0.0
  %2186 = vmatpush1.msra.mxu0 %v39
  %2187 = vmatprep.subr.mxu0 0.0
  %2188 = vmatpush1.msra.mxu0 %v36
  %2189 = vmatprep.subr.mxu0 0.0
  %2190 = vmatpush1.msra.mxu0 %v33
  %2191 = vmatprep.subr.mxu0 0.0
  %2192 = vmatpush1.msra.mxu0 %v30
  %2193 = vmatprep.subr.mxu0 0.0
  %2194 = vmatpush1.msra.mxu0 %v27
  %2195 = vmatprep.subr.mxu0 0.0
  %2196 = vmatpush1.msra.mxu0 %v24
  %2197 = vmatprep.subr.mxu0 0.0
  %2198 = vmatpush1.msra.mxu0 %v21
  %2199 = vmatprep.subr.mxu0 0.0
  %2200 = vmatpush1.msra.mxu0 %v18
  %2201 = vmatprep.subr.mxu0 0.0
  %2202 = vmatpush2.msra.mxu0 0.0
  %2203 = vmatprep.subr.mxu0 0.0
  %2204 = vmatpush2.msra.mxu0 0.0
  %2205 = vmatprep.subr.mxu0 0.0
  %2206 = vmatpush2.msra.mxu0 0.0
  %2207 = vmatprep.subr.mxu0 0.0
  %2208 = vmatpush2.msra.mxu0 0.0
  %2209 = vmatprep.subr.mxu0 0.0
  %2210 = vmatpush2.msra.mxu0 0.0
  %2211 = vmatprep.subr.mxu0 0.0
  %2212 = vmatpush2.msra.mxu0 0.0
  %2213 = vmatprep.subr.mxu0 0.0
  %2214 = vmatpush2.msra.mxu0 0.0
  %2215 = vmatprep.subr.mxu0 0.0
  %2216 = vmatpush2.msra.mxu0 0.0
  %2217 = vmatprep.subr.mxu0 0.0
  %2218 = vmatpush2.msra.mxu0 0.0
  %2219 = vmatprep.subr.mxu0 0.0
  %2220 = vmatpush2.msra.mxu0 0.0
  %2221 = vmatprep.subr.mxu0 0.0
  %2222 = vmatpush2.msra.mxu0 0.0
  %2223 = vmatprep.subr.mxu0 0.0
  %2224 = vmatpush2.msra.mxu0 0.0
  %2225 = vmatprep.subr.mxu0 0.0
  %2226 = vmatpush2.msra.mxu0 0.0
  %2227 = vmatprep.subr.mxu0 0.0
  %2228 = vmatpush2.msra.mxu0 0.0
  %2229 = vmatprep.subr.mxu0 0.0
  %2230 = vmatpush2.msra.mxu0 0.0
  %2231 = vmatprep.subr.mxu0 0.0
  %2232 = vmatpush2.msra.mxu0 0.0
  %2233 = vmatprep.mubr.f32.mxu0 0.0
  %2234 = vmatmul.mubr.f32.gmra.mxu0 %v2069
  %v2235 = vpop.f32.mrf.mxu0
  %v2236 = vadd.f32 0.0, %v2235
  %v2237 = vpop.f32.mrf.mxu0
  %2238 = vdwg.mxu0
  %2239 = vmatprep.subr.mxu0 %v111
  %2240 = vmatpush1.msra.mxu0 %v110
  %2241 = vmatprep.subr.mxu0 %v108
  %2242 = vmatpush1.msra.mxu0 %v107
  %2243 = vmatprep.subr.mxu0 %v105
  %2244 = vmatpush1.msra.mxu0 %v104
  %2245 = vmatprep.subr.mxu0 %v102
  %2246 = vmatpush1.msra.mxu0 %v101
  %2247 = vmatprep.subr.mxu0 %v99
  %2248 = vmatpush1.msra.mxu0 %v98
  %2249 = vmatprep.subr.mxu0 %v96
  %2250 = vmatpush1.msra.mxu0 %v95
  %2251 = vmatprep.subr.mxu0 %v93
  %2252 = vmatpush1.msra.mxu0 %v92
  %2253 = vmatprep.subr.mxu0 %v90
  %2254 = vmatpush1.msra.mxu0 %v89
  %2255 = vmatprep.subr.mxu0 %v87
  %2256 = vmatpush1.msra.mxu0 %v86
  %2257 = vmatprep.subr.mxu0 %v84
  %2258 = vmatpush1.msra.mxu0 %v83
  %2259 = vmatprep.subr.mxu0 %v81
  %2260 = vmatpush1.msra.mxu0 %v80
  %2261 = vmatprep.subr.mxu0 %v78
  %2262 = vmatpush1.msra.mxu0 %v77
  %2263 = vmatprep.subr.mxu0 %v75
  %2264 = vmatpush1.msra.mxu0 %v74
  %2265 = vmatprep.subr.mxu0 %v72
  %2266 = vmatpush1.msra.mxu0 %v71
  %2267 = vmatprep.subr.mxu0 %v69
  %2268 = vmatpush1.msra.mxu0 %v68
  %2269 = vmatprep.subr.mxu0 %v66
  %2270 = vmatpush1.msra.mxu0 %v65
  %2271 = vmatprep.subr.mxu0 0.0
  %2272 = vmatpush2.msra.mxu0 0.0
  %2273 = vmatprep.subr.mxu0 0.0
  %2274 = vmatpush2.msra.mxu0 0.0
  %2275 = vmatprep.subr.mxu0 0.0
  %2276 = vmatpush2.msra.mxu0 0.0
  %2277 = vmatprep.subr.mxu0 0.0
  %2278 = vmatpush2.msra.mxu0 0.0
  %2279 = vmatprep.subr.mxu0 0.0
  %2280 = vmatpush2.msra.mxu0 0.0
  %2281 = vmatprep.subr.mxu0 0.0
  %2282 = vmatpush2.msra.mxu0 0.0
  %2283 = vmatprep.subr.mxu0 0.0
  %2284 = vmatpush2.msra.mxu0 0.0
  %2285 = vmatprep.subr.mxu0 0.0
  %2286 = vmatpush2.msra.mxu0 0.0
  %2287 = vmatprep.subr.mxu0 0.0
  %2288 = vmatpush2.msra.mxu0 0.0
  %2289 = vmatprep.subr.mxu0 0.0
  %2290 = vmatpush2.msra.mxu0 0.0
  %2291 = vmatprep.subr.mxu0 0.0
  %2292 = vmatpush2.msra.mxu0 0.0
  %2293 = vmatprep.subr.mxu0 0.0
  %2294 = vmatpush2.msra.mxu0 0.0
  %2295 = vmatprep.subr.mxu0 0.0
  %2296 = vmatpush2.msra.mxu0 0.0
  %2297 = vmatprep.subr.mxu0 0.0
  %2298 = vmatpush2.msra.mxu0 0.0
  %2299 = vmatprep.subr.mxu0 0.0
  %2300 = vmatpush2.msra.mxu0 0.0
  %2301 = vmatprep.subr.mxu0 0.0
  %2302 = vmatpush2.msra.mxu0 0.0
  %2303 = vmatprep.mubr.f32.mxu0 0.0
  %2304 = vmatmul.mubr.f32.gmra.mxu0 %v2087
  %v2305 = vpop.f32.mrf.mxu0
  %v2306 = vadd.f32 0.0, %v2305
  %v2307 = vpop.f32.mrf.mxu0
  %v2308 = vadd.f32 0.0, %v2307
  %2309 = vdwg.mxu0
  %2310 = vmatprep.subr.mxu0 0.0
  %2311 = vmatpush1.msra.mxu0 %v112
  %2312 = vmatprep.subr.mxu0 0.0
  %2313 = vmatpush1.msra.mxu0 %v109
  %2314 = vmatprep.subr.mxu0 0.0
  %2315 = vmatpush1.msra.mxu0 %v106
  %2316 = vmatprep.subr.mxu0 0.0
  %2317 = vmatpush1.msra.mxu0 %v103
  %2318 = vmatprep.subr.mxu0 0.0
  %2319 = vmatpush1.msra.mxu0 %v100
  %2320 = vmatprep.subr.mxu0 0.0
  %2321 = vmatpush1.msra.mxu0 %v97
  %2322 = vmatprep.subr.mxu0 0.0
  %2323 = vmatpush1.msra.mxu0 %v94
  %2324 = vmatprep.subr.mxu0 0.0
  %2325 = vmatpush1.msra.mxu0 %v91
  %2326 = vmatprep.subr.mxu0 0.0
  %2327 = vmatpush1.msra.mxu0 %v88
  %2328 = vmatprep.subr.mxu0 0.0
  %2329 = vmatpush1.msra.mxu0 %v85
  %2330 = vmatprep.subr.mxu0 0.0
  %2331 = vmatpush1.msra.mxu0 %v82
  %2332 = vmatprep.subr.mxu0 0.0
  %2333 = vmatpush1.msra.mxu0 %v79
  %2334 = vmatprep.subr.mxu0 0.0
  %2335 = vmatpush1.msra.mxu0 %v76
  %2336 = vmatprep.subr.mxu0 0.0
  %2337 = vmatpush1.msra.mxu0 %v73
  %2338 = vmatprep.subr.mxu0 0.0
  %2339 = vmatpush1.msra.mxu0 %v70
  %2340 = vmatprep.subr.mxu0 0.0
  %2341 = vmatpush1.msra.mxu0 %v67
  %2342 = vmatprep.subr.mxu0 0.0
  %2343 = vmatpush2.msra.mxu0 0.0
  %2344 = vmatprep.subr.mxu0 0.0
  %2345 = vmatpush2.msra.mxu0 0.0
  %2346 = vmatprep.subr.mxu0 0.0
  %2347 = vmatpush2.msra.mxu0 0.0
  %2348 = vmatprep.subr.mxu0 0.0
  %2349 = vmatpush2.msra.mxu0 0.0
  %2350 = vmatprep.subr.mxu0 0.0
  %2351 = vmatpush2.msra.mxu0 0.0
  %2352 = vmatprep.subr.mxu0 0.0
  %2353 = vmatpush2.msra.mxu0 0.0
  %2354 = vmatprep.subr.mxu0 0.0
  %2355 = vmatpush2.msra.mxu0 0.0
  %2356 = vmatprep.subr.mxu0 0.0
  %2357 = vmatpush2.msra.mxu0 0.0
  %2358 = vmatprep.subr.mxu0 0.0
  %2359 = vmatpush2.msra.mxu0 0.0
  %2360 = vmatprep.subr.mxu0 0.0
  %2361 = vmatpush2.msra.mxu0 0.0
  %2362 = vmatprep.subr.mxu0 0.0
  %2363 = vmatpush2.msra.mxu0 0.0
  %2364 = vmatprep.subr.mxu0 0.0
  %2365 = vmatpush2.msra.mxu0 0.0
  %2366 = vmatprep.subr.mxu0 0.0
  %2367 = vmatpush2.msra.mxu0 0.0
  %2368 = vmatprep.subr.mxu0 0.0
  %2369 = vmatpush2.msra.mxu0 0.0
  %2370 = vmatprep.subr.mxu0 0.0
  %2371 = vmatpush2.msra.mxu0 0.0
  %2372 = vmatprep.subr.mxu0 0.0
  %2373 = vmatpush2.msra.mxu0 0.0
  %2374 = vmatprep.mubr.f32.mxu0 0.0
  %2375 = vmatmul.mubr.f32.gmra.mxu0 %v2087
  %v2376 = vpop.f32.mrf.mxu0
  %v2377 = vadd.f32 0.0, %v2376
  %v2378 = vpop.f32.mrf.mxu0
  %2379 = vdwg.mxu0
  %v2380 = vadd.f32 %v2091, %v2165
  %v2381 = vmul.f32 %v2380, 0.5
  %v2382 = vtanh.pop %v2381
  %v2383 = vmul.f32 %v2382, 0.5
  %v2384 = vadd.f32 %v2383, 0.5
  %v2385 = vadd.f32 %v2092, %v2167
  %v2386 = vmul.f32 %v2385, 0.5
  %v2387 = vtanh.pop %v2386
  %v2388 = vmul.f32 %v2387, 0.5
  %v2389 = vadd.f32 %v2388, 0.5
  %v2390 = vadd.f32 %v2236, %v113
  %v2391 = vmul.f32 %v2384, %v2390
  %v2392 = vadd.f32 %v2093, %v2391
  %v2393 = vtanh.pop %v2392
  %v2394 = vsub.f32 1.0, %v2389
  %v2395 = vmul.f32 %v2394, %v2393
  %v2396 = vmul.f32 %v2389, %v2069
  %v2397 = vadd.f32 %v2395, %v2396
  %v2398 = vadd.f32 %v2095, %v2306
  %v2399 = vmul.f32 %v2398, 0.5
  %v2400 = vtanh.pop %v2399
  %v2401 = vmul.f32 %v2400, 0.5
  %v2402 = vadd.f32 %v2401, 0.5
  %v2403 = vadd.f32 %v2096, %v2308
  %v2404 = vmul.f32 %v2403, 0.5
  %v2405 = vtanh.pop %v2404
  %v2406 = vmul.f32 %v2405, 0.5
  %v2407 = vadd.f32 %v2406, 0.5
  %v2408 = vadd.f32 %v2377, %v115
  %v2409 = vmul.f32 %v2402, %v2408
  %v2410 = vadd.f32 %v2097, %v2409
  %v2411 = vtanh.pop %v2410
  %v2412 = vsub.f32 1.0, %v2407
  %v2413 = vmul.f32 %v2412, %v2411
  %v2414 = vmul.f32 %v2407, %v2087
  %v2415 = vadd.f32 %v2413, %v2414
  %2416 = vst [vmem:[%s772] sm:$0xff] %v2397
  %2417 = vst [vmem:[%s770 + $0x8] sm:$0xff] %v2415
  %s2418 = scalar_lea.vmem %s0, 168
  %v2419 = vld [vmem:[%s2418] sm:$0xff]
  %v2420 = vld [vmem:[%s2418 + $0x8] sm:$0xff]
  %v2421 = vld [vmem:[%s2418 + $0x10] sm:$0xff]
  %s2422 = scalar_lea.vmem %s0, 192
  %v2423 = vld [vmem:[%s2422] sm:$0xff]
  %v2424 = vld [vmem:[%s2422 + $0x8] sm:$0xff]
  %v2425 = vld [vmem:[%s2422 + $0x10] sm:$0xff]
  %2426 = vmatprep.subr.mxu0 %v62
  %2427 = vmatpush1.msra.mxu0 %v61
  %2428 = vmatprep.subr.mxu0 %v59
  %2429 = vmatpush1.msra.mxu0 %v58
  %2430 = vmatprep.subr.mxu0 %v56
  %2431 = vmatpush1.msra.mxu0 %v55
  %2432 = vmatprep.subr.mxu0 %v53
  %2433 = vmatpush1.msra.mxu0 %v52
  %2434 = vmatprep.subr.mxu0 %v50
  %2435 = vmatpush1.msra.mxu0 %v49
  %2436 = vmatprep.subr.mxu0 %v47
  %2437 = vmatpush1.msra.mxu0 %v46
  %2438 = vmatprep.subr.mxu0 %v44
  %2439 = vmatpush1.msra.mxu0 %v43
  %2440 = vmatprep.subr.mxu0 %v41
  %2441 = vmatpush1.msra.mxu0 %v40
  %2442 = vmatprep.subr.mxu0 %v38
  %2443 = vmatpush1.msra.mxu0 %v37
  %2444 = vmatprep.subr.mxu0 %v35
  %2445 = vmatpush1.msra.mxu0 %v34
  %2446 = vmatprep.subr.mxu0 %v32
  %2447 = vmatpush1.msra.mxu0 %v31
  %2448 = vmatprep.subr.mxu0 %v29
  %2449 = vmatpush1.msra.mxu0 %v28
  %2450 = vmatprep.subr.mxu0 %v26
  %2451 = vmatpush1.msra.mxu0 %v25
  %2452 = vmatprep.subr.mxu0 %v23
  %2453 = vmatpush1.msra.mxu0 %v22
  %2454 = vmatprep.subr.mxu0 %v20
  %2455 = vmatpush1.msra.mxu0 %v19
  %2456 = vmatprep.subr.mxu0 %v17
  %2457 = vmatpush1.msra.mxu0 %v16
  %2458 = vmatprep.subr.mxu0 0.0
  %2459 = vmatpush2.msra.mxu0 0.0
  %2460 = vmatprep.subr.mxu0 0.0
  %2461 = vmatpush2.msra.mxu0 0.0
  %2462 = vmatprep.subr.mxu0 0.0
  %2463 = vmatpush2.msra.mxu0 0.0
  %2464 = vmatprep.subr.mxu0 0.0
  %2465 = vmatpush2.msra.mxu0 0.0
  %2466 = vmatprep.subr.mxu0 0.0
  %2467 = vmatpush2.msra.mxu0 0.0
  %2468 = vmatprep.subr.mxu0 0.0
  %2469 = vmatpush2.msra.mxu0 0.0
  %2470 = vmatprep.subr.mxu0 0.0
  %2471 = vmatpush2.msra.mxu0 0.0
  %2472 = vmatprep.subr.mxu0 0.0
  %2473 = vmatpush2.msra.mxu0 0.0
  %2474 = vmatprep.subr.mxu0 0.0
  %2475 = vmatpush2.msra.mxu0 0.0
  %2476 = vmatprep.subr.mxu0 0.0
  %2477 = vmatpush2.msra.mxu0 0.0
  %2478 = vmatprep.subr.mxu0 0.0
  %2479 = vmatpush2.msra.mxu0 0.0
  %2480 = vmatprep.subr.mxu0 0.0
  %2481 = vmatpush2.msra.mxu0 0.0
  %2482 = vmatprep.subr.mxu0 0.0
  %2483 = vmatpush2.msra.mxu0 0.0
  %2484 = vmatprep.subr.mxu0 0.0
  %2485 = vmatpush2.msra.mxu0 0.0
  %2486 = vmatprep.subr.mxu0 0.0
  %2487 = vmatpush2.msra.mxu0 0.0
  %2488 = vmatprep.subr.mxu0 0.0
  %2489 = vmatpush2.msra.mxu0 0.0
  %2490 = vmatprep.mubr.f32.mxu0 0.0
  %2491 = vmatmul.mubr.f32.gmra.mxu0 %v2397
  %v2492 = vpop.f32.mrf.mxu0
  %v2493 = vadd.f32 0.0, %v2492
  %v2494 = vpop.f32.mrf.mxu0
  %v2495 = vadd.f32 0.0, %v2494
  %2496 = vdwg.mxu0
  %2497 = vmatprep.subr.mxu0 0.0
  %2498 = vmatpush1.msra.mxu0 %v63
  %2499 = vmatprep.subr.mxu0 0.0
  %2500 = vmatpush1.msra.mxu0 %v60
  %2501 = vmatprep.subr.mxu0 0.0
  %2502 = vmatpush1.msra.mxu0 %v57
  %2503 = vmatprep.subr.mxu0 0.0
  %2504 = vmatpush1.msra.mxu0 %v54
  %2505 = vmatprep.subr.mxu0 0.0
  %2506 = vmatpush1.msra.mxu0 %v51
  %2507 = vmatprep.subr.mxu0 0.0
  %2508 = vmatpush1.msra.mxu0 %v48
  %2509 = vmatprep.subr.mxu0 0.0
  %2510 = vmatpush1.msra.mxu0 %v45
  %2511 = vmatprep.subr.mxu0 0.0
  %2512 = vmatpush1.msra.mxu0 %v42
  %2513 = vmatprep.subr.mxu0 0.0
  %2514 = vmatpush1.msra.mxu0 %v39
  %2515 = vmatprep.subr.mxu0 0.0
  %2516 = vmatpush1.msra.mxu0 %v36
  %2517 = vmatprep.subr.mxu0 0.0
  %2518 = vmatpush1.msra.mxu0 %v33
  %2519 = vmatprep.subr.mxu0 0.0
  %2520 = vmatpush1.msra.mxu0 %v30
  %2521 = vmatprep.subr.mxu0 0.0
  %2522 = vmatpush1.msra.mxu0 %v27
  %2523 = vmatprep.subr.mxu0 0.0
  %2524 = vmatpush1.msra.mxu0 %v24
  %2525 = vmatprep.subr.mxu0 0.0
  %2526 = vmatpush1.msra.mxu0 %v21
  %2527 = vmatprep.subr.mxu0 0.0
  %2528 = vmatpush1.msra.mxu0 %v18
  %2529 = vmatprep.subr.mxu0 0.0
  %2530 = vmatpush2.msra.mxu0 0.0
  %2531 = vmatprep.subr.mxu0 0.0
  %2532 = vmatpush2.msra.mxu0 0.0
  %2533 = vmatprep.subr.mxu0 0.0
  %2534 = vmatpush2.msra.mxu0 0.0
  %2535 = vmatprep.subr.mxu0 0.0
  %2536 = vmatpush2.msra.mxu0 0.0
  %2537 = vmatprep.subr.mxu0 0.0
  %2538 = vmatpush2.msra.mxu0 0.0
  %2539 = vmatprep.subr.mxu0 0.0
  %2540 = vmatpush2.msra.mxu0 0.0
  %2541 = vmatprep.subr.mxu0 0.0
  %2542 = vmatpush2.msra.mxu0 0.0
  %2543 = vmatprep.subr.mxu0 0.0
  %2544 = vmatpush2.msra.mxu0 0.0
  %2545 = vmatprep.subr.mxu0 0.0
  %2546 = vmatpush2.msra.mxu0 0.0
  %2547 = vmatprep.subr.mxu0 0.0
  %2548 = vmatpush2.msra.mxu0 0.0
  %2549 = vmatprep.subr.mxu0 0.0
  %2550 = vmatpush2.msra.mxu0 0.0
  %2551 = vmatprep.subr.mxu0 0.0
  %2552 = vmatpush2.msra.mxu0 0.0
  %2553 = vmatprep.subr.mxu0 0.0
  %2554 = vmatpush2.msra.mxu0 0.0
  %2555 = vmatprep.subr.mxu0 0.0
  %2556 = vmatpush2.msra.mxu0 0.0
  %2557 = vmatprep.subr.mxu0 0.0
  %2558 = vmatpush2.msra.mxu0 0.0
  %2559 = vmatprep.subr.mxu0 0.0
  %2560 = vmatpush2.msra.mxu0 0.0
  %2561 = vmatprep.mubr.f32.mxu0 0.0
  %2562 = vmatmul.mubr.f32.gmra.mxu0 %v2397
  %v2563 = vpop.f32.mrf.mxu0
  %v2564 = vadd.f32 0.0, %v2563
  %v2565 = vpop.f32.mrf.mxu0
  %2566 = vdwg.mxu0
  %2567 = vmatprep.subr.mxu0 %v111
  %2568 = vmatpush1.msra.mxu0 %v110
  %2569 = vmatprep.subr.mxu0 %v108
  %2570 = vmatpush1.msra.mxu0 %v107
  %2571 = vmatprep.subr.mxu0 %v105
  %2572 = vmatpush1.msra.mxu0 %v104
  %2573 = vmatprep.subr.mxu0 %v102
  %2574 = vmatpush1.msra.mxu0 %v101
  %2575 = vmatprep.subr.mxu0 %v99
  %2576 = vmatpush1.msra.mxu0 %v98
  %2577 = vmatprep.subr.mxu0 %v96
  %2578 = vmatpush1.msra.mxu0 %v95
  %2579 = vmatprep.subr.mxu0 %v93
  %2580 = vmatpush1.msra.mxu0 %v92
  %2581 = vmatprep.subr.mxu0 %v90
  %2582 = vmatpush1.msra.mxu0 %v89
  %2583 = vmatprep.subr.mxu0 %v87
  %2584 = vmatpush1.msra.mxu0 %v86
  %2585 = vmatprep.subr.mxu0 %v84
  %2586 = vmatpush1.msra.mxu0 %v83
  %2587 = vmatprep.subr.mxu0 %v81
  %2588 = vmatpush1.msra.mxu0 %v80
  %2589 = vmatprep.subr.mxu0 %v78
  %2590 = vmatpush1.msra.mxu0 %v77
  %2591 = vmatprep.subr.mxu0 %v75
  %2592 = vmatpush1.msra.mxu0 %v74
  %2593 = vmatprep.subr.mxu0 %v72
  %2594 = vmatpush1.msra.mxu0 %v71
  %2595 = vmatprep.subr.mxu0 %v69
  %2596 = vmatpush1.msra.mxu0 %v68
  %2597 = vmatprep.subr.mxu0 %v66
  %2598 = vmatpush1.msra.mxu0 %v65
  %2599 = vmatprep.subr.mxu0 0.0
  %2600 = vmatpush2.msra.mxu0 0.0
  %2601 = vmatprep.subr.mxu0 0.0
  %2602 = vmatpush2.msra.mxu0 0.0
  %2603 = vmatprep.subr.mxu0 0.0
  %2604 = vmatpush2.msra.mxu0 0.0
  %2605 = vmatprep.subr.mxu0 0.0
  %2606 = vmatpush2.msra.mxu0 0.0
  %2607 = vmatprep.subr.mxu0 0.0
  %2608 = vmatpush2.msra.mxu0 0.0
  %2609 = vmatprep.subr.mxu0 0.0
  %2610 = vmatpush2.msra.mxu0 0.0
  %2611 = vmatprep.subr.mxu0 0.0
  %2612 = vmatpush2.msra.mxu0 0.0
  %2613 = vmatprep.subr.mxu0 0.0
  %2614 = vmatpush2.msra.mxu0 0.0
  %2615 = vmatprep.subr.mxu0 0.0
  %2616 = vmatpush2.msra.mxu0 0.0
  %2617 = vmatprep.subr.mxu0 0.0
  %2618 = vmatpush2.msra.mxu0 0.0
  %2619 = vmatprep.subr.mxu0 0.0
  %2620 = vmatpush2.msra.mxu0 0.0
  %2621 = vmatprep.subr.mxu0 0.0
  %2622 = vmatpush2.msra.mxu0 0.0
  %2623 = vmatprep.subr.mxu0 0.0
  %2624 = vmatpush2.msra.mxu0 0.0
  %2625 = vmatprep.subr.mxu0 0.0
  %2626 = vmatpush2.msra.mxu0 0.0
  %2627 = vmatprep.subr.mxu0 0.0
  %2628 = vmatpush2.msra.mxu0 0.0
  %2629 = vmatprep.subr.mxu0 0.0
  %2630 = vmatpush2.msra.mxu0 0.0
  %2631 = vmatprep.mubr.f32.mxu0 0.0
  %2632 = vmatmul.mubr.f32.gmra.mxu0 %v2415
  %v2633 = vpop.f32.mrf.mxu0
  %v2634 = vadd.f32 0.0, %v2633
  %v2635 = vpop.f32.mrf.mxu0
  %v2636 = vadd.f32 0.0, %v2635
  %2637 = vdwg.mxu0
  %2638 = vmatprep.subr.mxu0 0.0
  %2639 = vmatpush1.msra.mxu0 %v112
  %2640 = vmatprep.subr.mxu0 0.0
  %2641 = vmatpush1.msra.mxu0 %v109
  %2642 = vmatprep.subr.mxu0 0.0
  %2643 = vmatpush1.msra.mxu0 %v106
  %2644 = vmatprep.subr.mxu0 0.0
  %2645 = vmatpush1.msra.mxu0 %v103
  %2646 = vmatprep.subr.mxu0 0.0
  %2647 = vmatpush1.msra.mxu0 %v100
  %2648 = vmatprep.subr.mxu0 0.0
  %2649 = vmatpush1.msra.mxu0 %v97
  %2650 = vmatprep.subr.mxu0 0.0
  %2651 = vmatpush1.msra.mxu0 %v94
  %2652 = vmatprep.subr.mxu0 0.0
  %2653 = vmatpush1.msra.mxu0 %v91
  %2654 = vmatprep.subr.mxu0 0.0
  %2655 = vmatpush1.msra.mxu0 %v88
  %2656 = vmatprep.subr.mxu0 0.0
  %2657 = vmatpush1.msra.mxu0 %v85
  %2658 = vmatprep.subr.mxu0 0.0
  %2659 = vmatpush1.msra.mxu0 %v82
  %2660 = vmatprep.subr.mxu0 0.0
  %2661 = vmatpush1.msra.mxu0 %v79
  %2662 = vmatprep.subr.mxu0 0.0
  %2663 = vmatpush1.msra.mxu0 %v76
  %2664 = vmatprep.subr.mxu0 0.0
  %2665 = vmatpush1.msra.mxu0 %v73
  %2666 = vmatprep.subr.mxu0 0.0
  %2667 = vmatpush1.msra.mxu0 %v70
  %2668 = vmatprep.subr.mxu0 0.0
  %2669 = vmatpush1.msra.mxu0 %v67
  %2670 = vmatprep.subr.mxu0 0.0
  %2671 = vmatpush2.msra.mxu0 0.0
  %2672 = vmatprep.subr.mxu0 0.0
  %2673 = vmatpush2.msra.mxu0 0.0
  %2674 = vmatprep.subr.mxu0 0.0
  %2675 = vmatpush2.msra.mxu0 0.0
  %2676 = vmatprep.subr.mxu0 0.0
  %2677 = vmatpush2.msra.mxu0 0.0
  %2678 = vmatprep.subr.mxu0 0.0
  %2679 = vmatpush2.msra.mxu0 0.0
  %2680 = vmatprep.subr.mxu0 0.0
  %2681 = vmatpush2.msra.mxu0 0.0
  %2682 = vmatprep.subr.mxu0 0.0
  %2683 = vmatpush2.msra.mxu0 0.0
  %2684 = vmatprep.subr.mxu0 0.0
  %2685 = vmatpush2.msra.mxu0 0.0
  %2686 = vmatprep.subr.mxu0 0.0
  %2687 = vmatpush2.msra.mxu0 0.0
  %2688 = vmatprep.subr.mxu0 0.0
  %2689 = vmatpush2.msra.mxu0 0.0
  %2690 = vmatprep.subr.mxu0 0.0
  %2691 = vmatpush2.msra.mxu0 0.0
  %2692 = vmatprep.subr.mxu0 0.0
  %2693 = vmatpush2.msra.mxu0 0.0
  %2694 = vmatprep.subr.mxu0 0.0
  %2695 = vmatpush2.msra.mxu0 0.0
  %2696 = vmatprep.subr.mxu0 0.0
  %2697 = vmatpush2.msra.mxu0 0.0
  %2698 = vmatprep.subr.mxu0 0.0
  %2699 = vmatpush2.msra.mxu0 0.0
  %2700 = vmatprep.subr.mxu0 0.0
  %2701 = vmatpush2.msra.mxu0 0.0
  %2702 = vmatprep.mubr.f32.mxu0 0.0
  %2703 = vmatmul.mubr.f32.gmra.mxu0 %v2415
  %v2704 = vpop.f32.mrf.mxu0
  %v2705 = vadd.f32 0.0, %v2704
  %v2706 = vpop.f32.mrf.mxu0
  %2707 = vdwg.mxu0
  %v2708 = vadd.f32 %v2419, %v2493
  %v2709 = vmul.f32 %v2708, 0.5
  %v2710 = vtanh.pop %v2709
  %v2711 = vmul.f32 %v2710, 0.5
  %v2712 = vadd.f32 %v2711, 0.5
  %v2713 = vadd.f32 %v2420, %v2495
  %v2714 = vmul.f32 %v2713, 0.5
  %v2715 = vtanh.pop %v2714
  %v2716 = vmul.f32 %v2715, 0.5
  %v2717 = vadd.f32 %v2716, 0.5
  %v2718 = vadd.f32 %v2564, %v113
  %v2719 = vmul.f32 %v2712, %v2718
  %v2720 = vadd.f32 %v2421, %v2719
  %v2721 = vtanh.pop %v2720
  %v2722 = vsub.f32 1.0, %v2717
  %v2723 = vmul.f32 %v2722, %v2721
  %v2724 = vmul.f32 %v2717, %v2397
  %v2725 = vadd.f32 %v2723, %v2724
  %v2726 = vadd.f32 %v2423, %v2634
  %v2727 = vmul.f32 %v2726, 0.5
  %v2728 = vtanh.pop %v2727
  %v2729 = vmul.f32 %v2728, 0.5
  %v2730 = vadd.f32 %v2729, 0.5
  %v2731 = vadd.f32 %v2424, %v2636
  %v2732 = vmul.f32 %v2731, 0.5
  %v2733 = vtanh.pop %v2732
  %v2734 = vmul.f32 %v2733, 0.5
  %v2735 = vadd.f32 %v2734, 0.5
  %v2736 = vadd.f32 %v2705, %v115
  %v2737 = vmul.f32 %v2730, %v2736
  %v2738 = vadd.f32 %v2425, %v2737
  %v2739 = vtanh.pop %v2738
  %v2740 = vsub.f32 1.0, %v2735
  %v2741 = vmul.f32 %v2740, %v2739
  %v2742 = vmul.f32 %v2735, %v2415
  %v2743 = vadd.f32 %v2741, %v2742
  %2744 = vst [vmem:[%s442] sm:$0xff] %v2725
  %2745 = vst [vmem:[%s3 + $0x8] sm:$0xff] %v2743
  %2746 = vst [vmem:[%s4] sm:$0xff] %v2725
  %s2747 = scalar_lea.vmem %s4, 8
  %2748 = vst [vmem:[%s2747] sm:$0xff] %v2743
  // Predicated region
  $region14: #{gru_layer_forward.1} parent=0 // pred_check
    _
  $region15: #{gru_layer_forward.1} parent=0 // pred_check_branch
    %2750 = sbr.rel (0) target = $region17
  $region16: #{gru_layer_forward.1} parent=0 // pred_region
    _
  $region17: #{gru_layer_forward.1} parent=0 // pred_fallthru
    _
  // Predicated region
  $region18: #{gru_layer_forward.1} parent=0 // pred_check
    _
  $region19: #{gru_layer_forward.1} parent=0 // pred_check_branch
    %2752 = sbr.rel (0) target = $region21
  $region20: #{gru_layer_forward.1} parent=0 // pred_region
    _
  $region21: #{gru_layer_forward.1} parent=0 // pred_fallthru
    _
  // Predicated region
  $region22: #{gru_layer_forward.1} parent=0 // pred_check
    _
  $region23: #{gru_layer_forward.1} parent=0 // pred_check_branch
    %2754 = sbr.rel (0) target = $region25
  $region24: #{gru_layer_forward.1} parent=0 // pred_region
    _
  $region25: #{gru_layer_forward.1} parent=0 // pred_fallthru
    _
  // Predicated region
  $region26: #{gru_layer_forward.1} parent=0 // pred_check
    _
  $region27: #{gru_layer_forward.1} parent=0 // pred_check_branch
    %2756 = sbr.rel (0) target = $region29
  $region28: #{gru_layer_forward.1} parent=0 // pred_region
    _
  $region29: #{gru_layer_forward.1} parent=0 // pred_fallthru
    _

</llo_original>
